<compile_context>
chip_gen: v7x
topology: tpu7x:2x2x1
jax: 0.10.0
libtpu: 0.0.40
codegen_flags: <defaults>
</compile_context>

<pallas_src>
import numpy as np
import jax
import jax.numpy as jnp
from jax.experimental import pallas as pl
from jax.experimental.pallas import tpu as pltpu


# ----------------------- trace-time weight lowering -------------------------

def _conv_pool_band_mats(w, w_in, w_out_pool):
    """Fold a valid KHxKW conv + the even/odd *column* phases of a 2x2 max-pool into
    dense banded matrices.

    w: (Cout, Cin, KH, KW) (PyTorch OIHW).
    Returns A: (2*KH, w_in*Cin, w_out_pool*Cout) with
      A[cp*KH + i, win*Cin + ci, wp*Cout + co] =
          w[co, ci, i, win - (2*wp + cp)]   if 0 <= win - (2*wp + cp) < KW else 0
    so that for an activation slab Z with Z[h, win*Cin + ci] = act[ci, h, win]:
      (Z[i:i+H_out, :] @ A[cp*KH + i])[h, wp*Cout + co]
          = sum_{ci, j} act[ci, h+i, 2*wp + cp + j] * w[co, ci, i, j]
    i.e. the conv output at column 2*wp+cp (column-pool phase cp).
    """
    Cout, Cin, KH, KW = (int(d) for d in w.shape)
    R, Q = w_in * Cin, w_out_pool * Cout
    win = np.arange(R) // Cin
    ci = np.arange(R) % Cin
    wp = np.arange(Q) // Cout
    co = np.arange(Q) % Cout
    base = (co[None, :] * Cin + ci[:, None]) * (KH * KW)            # (R, Q)
    idx = np.zeros((2 * KH, R, Q), np.int32)
    msk = np.zeros((2 * KH, R, Q), np.float32)
    for cp in range(2):
        j = win[:, None] - (2 * wp[None, :] + cp)                   # (R, Q)
        valid = (j >= 0) & (j < KW)
        jc = np.clip(j, 0, KW - 1)
        for i in range(KH):
            idx[cp * KH + i] = base + i * KW + jc
            msk[cp * KH + i] = valid
    return (jnp.take(w.reshape(-1), jnp.asarray(idx)) *
            jnp.asarray(msk)).astype(jnp.float32)


def _row_pool_selectors(h_conv, h_pool):
    """0/1 matrices (2, h_pool, h_conv) selecting even / odd conv rows (row-pool phases)."""
    S = np.zeros((2, h_pool, h_conv), np.float32)
    hp = np.arange(h_pool)
    S[0, hp, 2 * hp] = 1.0
    S[1, hp, 2 * hp + 1] = 1.0
    return jnp.asarray(S)


def _fc1_row_blocks(fw1, H, W, C):
    """Permute fc1 weight columns from torch's NCHW flatten order to the kernel's
    (H, W*C) activation layout and split per spatial row.

    fw1: (F_out, C*H*W).  Returns (H, W*C, F_out) with
      out[h, w*C + c, o] = fw1[o, c*H*W + h*W + w].
    """
    h = np.arange(H)[:, None, None]
    w = np.arange(W)[None, :, None]
    c = np.arange(C)[None, None, :]
    perm = (c * H * W + h * W + w).reshape(H, W * C)
    F = fw1[:, jnp.asarray(perm.reshape(-1))]           # (F_out, H*W*C)
    F = F.reshape(fw1.shape[0], H, W * C)
    return jnp.transpose(F, (1, 2, 0))                  # (H, W*C, F_out)


# ------------------------------ Pallas kernel --------------------------------

def _conv_pool_cols(a_ref, src, kh, h_out, bias):
    """conv rows via static slices; conv cols + column-pool phases via banded matmuls.
    Returns max over the two column-pool phases: (h_out, Q)."""
    phases = []
    for cp in range(2):
        acc = bias                                       # (1, Q), broadcast over rows
        for i in range(kh):
            acc = acc + jnp.dot(src[i:i + h_out, :], a_ref[cp * kh + i],
                                preferred_element_type=jnp.float32)
        phases.append(acc)
    return jnp.maximum(phases[0], phases[1])


def _pool_rows_relu(s_ref, m):
    """Even/odd row selection via 0/1 matmuls, then max (row pool) + ReLU."""
    even = jnp.dot(s_ref[0], m, preferred_element_type=jnp.float32)
    odd = jnp.dot(s_ref[1], m, preferred_element_type=jnp.float32)
    return jnp.maximum(jnp.maximum(even, odd), 0.0)


def _net_kernel(x_ref, a1_ref, b1_ref, s1_ref, a2_ref, b2_ref, s2_ref,
                f1_ref, fb1_ref, w2_ref, fb2_ref, o_ref):
    # One image per grid step; all intermediate activations stay in VMEM / vregs.
    x = x_ref[...]                                               # (28, 28)

    # conv1 (1->16, 3x3) + bias + 2x2 max-pool + ReLU (fully fused)
    m1 = _conv_pool_cols(a1_ref, x, 3, 26, b1_ref[...])          # (26, 13*16)
    z1 = _pool_rows_relu(s1_ref, m1)                             # (13, 13*16)

    # conv2 (16->32, 3x3) + bias + 2x2 max-pool (floor) + ReLU (fully fused)
    m2 = _conv_pool_cols(a2_ref, z1, 3, 11, b2_ref[...])         # (11, 5*32)
    z2 = _pool_rows_relu(s2_ref, m2)                             # (5, 5*32)

    # fc1 (800->200) + ReLU: one small matmul per spatial row (weight columns were
    # permuted at trace time so no in-kernel lane-crossing reshape is needed).
    h = fb1_ref[...]                                             # (1, 200)
    for r in range(5):
        h = h + jnp.dot(z2[r:r + 1, :], f1_ref[r],
                        preferred_element_type=jnp.float32)
    h = jnp.maximum(h, 0.0)

    # fc2 (200->10) + log_softmax (dim=1)
    logits = jnp.dot(h, w2_ref[...],
                     preferred_element_type=jnp.float32) + fb2_ref[...]   # (1, 10)
    mx = jnp.max(logits, axis=-1, keepdims=True)
    lse = mx + jnp.log(jnp.sum(jnp.exp(logits - mx), axis=-1, keepdims=True))
    o_ref[...] = (logits - lse).astype(o_ref.dtype)


# ------------------------------ Pallas wrapper --------------------------------

def net_forward(x, params):
    """Pallas implementation of Net.forward.  x: (N, 1, 28, 28) float32 NCHW."""
    w1, b1, w2, b2, fw1, fb1, fw2, fb2 = params
    N = x.shape[0]
    xs = x.reshape(N, 28, 28)                           # Cin == 1

    # Trace-time lowering of the PyTorch weights into matmul-friendly constants.
    A1 = _conv_pool_band_mats(w1, w_in=28, w_out_pool=13)    # (6, 28, 208)
    A2 = _conv_pool_band_mats(w2, w_in=13, w_out_pool=5)     # (6, 208, 160)
    S1 = _row_pool_selectors(26, 13)                         # (2, 13, 26)
    S2 = _row_pool_selectors(11, 5)                          # (2, 5, 11)
    B1 = jnp.tile(b1, 13)[None, :].astype(jnp.float32)       # (1, 208)
    B2 = jnp.tile(b2, 5)[None, :].astype(jnp.float32)        # (1, 160)
    F1 = _fc1_row_blocks(fw1, 5, 5, 32)                      # (5, 160, 200)
    FB1 = fb1[None, :].astype(jnp.float32)                   # (1, 200)
    W2T = fw2.T.astype(jnp.float32)                          # (200, 10)
    FB2 = fb2[None, :].astype(jnp.float32)                   # (1, 10)

    def full_spec(a):
        nd = a.ndim
        return pl.BlockSpec(a.shape, lambda n: (0,) * nd)

    out = pl.pallas_call(
        _net_kernel,
        out_shape=jax.ShapeDtypeStruct((N, 1, 10), jnp.float32),
        grid=(N,),
        in_specs=[
            pl.BlockSpec((None, 28, 28), lambda n: (n, 0, 0)),
            full_spec(A1), full_spec(B1), full_spec(S1),
            full_spec(A2), full_spec(B2), full_spec(S2),
            full_spec(F1), full_spec(FB1), full_spec(W2T), full_spec(FB2),
        ],
        out_specs=pl.BlockSpec((None, 1, 10), lambda n: (n, 0, 0)),
        compiler_params=pltpu.CompilerParams(
            dimension_semantics=("parallel",)),
    )(xs, A1, B1, S1, A2, B2, S2, F1, FB1, W2T, FB2)
    return out.reshape(N, 10)


# -------------------------- pure-JAX reference ------------------------------

def reference_forward(x, params):
    w1, b1, w2, b2, fw1, fb1, fw2, fb2 = params
    dn = ('NCHW', 'OIHW', 'NCHW')
    y = jax.lax.conv_general_dilated(x, w1, (1, 1), 'VALID', dimension_numbers=dn)
    y = y + b1[None, :, None, None]
    y = jax.lax.reduce_window(y, -jnp.inf, jax.lax.max, (1, 1, 2, 2), (1, 1, 2, 2), 'VALID')
    y = jnp.maximum(y, 0.0)
    y = jax.lax.conv_general_dilated(y, w2, (1, 1), 'VALID', dimension_numbers=dn)
    y = y + b2[None, :, None, None]
    y = jax.lax.reduce_window(y, -jnp.inf, jax.lax.max, (1, 1, 2, 2), (1, 1, 2, 2), 'VALID')
    y = jnp.maximum(y, 0.0)
    y = y.reshape(y.shape[0], -1)
    y = jnp.maximum(y @ fw1.T + fb1, 0.0)
    y = y @ fw2.T + fb2
    return jax.nn.log_softmax(y, axis=1)


# ---------------------------------- main -------------------------------------

if __name__ == "__main__":
    key = jax.random.PRNGKey(0)
    ks = jax.random.split(key, 9)
    N = 2  # small batch; 28x28x1 input is implied by the 800-wide flatten in forward()

    x = jax.random.normal(ks[0], (N, 1, 28, 28), jnp.float32)

    # deterministic synthetic parameters (PyTorch layouts: OIHW conv, (out,in) linear)
    params = (
        jax.random.normal(ks[1], (16, 1, 3, 3), jnp.float32) * 0.1,    # conv1.weight
        jax.random.normal(ks[2], (16,), jnp.float32) * 0.1,            # conv1.bias
        jax.random.normal(ks[3], (32, 16, 3, 3), jnp.float32) * 0.05,  # conv2.weight
        jax.random.normal(ks[4], (32,), jnp.float32) * 0.05,           # conv2.bias
        jax.random.normal(ks[5], (200, 800), jnp.float32) * 0.02,      # fc1.weight
        jax.random.normal(ks[6], (200,), jnp.float32) * 0.02,          # fc1.bias
        jax.random.normal(ks[7], (10, 200), jnp.float32) * 0.05,       # fc2.weight
        jax.random.normal(ks[8], (10,), jnp.float32) * 0.05,           # fc2.bias
    )

    out = jax.block_until_ready(jax.jit(net_forward)(x, params))
    ref = jax.block_until_ready(jax.jit(reference_forward)(x, params))

    assert out.shape == (N, 10) and out.dtype == jnp.float32
    assert jnp.allclose(out, ref, atol=1e-4, rtol=1e-3), (out, ref)

    print("KERNEL_OK")
</pallas_src>

<mosaic_0001>
module attributes {stable_mosaic.version = 11 : i64} {
  func.func @_net_kernel(%arg0: i32, %arg1: memref<1x28x28xf32, #tpu.memory_space<vmem>>, %arg2: memref<6x28x208xf32, #tpu.memory_space<vmem>>, %arg3: memref<1x208xf32, #tpu.memory_space<vmem>>, %arg4: memref<2x13x26xf32, #tpu.memory_space<vmem>>, %arg5: memref<6x208x160xf32, #tpu.memory_space<vmem>>, %arg6: memref<1x160xf32, #tpu.memory_space<vmem>>, %arg7: memref<2x5x11xf32, #tpu.memory_space<vmem>>, %arg8: memref<5x160x200xf32, #tpu.memory_space<vmem>>, %arg9: memref<1x200xf32, #tpu.memory_space<vmem>>, %arg10: memref<200x10xf32, #tpu.memory_space<vmem>>, %arg11: memref<1x10xf32, #tpu.memory_space<vmem>>, %arg12: memref<1x1x10xf32, #tpu.memory_space<vmem>>) attributes {dimension_semantics = [#tpu.dimension_semantics<parallel>], iteration_bounds = array<i64: 2>, scalar_prefetch = 0 : i64, scratch_operands = 0 : i64, tpu.core_type = #tpu.core_type<tc>, window_params = [{transform_indices = @transform_0, window_bounds = array<i64: 1, 28, 28>}, {pipeline_mode = #tpu.pipeline_mode<synchronous>, transform_indices = @transform_1, window_bounds = array<i64: 6, 28, 208>}, {pipeline_mode = #tpu.pipeline_mode<synchronous>, transform_indices = @transform_2, window_bounds = array<i64: 1, 208>}, {pipeline_mode = #tpu.pipeline_mode<synchronous>, transform_indices = @transform_3, window_bounds = array<i64: 2, 13, 26>}, {pipeline_mode = #tpu.pipeline_mode<synchronous>, transform_indices = @transform_4, window_bounds = array<i64: 6, 208, 160>}, {pipeline_mode = #tpu.pipeline_mode<synchronous>, transform_indices = @transform_5, window_bounds = array<i64: 1, 160>}, {pipeline_mode = #tpu.pipeline_mode<synchronous>, transform_indices = @transform_6, window_bounds = array<i64: 2, 5, 11>}, {pipeline_mode = #tpu.pipeline_mode<synchronous>, transform_indices = @transform_7, window_bounds = array<i64: 5, 160, 200>}, {pipeline_mode = #tpu.pipeline_mode<synchronous>, transform_indices = @transform_8, window_bounds = array<i64: 1, 200>}, {pipeline_mode = #tpu.pipeline_mode<synchronous>, transform_indices = @transform_9, window_bounds = array<i64: 200, 10>}, {pipeline_mode = #tpu.pipeline_mode<synchronous>, transform_indices = @transform_10, window_bounds = array<i64: 1, 10>}, {transform_indices = @transform_11, window_bounds = array<i64: 1, 1, 10>}]} {
    %c0 = arith.constant 0 : index
    %c0_0 = arith.constant 0 : index
    %c0_1 = arith.constant 0 : index
    %0 = vector.load %arg1[%c0, %c0_0, %c0_1] : memref<1x28x28xf32, #tpu.memory_space<vmem>>, vector<1x28x28xf32>
    %1 = vector.shape_cast %0 : vector<1x28x28xf32> to vector<28x28xf32>
    %c0_2 = arith.constant 0 : index
    %c0_3 = arith.constant 0 : index
    %2 = vector.load %arg3[%c0_2, %c0_3] : memref<1x208xf32, #tpu.memory_space<vmem>>, vector<1x208xf32>
    %3 = vector.extract_strided_slice %1 {offsets = [0, 0], sizes = [26, 28], strides = [1, 1]} : vector<28x28xf32> to vector<26x28xf32>
    %c0_4 = arith.constant 0 : index
    %c0_5 = arith.constant 0 : index
    %c0_6 = arith.constant 0 : index
    %4 = vector.load %arg2[%c0_4, %c0_5, %c0_6] : memref<6x28x208xf32, #tpu.memory_space<vmem>>, vector<1x28x208xf32>
    %5 = vector.shape_cast %4 : vector<1x28x208xf32> to vector<28x208xf32>
    %cst = arith.constant dense<0.000000e+00> : vector<26x208xf32>
    %6 = tpu.matmul %3, %5, %cst {dimension_numbers = #tpu.dot_dimension_numbers<[1], [0], [0], [1], [0, 0, 1, 1], [], []>} : vector<26x28xf32>, vector<28x208xf32>, vector<26x208xf32> -> vector<26x208xf32>
    %7 = vector.broadcast %2 : vector<1x208xf32> to vector<26x208xf32>
    %8 = arith.addf %7, %6 : vector<26x208xf32>
    %9 = vector.extract_strided_slice %1 {offsets = [1, 0], sizes = [26, 28], strides = [1, 1]} : vector<28x28xf32> to vector<26x28xf32>
    %c1 = arith.constant 1 : index
    %c0_7 = arith.constant 0 : index
    %c0_8 = arith.constant 0 : index
    %10 = vector.load %arg2[%c1, %c0_7, %c0_8] : memref<6x28x208xf32, #tpu.memory_space<vmem>>, vector<1x28x208xf32>
    %11 = vector.shape_cast %10 : vector<1x28x208xf32> to vector<28x208xf32>
    %cst_9 = arith.constant dense<0.000000e+00> : vector<26x208xf32>
    %12 = tpu.matmul %9, %11, %cst_9 {dimension_numbers = #tpu.dot_dimension_numbers<[1], [0], [0], [1], [0, 0, 1, 1], [], []>} : vector<26x28xf32>, vector<28x208xf32>, vector<26x208xf32> -> vector<26x208xf32>
    %13 = arith.addf %8, %12 : vector<26x208xf32>
    %14 = vector.extract_strided_slice %1 {offsets = [2, 0], sizes = [26, 28], strides = [1, 1]} : vector<28x28xf32> to vector<26x28xf32>
    %c2 = arith.constant 2 : index
    %c0_10 = arith.constant 0 : index
    %c0_11 = arith.constant 0 : index
    %15 = vector.load %arg2[%c2, %c0_10, %c0_11] : memref<6x28x208xf32, #tpu.memory_space<vmem>>, vector<1x28x208xf32>
    %16 = vector.shape_cast %15 : vector<1x28x208xf32> to vector<28x208xf32>
    %cst_12 = arith.constant dense<0.000000e+00> : vector<26x208xf32>
    %17 = tpu.matmul %14, %16, %cst_12 {dimension_numbers = #tpu.dot_dimension_numbers<[1], [0], [0], [1], [0, 0, 1, 1], [], []>} : vector<26x28xf32>, vector<28x208xf32>, vector<26x208xf32> -> vector<26x208xf32>
    %18 = arith.addf %13, %17 : vector<26x208xf32>
    %19 = vector.extract_strided_slice %1 {offsets = [0, 0], sizes = [26, 28], strides = [1, 1]} : vector<28x28xf32> to vector<26x28xf32>
    %c3 = arith.constant 3 : index
    %c0_13 = arith.constant 0 : index
    %c0_14 = arith.constant 0 : index
    %20 = vector.load %arg2[%c3, %c0_13, %c0_14] : memref<6x28x208xf32, #tpu.memory_space<vmem>>, vector<1x28x208xf32>
    %21 = vector.shape_cast %20 : vector<1x28x208xf32> to vector<28x208xf32>
    %cst_15 = arith.constant dense<0.000000e+00> : vector<26x208xf32>
    %22 = tpu.matmul %19, %21, %cst_15 {dimension_numbers = #tpu.dot_dimension_numbers<[1], [0], [0], [1], [0, 0, 1, 1], [], []>} : vector<26x28xf32>, vector<28x208xf32>, vector<26x208xf32> -> vector<26x208xf32>
    %23 = vector.broadcast %2 : vector<1x208xf32> to vector<26x208xf32>
    %24 = arith.addf %23, %22 : vector<26x208xf32>
    %25 = vector.extract_strided_slice %1 {offsets = [1, 0], sizes = [26, 28], strides = [1, 1]} : vector<28x28xf32> to vector<26x28xf32>
    %c4 = arith.constant 4 : index
    %c0_16 = arith.constant 0 : index
    %c0_17 = arith.constant 0 : index
    %26 = vector.load %arg2[%c4, %c0_16, %c0_17] : memref<6x28x208xf32, #tpu.memory_space<vmem>>, vector<1x28x208xf32>
    %27 = vector.shape_cast %26 : vector<1x28x208xf32> to vector<28x208xf32>
    %cst_18 = arith.constant dense<0.000000e+00> : vector<26x208xf32>
    %28 = tpu.matmul %25, %27, %cst_18 {dimension_numbers = #tpu.dot_dimension_numbers<[1], [0], [0], [1], [0, 0, 1, 1], [], []>} : vector<26x28xf32>, vector<28x208xf32>, vector<26x208xf32> -> vector<26x208xf32>
    %29 = arith.addf %24, %28 : vector<26x208xf32>
    %30 = vector.extract_strided_slice %1 {offsets = [2, 0], sizes = [26, 28], strides = [1, 1]} : vector<28x28xf32> to vector<26x28xf32>
    %c5 = arith.constant 5 : index
    %c0_19 = arith.constant 0 : index
    %c0_20 = arith.constant 0 : index
    %31 = vector.load %arg2[%c5, %c0_19, %c0_20] : memref<6x28x208xf32, #tpu.memory_space<vmem>>, vector<1x28x208xf32>
    %32 = vector.shape_cast %31 : vector<1x28x208xf32> to vector<28x208xf32>
    %cst_21 = arith.constant dense<0.000000e+00> : vector<26x208xf32>
    %33 = tpu.matmul %30, %32, %cst_21 {dimension_numbers = #tpu.dot_dimension_numbers<[1], [0], [0], [1], [0, 0, 1, 1], [], []>} : vector<26x28xf32>, vector<28x208xf32>, vector<26x208xf32> -> vector<26x208xf32>
    %34 = arith.addf %29, %33 : vector<26x208xf32>
    %35 = arith.maximumf %18, %34 : vector<26x208xf32>
    %c0_22 = arith.constant 0 : index
    %c0_23 = arith.constant 0 : index
    %c0_24 = arith.constant 0 : index
    %36 = vector.load %arg4[%c0_22, %c0_23, %c0_24] : memref<2x13x26xf32, #tpu.memory_space<vmem>>, vector<1x13x26xf32>
    %37 = vector.shape_cast %36 : vector<1x13x26xf32> to vector<13x26xf32>
    %cst_25 = arith.constant dense<0.000000e+00> : vector<13x208xf32>
    %38 = tpu.matmul %37, %35, %cst_25 {dimension_numbers = #tpu.dot_dimension_numbers<[1], [0], [0], [1], [0, 0, 1, 1], [], []>} : vector<13x26xf32>, vector<26x208xf32>, vector<13x208xf32> -> vector<13x208xf32>
    %c1_26 = arith.constant 1 : index
    %c0_27 = arith.constant 0 : index
    %c0_28 = arith.constant 0 : index
    %39 = vector.load %arg4[%c1_26, %c0_27, %c0_28] : memref<2x13x26xf32, #tpu.memory_space<vmem>>, vector<1x13x26xf32>
    %40 = vector.shape_cast %39 : vector<1x13x26xf32> to vector<13x26xf32>
    %cst_29 = arith.constant dense<0.000000e+00> : vector<13x208xf32>
    %41 = tpu.matmul %40, %35, %cst_29 {dimension_numbers = #tpu.dot_dimension_numbers<[1], [0], [0], [1], [0, 0, 1, 1], [], []>} : vector<13x26xf32>, vector<26x208xf32>, vector<13x208xf32> -> vector<13x208xf32>
    %42 = arith.maximumf %38, %41 : vector<13x208xf32>
    %cst_30 = arith.constant 0.000000e+00 : f32
    %43 = vector.broadcast %cst_30 : f32 to vector<13x208xf32>
    %44 = arith.maximumf %42, %43 : vector<13x208xf32>
    %c0_31 = arith.constant 0 : index
    %c0_32 = arith.constant 0 : index
    %45 = vector.load %arg6[%c0_31, %c0_32] : memref<1x160xf32, #tpu.memory_space<vmem>>, vector<1x160xf32>
    %46 = vector.extract_strided_slice %44 {offsets = [0, 0], sizes = [11, 208], strides = [1, 1]} : vector<13x208xf32> to vector<11x208xf32>
    %c0_33 = arith.constant 0 : index
    %c0_34 = arith.constant 0 : index
    %c0_35 = arith.constant 0 : index
    %47 = vector.load %arg5[%c0_33, %c0_34, %c0_35] : memref<6x208x160xf32, #tpu.memory_space<vmem>>, vector<1x208x160xf32>
    %48 = vector.shape_cast %47 : vector<1x208x160xf32> to vector<208x160xf32>
    %cst_36 = arith.constant dense<0.000000e+00> : vector<11x160xf32>
    %49 = tpu.matmul %46, %48, %cst_36 {dimension_numbers = #tpu.dot_dimension_numbers<[1], [0], [0], [1], [0, 0, 1, 1], [], []>} : vector<11x208xf32>, vector<208x160xf32>, vector<11x160xf32> -> vector<11x160xf32>
    %50 = vector.broadcast %45 : vector<1x160xf32> to vector<11x160xf32>
    %51 = arith.addf %50, %49 : vector<11x160xf32>
    %52 = vector.extract_strided_slice %44 {offsets = [1, 0], sizes = [11, 208], strides = [1, 1]} : vector<13x208xf32> to vector<11x208xf32>
    %c1_37 = arith.constant 1 : index
    %c0_38 = arith.constant 0 : index
    %c0_39 = arith.constant 0 : index
    %53 = vector.load %arg5[%c1_37, %c0_38, %c0_39] : memref<6x208x160xf32, #tpu.memory_space<vmem>>, vector<1x208x160xf32>
    %54 = vector.shape_cast %53 : vector<1x208x160xf32> to vector<208x160xf32>
    %cst_40 = arith.constant dense<0.000000e+00> : vector<11x160xf32>
    %55 = tpu.matmul %52, %54, %cst_40 {dimension_numbers = #tpu.dot_dimension_numbers<[1], [0], [0], [1], [0, 0, 1, 1], [], []>} : vector<11x208xf32>, vector<208x160xf32>, vector<11x160xf32> -> vector<11x160xf32>
    %56 = arith.addf %51, %55 : vector<11x160xf32>
    %57 = vector.extract_strided_slice %44 {offsets = [2, 0], sizes = [11, 208], strides = [1, 1]} : vector<13x208xf32> to vector<11x208xf32>
    %c2_41 = arith.constant 2 : index
    %c0_42 = arith.constant 0 : index
    %c0_43 = arith.constant 0 : index
    %58 = vector.load %arg5[%c2_41, %c0_42, %c0_43] : memref<6x208x160xf32, #tpu.memory_space<vmem>>, vector<1x208x160xf32>
    %59 = vector.shape_cast %58 : vector<1x208x160xf32> to vector<208x160xf32>
    %cst_44 = arith.constant dense<0.000000e+00> : vector<11x160xf32>
    %60 = tpu.matmul %57, %59, %cst_44 {dimension_numbers = #tpu.dot_dimension_numbers<[1], [0], [0], [1], [0, 0, 1, 1], [], []>} : vector<11x208xf32>, vector<208x160xf32>, vector<11x160xf32> -> vector<11x160xf32>
    %61 = arith.addf %56, %60 : vector<11x160xf32>
    %62 = vector.extract_strided_slice %44 {offsets = [0, 0], sizes = [11, 208], strides = [1, 1]} : vector<13x208xf32> to vector<11x208xf32>
    %c3_45 = arith.constant 3 : index
    %c0_46 = arith.constant 0 : index
    %c0_47 = arith.constant 0 : index
    %63 = vector.load %arg5[%c3_45, %c0_46, %c0_47] : memref<6x208x160xf32, #tpu.memory_space<vmem>>, vector<1x208x160xf32>
    %64 = vector.shape_cast %63 : vector<1x208x160xf32> to vector<208x160xf32>
    %cst_48 = arith.constant dense<0.000000e+00> : vector<11x160xf32>
    %65 = tpu.matmul %62, %64, %cst_48 {dimension_numbers = #tpu.dot_dimension_numbers<[1], [0], [0], [1], [0, 0, 1, 1], [], []>} : vector<11x208xf32>, vector<208x160xf32>, vector<11x160xf32> -> vector<11x160xf32>
    %66 = vector.broadcast %45 : vector<1x160xf32> to vector<11x160xf32>
    %67 = arith.addf %66, %65 : vector<11x160xf32>
    %68 = vector.extract_strided_slice %44 {offsets = [1, 0], sizes = [11, 208], strides = [1, 1]} : vector<13x208xf32> to vector<11x208xf32>
    %c4_49 = arith.constant 4 : index
    %c0_50 = arith.constant 0 : index
    %c0_51 = arith.constant 0 : index
    %69 = vector.load %arg5[%c4_49, %c0_50, %c0_51] : memref<6x208x160xf32, #tpu.memory_space<vmem>>, vector<1x208x160xf32>
    %70 = vector.shape_cast %69 : vector<1x208x160xf32> to vector<208x160xf32>
    %cst_52 = arith.constant dense<0.000000e+00> : vector<11x160xf32>
    %71 = tpu.matmul %68, %70, %cst_52 {dimension_numbers = #tpu.dot_dimension_numbers<[1], [0], [0], [1], [0, 0, 1, 1], [], []>} : vector<11x208xf32>, vector<208x160xf32>, vector<11x160xf32> -> vector<11x160xf32>
    %72 = arith.addf %67, %71 : vector<11x160xf32>
    %73 = vector.extract_strided_slice %44 {offsets = [2, 0], sizes = [11, 208], strides = [1, 1]} : vector<13x208xf32> to vector<11x208xf32>
    %c5_53 = arith.constant 5 : index
    %c0_54 = arith.constant 0 : index
    %c0_55 = arith.constant 0 : index
    %74 = vector.load %arg5[%c5_53, %c0_54, %c0_55] : memref<6x208x160xf32, #tpu.memory_space<vmem>>, vector<1x208x160xf32>
    %75 = vector.shape_cast %74 : vector<1x208x160xf32> to vector<208x160xf32>
    %cst_56 = arith.constant dense<0.000000e+00> : vector<11x160xf32>
    %76 = tpu.matmul %73, %75, %cst_56 {dimension_numbers = #tpu.dot_dimension_numbers<[1], [0], [0], [1], [0, 0, 1, 1], [], []>} : vector<11x208xf32>, vector<208x160xf32>, vector<11x160xf32> -> vector<11x160xf32>
    %77 = arith.addf %72, %76 : vector<11x160xf32>
    %78 = arith.maximumf %61, %77 : vector<11x160xf32>
    %c0_57 = arith.constant 0 : index
    %c0_58 = arith.constant 0 : index
    %c0_59 = arith.constant 0 : index
    %79 = vector.load %arg7[%c0_57, %c0_58, %c0_59] : memref<2x5x11xf32, #tpu.memory_space<vmem>>, vector<1x5x11xf32>
    %80 = vector.shape_cast %79 : vector<1x5x11xf32> to vector<5x11xf32>
    %cst_60 = arith.constant dense<0.000000e+00> : vector<5x160xf32>
    %81 = tpu.matmul %80, %78, %cst_60 {dimension_numbers = #tpu.dot_dimension_numbers<[1], [0], [0], [1], [0, 0, 1, 1], [], []>} : vector<5x11xf32>, vector<11x160xf32>, vector<5x160xf32> -> vector<5x160xf32>
    %c1_61 = arith.constant 1 : index
    %c0_62 = arith.constant 0 : index
    %c0_63 = arith.constant 0 : index
    %82 = vector.load %arg7[%c1_61, %c0_62, %c0_63] : memref<2x5x11xf32, #tpu.memory_space<vmem>>, vector<1x5x11xf32>
    %83 = vector.shape_cast %82 : vector<1x5x11xf32> to vector<5x11xf32>
    %cst_64 = arith.constant dense<0.000000e+00> : vector<5x160xf32>
    %84 = tpu.matmul %83, %78, %cst_64 {dimension_numbers = #tpu.dot_dimension_numbers<[1], [0], [0], [1], [0, 0, 1, 1], [], []>} : vector<5x11xf32>, vector<11x160xf32>, vector<5x160xf32> -> vector<5x160xf32>
    %85 = arith.maximumf %81, %84 : vector<5x160xf32>
    %cst_65 = arith.constant 0.000000e+00 : f32
    %86 = vector.broadcast %cst_65 : f32 to vector<5x160xf32>
    %87 = arith.maximumf %85, %86 : vector<5x160xf32>
    %c0_66 = arith.constant 0 : index
    %c0_67 = arith.constant 0 : index
    %88 = vector.load %arg9[%c0_66, %c0_67] : memref<1x200xf32, #tpu.memory_space<vmem>>, vector<1x200xf32>
    %89 = vector.extract_strided_slice %87 {offsets = [0, 0], sizes = [1, 160], strides = [1, 1]} : vector<5x160xf32> to vector<1x160xf32>
    %c0_68 = arith.constant 0 : index
    %c0_69 = arith.constant 0 : index
    %c0_70 = arith.constant 0 : index
    %90 = vector.load %arg8[%c0_68, %c0_69, %c0_70] : memref<5x160x200xf32, #tpu.memory_space<vmem>>, vector<1x160x200xf32>
    %91 = vector.shape_cast %90 : vector<1x160x200xf32> to vector<160x200xf32>
    %cst_71 = arith.constant dense<0.000000e+00> : vector<1x200xf32>
    %92 = tpu.matmul %89, %91, %cst_71 {dimension_numbers = #tpu.dot_dimension_numbers<[1], [0], [0], [1], [0, 0, 1, 1], [], []>} : vector<1x160xf32>, vector<160x200xf32>, vector<1x200xf32> -> vector<1x200xf32>
    %93 = arith.addf %88, %92 : vector<1x200xf32>
    %94 = vector.extract_strided_slice %87 {offsets = [1, 0], sizes = [1, 160], strides = [1, 1]} : vector<5x160xf32> to vector<1x160xf32>
    %c1_72 = arith.constant 1 : index
    %c0_73 = arith.constant 0 : index
    %c0_74 = arith.constant 0 : index
    %95 = vector.load %arg8[%c1_72, %c0_73, %c0_74] : memref<5x160x200xf32, #tpu.memory_space<vmem>>, vector<1x160x200xf32>
    %96 = vector.shape_cast %95 : vector<1x160x200xf32> to vector<160x200xf32>
    %cst_75 = arith.constant dense<0.000000e+00> : vector<1x200xf32>
    %97 = tpu.matmul %94, %96, %cst_75 {dimension_numbers = #tpu.dot_dimension_numbers<[1], [0], [0], [1], [0, 0, 1, 1], [], []>} : vector<1x160xf32>, vector<160x200xf32>, vector<1x200xf32> -> vector<1x200xf32>
    %98 = arith.addf %93, %97 : vector<1x200xf32>
    %99 = vector.extract_strided_slice %87 {offsets = [2, 0], sizes = [1, 160], strides = [1, 1]} : vector<5x160xf32> to vector<1x160xf32>
    %c2_76 = arith.constant 2 : index
    %c0_77 = arith.constant 0 : index
    %c0_78 = arith.constant 0 : index
    %100 = vector.load %arg8[%c2_76, %c0_77, %c0_78] : memref<5x160x200xf32, #tpu.memory_space<vmem>>, vector<1x160x200xf32>
    %101 = vector.shape_cast %100 : vector<1x160x200xf32> to vector<160x200xf32>
    %cst_79 = arith.constant dense<0.000000e+00> : vector<1x200xf32>
    %102 = tpu.matmul %99, %101, %cst_79 {dimension_numbers = #tpu.dot_dimension_numbers<[1], [0], [0], [1], [0, 0, 1, 1], [], []>} : vector<1x160xf32>, vector<160x200xf32>, vector<1x200xf32> -> vector<1x200xf32>
    %103 = arith.addf %98, %102 : vector<1x200xf32>
    %104 = vector.extract_strided_slice %87 {offsets = [3, 0], sizes = [1, 160], strides = [1, 1]} : vector<5x160xf32> to vector<1x160xf32>
    %c3_80 = arith.constant 3 : index
    %c0_81 = arith.constant 0 : index
    %c0_82 = arith.constant 0 : index
    %105 = vector.load %arg8[%c3_80, %c0_81, %c0_82] : memref<5x160x200xf32, #tpu.memory_space<vmem>>, vector<1x160x200xf32>
    %106 = vector.shape_cast %105 : vector<1x160x200xf32> to vector<160x200xf32>
    %cst_83 = arith.constant dense<0.000000e+00> : vector<1x200xf32>
    %107 = tpu.matmul %104, %106, %cst_83 {dimension_numbers = #tpu.dot_dimension_numbers<[1], [0], [0], [1], [0, 0, 1, 1], [], []>} : vector<1x160xf32>, vector<160x200xf32>, vector<1x200xf32> -> vector<1x200xf32>
    %108 = arith.addf %103, %107 : vector<1x200xf32>
    %109 = vector.extract_strided_slice %87 {offsets = [4, 0], sizes = [1, 160], strides = [1, 1]} : vector<5x160xf32> to vector<1x160xf32>
    %c4_84 = arith.constant 4 : index
    %c0_85 = arith.constant 0 : index
    %c0_86 = arith.constant 0 : index
    %110 = vector.load %arg8[%c4_84, %c0_85, %c0_86] : memref<5x160x200xf32, #tpu.memory_space<vmem>>, vector<1x160x200xf32>
    %111 = vector.shape_cast %110 : vector<1x160x200xf32> to vector<160x200xf32>
    %cst_87 = arith.constant dense<0.000000e+00> : vector<1x200xf32>
    %112 = tpu.matmul %109, %111, %cst_87 {dimension_numbers = #tpu.dot_dimension_numbers<[1], [0], [0], [1], [0, 0, 1, 1], [], []>} : vector<1x160xf32>, vector<160x200xf32>, vector<1x200xf32> -> vector<1x200xf32>
    %113 = arith.addf %108, %112 : vector<1x200xf32>
    %cst_88 = arith.constant 0.000000e+00 : f32
    %114 = vector.broadcast %cst_88 : f32 to vector<1x200xf32>
    %115 = arith.maximumf %113, %114 : vector<1x200xf32>
    %c0_89 = arith.constant 0 : index
    %c0_90 = arith.constant 0 : index
    %116 = vector.load %arg10[%c0_89, %c0_90] : memref<200x10xf32, #tpu.memory_space<vmem>>, vector<200x10xf32>
    %cst_91 = arith.constant dense<0.000000e+00> : vector<1x10xf32>
    %117 = tpu.matmul %115, %116, %cst_91 {dimension_numbers = #tpu.dot_dimension_numbers<[1], [0], [0], [1], [0, 0, 1, 1], [], []>} : vector<1x200xf32>, vector<200x10xf32>, vector<1x10xf32> -> vector<1x10xf32>
    %c0_92 = arith.constant 0 : index
    %c0_93 = arith.constant 0 : index
    %118 = vector.load %arg11[%c0_92, %c0_93] : memref<1x10xf32, #tpu.memory_space<vmem>>, vector<1x10xf32>
    %119 = arith.addf %117, %118 : vector<1x10xf32>
    %cst_94 = arith.constant dense<0xFF800000> : vector<1xf32>
    %120 = vector.multi_reduction <maximumf>, %119, %cst_94 [1] : vector<1x10xf32> to vector<1xf32>
    %121 = vector.shape_cast %120 : vector<1xf32> to vector<1x1xf32>
    %122 = vector.broadcast %121 : vector<1x1xf32> to vector<1x10xf32>
    %123 = arith.subf %119, %122 : vector<1x10xf32>
    %124 = math.exp %123 : vector<1x10xf32>
    %cst_95 = arith.constant dense<0.000000e+00> : vector<1xf32>
    %125 = vector.multi_reduction <add>, %124, %cst_95 [1] : vector<1x10xf32> to vector<1xf32>
    %126 = vector.shape_cast %125 : vector<1xf32> to vector<1x1xf32>
    %127 = math.log %126 : vector<1x1xf32>
    %128 = arith.addf %121, %127 : vector<1x1xf32>
    %129 = vector.broadcast %128 : vector<1x1xf32> to vector<1x10xf32>
    %130 = arith.subf %119, %129 : vector<1x10xf32>
    %c0_96 = arith.constant 0 : index
    %c0_97 = arith.constant 0 : index
    %c0_98 = arith.constant 0 : index
    %131 = vector.load %arg12[%c0_96, %c0_97, %c0_98] : memref<1x1x10xf32, #tpu.memory_space<vmem>>, vector<1x1x10xf32>
    %132 = vector.shape_cast %131 : vector<1x1x10xf32> to vector<1x10xf32>
    %133 = vector.shape_cast %130 : vector<1x10xf32> to vector<1x1x10xf32>
    tpu.vector_store %arg12[%c0_96, %c0_97, %c0_98], %133 {strides = array<i32>} : memref<1x1x10xf32, #tpu.memory_space<vmem>>, vector<1x1x10xf32>,
    return
  }
  func.func @transform_0(%arg0: i32) -> (i32, i32, i32) {
    %c0_i32 = arith.constant 0 : i32
    %c0_i32_0 = arith.constant 0 : i32
    %c0_i32_1 = arith.constant 0 : i32
    return %arg0, %c0_i32, %c0_i32_0 : i32, i32, i32
  }
  func.func @transform_1(%arg0: i32) -> (i32, i32, i32) {
    %c0_i32 = arith.constant 0 : i32
    %c0_i32_0 = arith.constant 0 : i32
    %c0_i32_1 = arith.constant 0 : i32
    %c0_i32_2 = arith.constant 0 : i32
    return %c0_i32, %c0_i32_0, %c0_i32_1 : i32, i32, i32
  }
  func.func @transform_2(%arg0: i32) -> (i32, i32) {
    %c0_i32 = arith.constant 0 : i32
    %c0_i32_0 = arith.constant 0 : i32
    %c0_i32_1 = arith.constant 0 : i32
    return %c0_i32, %c0_i32_0 : i32, i32
  }
  func.func @transform_3(%arg0: i32) -> (i32, i32, i32) {
    %c0_i32 = arith.constant 0 : i32
    %c0_i32_0 = arith.constant 0 : i32
    %c0_i32_1 = arith.constant 0 : i32
    %c0_i32_2 = arith.constant 0 : i32
    return %c0_i32, %c0_i32_0, %c0_i32_1 : i32, i32, i32
  }
  func.func @transform_4(%arg0: i32) -> (i32, i32, i32) {
    %c0_i32 = arith.constant 0 : i32
    %c0_i32_0 = arith.constant 0 : i32
    %c0_i32_1 = arith.constant 0 : i32
    %c0_i32_2 = arith.constant 0 : i32
    return %c0_i32, %c0_i32_0, %c0_i32_1 : i32, i32, i32
  }
  func.func @transform_5(%arg0: i32) -> (i32, i32) {
    %c0_i32 = arith.constant 0 : i32
    %c0_i32_0 = arith.constant 0 : i32
    %c0_i32_1 = arith.constant 0 : i32
    return %c0_i32, %c0_i32_0 : i32, i32
  }
  func.func @transform_6(%arg0: i32) -> (i32, i32, i32) {
    %c0_i32 = arith.constant 0 : i32
    %c0_i32_0 = arith.constant 0 : i32
    %c0_i32_1 = arith.constant 0 : i32
    %c0_i32_2 = arith.constant 0 : i32
    return %c0_i32, %c0_i32_0, %c0_i32_1 : i32, i32, i32
  }
  func.func @transform_7(%arg0: i32) -> (i32, i32, i32) {
    %c0_i32 = arith.constant 0 : i32
    %c0_i32_0 = arith.constant 0 : i32
    %c0_i32_1 = arith.constant 0 : i32
    %c0_i32_2 = arith.constant 0 : i32
    return %c0_i32, %c0_i32_0, %c0_i32_1 : i32, i32, i32
  }
  func.func @transform_8(%arg0: i32) -> (i32, i32) {
    %c0_i32 = arith.constant 0 : i32
    %c0_i32_0 = arith.constant 0 : i32
    %c0_i32_1 = arith.constant 0 : i32
    return %c0_i32, %c0_i32_0 : i32, i32
  }
  func.func @transform_9(%arg0: i32) -> (i32, i32) {
    %c0_i32 = arith.constant 0 : i32
    %c0_i32_0 = arith.constant 0 : i32
    %c0_i32_1 = arith.constant 0 : i32
    return %c0_i32, %c0_i32_0 : i32, i32
  }
  func.func @transform_10(%arg0: i32) -> (i32, i32) {
    %c0_i32 = arith.constant 0 : i32
    %c0_i32_0 = arith.constant 0 : i32
    %c0_i32_1 = arith.constant 0 : i32
    return %c0_i32, %c0_i32_0 : i32, i32
  }
  func.func @transform_11(%arg0: i32) -> (i32, i32, i32) {
    %c0_i32 = arith.constant 0 : i32
    %c0_i32_0 = arith.constant 0 : i32
    %c0_i32_1 = arith.constant 0 : i32
    return %arg0, %c0_i32, %c0_i32_0 : i32, i32, i32
  }
}

</mosaic_0001>

<llo_original>
// kernel: mul.1
$region0: #{mul.1}
  #allocation0 [shape = 's32[1]{0}', space=sflag, size = 0x4, scoped, tag = 'scoped memory for mul.1']
  %s0 = inlined_call_operand.vmem [shape: f32[199680], index: 0, kind: input, shape index: {}]
  %s1 = inlined_call_operand.vmem [shape: f32[199680], index: 1, kind: input, shape index: {}]
  %s2 = inlined_call_operand.vmem [shape: f32[199680], index: 2, kind: output, shape index: {}]
  %v3 = vld [vmem:[%s0] sm:$0xff]
  %v4 = vld [vmem:[%s1] sm:$0xff]
  %5 = xla_tuple %v3, %v4
  %6 = xla_tuple %5
  %v7 = vmul.f32 %v3, %v4
  %8 = xla_tuple %v7
  %9 = vst [vmem:[%s2] sm:$0xff] %v7
  %s10 = scalar_lea.vmem %s0, 8
  %v11 = vld [vmem:[%s10] sm:$0xff]
  %s12 = scalar_lea.vmem %s1, 8
  %v13 = vld [vmem:[%s12] sm:$0xff]
  %14 = xla_tuple %v11, %v13
  %15 = xla_tuple %14
  %v16 = vmul.f32 %v11, %v13
  %17 = xla_tuple %v16
  %s18 = scalar_lea.vmem %s2, 8
  %19 = vst [vmem:[%s18] sm:$0xff] %v16
  %s20 = scalar_lea.vmem %s0, 16
  %v21 = vld [vmem:[%s20] sm:$0xff]
  %s22 = scalar_lea.vmem %s1, 16
  %v23 = vld [vmem:[%s22] sm:$0xff]
  %24 = xla_tuple %v21, %v23
  %25 = xla_tuple %24
  %v26 = vmul.f32 %v21, %v23
  %27 = xla_tuple %v26
  %s28 = scalar_lea.vmem %s2, 16
  %29 = vst [vmem:[%s28] sm:$0xff] %v26
  %s30 = scalar_lea.vmem %s0, 24
  %v31 = vld [vmem:[%s30] sm:$0xff]
  %s32 = scalar_lea.vmem %s1, 24
  %v33 = vld [vmem:[%s32] sm:$0xff]
  %34 = xla_tuple %v31, %v33
  %35 = xla_tuple %34
  %v36 = vmul.f32 %v31, %v33
  %37 = xla_tuple %v36
  %s38 = scalar_lea.vmem %s2, 24
  %39 = vst [vmem:[%s38] sm:$0xff] %v36
  %s40 = scalar_lea.vmem %s0, 32
  %v41 = vld [vmem:[%s40] sm:$0xff]
  %s42 = scalar_lea.vmem %s1, 32
  %v43 = vld [vmem:[%s42] sm:$0xff]
  %44 = xla_tuple %v41, %v43
  %45 = xla_tuple %44
  %v46 = vmul.f32 %v41, %v43
  %47 = xla_tuple %v46
  %s48 = scalar_lea.vmem %s2, 32
  %49 = vst [vmem:[%s48] sm:$0xff] %v46
  %s50 = scalar_lea.vmem %s0, 40
  %v51 = vld [vmem:[%s50] sm:$0xff]
  %s52 = scalar_lea.vmem %s1, 40
  %v53 = vld [vmem:[%s52] sm:$0xff]
  %54 = xla_tuple %v51, %v53
  %55 = xla_tuple %54
  %v56 = vmul.f32 %v51, %v53
  %57 = xla_tuple %v56
  %s58 = scalar_lea.vmem %s2, 40
  %59 = vst [vmem:[%s58] sm:$0xff] %v56
  %s60 = scalar_lea.vmem %s0, 48
  %v61 = vld [vmem:[%s60] sm:$0xff]
  %s62 = scalar_lea.vmem %s1, 48
  %v63 = vld [vmem:[%s62] sm:$0xff]
  %64 = xla_tuple %v61, %v63
  %65 = xla_tuple %64
  %v66 = vmul.f32 %v61, %v63
  %67 = xla_tuple %v66
  %s68 = scalar_lea.vmem %s2, 48
  %69 = vst [vmem:[%s68] sm:$0xff] %v66
  %s70 = scalar_lea.vmem %s0, 56
  %v71 = vld [vmem:[%s70] sm:$0xff]
  %s72 = scalar_lea.vmem %s1, 56
  %v73 = vld [vmem:[%s72] sm:$0xff]
  %74 = xla_tuple %v71, %v73
  %75 = xla_tuple %74
  %v76 = vmul.f32 %v71, %v73
  %77 = xla_tuple %v76
  %s78 = scalar_lea.vmem %s2, 56
  %79 = vst [vmem:[%s78] sm:$0xff] %v76
  %s80 = scalar_lea.vmem %s0, 64
  %v81 = vld [vmem:[%s80] sm:$0xff]
  %s82 = scalar_lea.vmem %s1, 64
  %v83 = vld [vmem:[%s82] sm:$0xff]
  %84 = xla_tuple %v81, %v83
  %85 = xla_tuple %84
  %v86 = vmul.f32 %v81, %v83
  %87 = xla_tuple %v86
  %s88 = scalar_lea.vmem %s2, 64
  %89 = vst [vmem:[%s88] sm:$0xff] %v86
  %s90 = scalar_lea.vmem %s0, 72
  %v91 = vld [vmem:[%s90] sm:$0xff]
  %s92 = scalar_lea.vmem %s1, 72
  %v93 = vld [vmem:[%s92] sm:$0xff]
  %94 = xla_tuple %v91, %v93
  %95 = xla_tuple %94
  %v96 = vmul.f32 %v91, %v93
  %97 = xla_tuple %v96
  %s98 = scalar_lea.vmem %s2, 72
  %99 = vst [vmem:[%s98] sm:$0xff] %v96
  %s100 = scalar_lea.vmem %s0, 80
  %v101 = vld [vmem:[%s100] sm:$0xff]
  %s102 = scalar_lea.vmem %s1, 80
  %v103 = vld [vmem:[%s102] sm:$0xff]
  %104 = xla_tuple %v101, %v103
  %105 = xla_tuple %104
  %v106 = vmul.f32 %v101, %v103
  %107 = xla_tuple %v106
  %s108 = scalar_lea.vmem %s2, 80
  %109 = vst [vmem:[%s108] sm:$0xff] %v106
  %s110 = scalar_lea.vmem %s0, 88
  %v111 = vld [vmem:[%s110] sm:$0xff]
  %s112 = scalar_lea.vmem %s1, 88
  %v113 = vld [vmem:[%s112] sm:$0xff]
  %114 = xla_tuple %v111, %v113
  %115 = xla_tuple %114
  %v116 = vmul.f32 %v111, %v113
  %117 = xla_tuple %v116
  %s118 = scalar_lea.vmem %s2, 88
  %119 = vst [vmem:[%s118] sm:$0xff] %v116
  %s120 = scalar_lea.vmem %s0, 96
  %v121 = vld [vmem:[%s120] sm:$0xff]
  %s122 = scalar_lea.vmem %s1, 96
  %v123 = vld [vmem:[%s122] sm:$0xff]
  %124 = xla_tuple %v121, %v123
  %125 = xla_tuple %124
  %v126 = vmul.f32 %v121, %v123
  %127 = xla_tuple %v126
  %s128 = scalar_lea.vmem %s2, 96
  %129 = vst [vmem:[%s128] sm:$0xff] %v126
  %s130 = scalar_lea.vmem %s0, 104
  %v131 = vld [vmem:[%s130] sm:$0xff]
  %s132 = scalar_lea.vmem %s1, 104
  %v133 = vld [vmem:[%s132] sm:$0xff]
  %134 = xla_tuple %v131, %v133
  %135 = xla_tuple %134
  %v136 = vmul.f32 %v131, %v133
  %137 = xla_tuple %v136
  %s138 = scalar_lea.vmem %s2, 104
  %139 = vst [vmem:[%s138] sm:$0xff] %v136
  %s140 = scalar_lea.vmem %s0, 112
  %v141 = vld [vmem:[%s140] sm:$0xff]
  %s142 = scalar_lea.vmem %s1, 112
  %v143 = vld [vmem:[%s142] sm:$0xff]
  %144 = xla_tuple %v141, %v143
  %145 = xla_tuple %144
  %v146 = vmul.f32 %v141, %v143
  %147 = xla_tuple %v146
  %s148 = scalar_lea.vmem %s2, 112
  %149 = vst [vmem:[%s148] sm:$0xff] %v146
  %s150 = scalar_lea.vmem %s0, 120
  %v151 = vld [vmem:[%s150] sm:$0xff]
  %s152 = scalar_lea.vmem %s1, 120
  %v153 = vld [vmem:[%s152] sm:$0xff]
  %154 = xla_tuple %v151, %v153
  %155 = xla_tuple %154
  %v156 = vmul.f32 %v151, %v153
  %157 = xla_tuple %v156
  %s158 = scalar_lea.vmem %s2, 120
  %159 = vst [vmem:[%s158] sm:$0xff] %v156
  %s160 = scalar_lea.vmem %s0, 128
  %v161 = vld [vmem:[%s160] sm:$0xff]
  %s162 = scalar_lea.vmem %s1, 128
  %v163 = vld [vmem:[%s162] sm:$0xff]
  %164 = xla_tuple %v161, %v163
  %165 = xla_tuple %164
  %v166 = vmul.f32 %v161, %v163
  %167 = xla_tuple %v166
  %s168 = scalar_lea.vmem %s2, 128
  %169 = vst [vmem:[%s168] sm:$0xff] %v166
  %s170 = scalar_lea.vmem %s0, 136
  %v171 = vld [vmem:[%s170] sm:$0xff]
  %s172 = scalar_lea.vmem %s1, 136
  %v173 = vld [vmem:[%s172] sm:$0xff]
  %174 = xla_tuple %v171, %v173
  %175 = xla_tuple %174
  %v176 = vmul.f32 %v171, %v173
  %177 = xla_tuple %v176
  %s178 = scalar_lea.vmem %s2, 136
  %179 = vst [vmem:[%s178] sm:$0xff] %v176
  %s180 = scalar_lea.vmem %s0, 144
  %v181 = vld [vmem:[%s180] sm:$0xff]
  %s182 = scalar_lea.vmem %s1, 144
  %v183 = vld [vmem:[%s182] sm:$0xff]
  %184 = xla_tuple %v181, %v183
  %185 = xla_tuple %184
  %v186 = vmul.f32 %v181, %v183
  %187 = xla_tuple %v186
  %s188 = scalar_lea.vmem %s2, 144
  %189 = vst [vmem:[%s188] sm:$0xff] %v186
  %s190 = scalar_lea.vmem %s0, 152
  %v191 = vld [vmem:[%s190] sm:$0xff]
  %s192 = scalar_lea.vmem %s1, 152
  %v193 = vld [vmem:[%s192] sm:$0xff]
  %194 = xla_tuple %v191, %v193
  %195 = xla_tuple %194
  %v196 = vmul.f32 %v191, %v193
  %197 = xla_tuple %v196
  %s198 = scalar_lea.vmem %s2, 152
  %199 = vst [vmem:[%s198] sm:$0xff] %v196
  %s200 = scalar_lea.vmem %s0, 160
  %v201 = vld [vmem:[%s200] sm:$0xff]
  %s202 = scalar_lea.vmem %s1, 160
  %v203 = vld [vmem:[%s202] sm:$0xff]
  %204 = xla_tuple %v201, %v203
  %205 = xla_tuple %204
  %v206 = vmul.f32 %v201, %v203
  %207 = xla_tuple %v206
  %s208 = scalar_lea.vmem %s2, 160
  %209 = vst [vmem:[%s208] sm:$0xff] %v206
  %s210 = scalar_lea.vmem %s0, 168
  %v211 = vld [vmem:[%s210] sm:$0xff]
  %s212 = scalar_lea.vmem %s1, 168
  %v213 = vld [vmem:[%s212] sm:$0xff]
  %214 = xla_tuple %v211, %v213
  %215 = xla_tuple %214
  %v216 = vmul.f32 %v211, %v213
  %217 = xla_tuple %v216
  %s218 = scalar_lea.vmem %s2, 168
  %219 = vst [vmem:[%s218] sm:$0xff] %v216
  %s220 = scalar_lea.vmem %s0, 176
  %v221 = vld [vmem:[%s220] sm:$0xff]
  %s222 = scalar_lea.vmem %s1, 176
  %v223 = vld [vmem:[%s222] sm:$0xff]
  %224 = xla_tuple %v221, %v223
  %225 = xla_tuple %224
  %v226 = vmul.f32 %v221, %v223
  %227 = xla_tuple %v226
  %s228 = scalar_lea.vmem %s2, 176
  %229 = vst [vmem:[%s228] sm:$0xff] %v226
  %s230 = scalar_lea.vmem %s0, 184
  %v231 = vld [vmem:[%s230] sm:$0xff]
  %s232 = scalar_lea.vmem %s1, 184
  %v233 = vld [vmem:[%s232] sm:$0xff]
  %234 = xla_tuple %v231, %v233
  %235 = xla_tuple %234
  %v236 = vmul.f32 %v231, %v233
  %237 = xla_tuple %v236
  %s238 = scalar_lea.vmem %s2, 184
  %239 = vst [vmem:[%s238] sm:$0xff] %v236
  %s240 = scalar_lea.vmem %s0, 192
  %v241 = vld [vmem:[%s240] sm:$0xff]
  %s242 = scalar_lea.vmem %s1, 192
  %v243 = vld [vmem:[%s242] sm:$0xff]
  %244 = xla_tuple %v241, %v243
  %245 = xla_tuple %244
  %v246 = vmul.f32 %v241, %v243
  %247 = xla_tuple %v246
  %s248 = scalar_lea.vmem %s2, 192
  %249 = vst [vmem:[%s248] sm:$0xff] %v246
  %s250 = scalar_lea.vmem %s0, 200
  %v251 = vld [vmem:[%s250] sm:$0xff]
  %s252 = scalar_lea.vmem %s1, 200
  %v253 = vld [vmem:[%s252] sm:$0xff]
  %254 = xla_tuple %v251, %v253
  %255 = xla_tuple %254
  %v256 = vmul.f32 %v251, %v253
  %257 = xla_tuple %v256
  %s258 = scalar_lea.vmem %s2, 200
  %259 = vst [vmem:[%s258] sm:$0xff] %v256
  %s260 = scalar_lea.vmem %s0, 208
  %v261 = vld [vmem:[%s260] sm:$0xff]
  %s262 = scalar_lea.vmem %s1, 208
  %v263 = vld [vmem:[%s262] sm:$0xff]
  %264 = xla_tuple %v261, %v263
  %265 = xla_tuple %264
  %v266 = vmul.f32 %v261, %v263
  %267 = xla_tuple %v266
  %s268 = scalar_lea.vmem %s2, 208
  %269 = vst [vmem:[%s268] sm:$0xff] %v266
  %s270 = scalar_lea.vmem %s0, 216
  %v271 = vld [vmem:[%s270] sm:$0xff]
  %s272 = scalar_lea.vmem %s1, 216
  %v273 = vld [vmem:[%s272] sm:$0xff]
  %274 = xla_tuple %v271, %v273
  %275 = xla_tuple %274
  %v276 = vmul.f32 %v271, %v273
  %277 = xla_tuple %v276
  %s278 = scalar_lea.vmem %s2, 216
  %279 = vst [vmem:[%s278] sm:$0xff] %v276
  %s280 = scalar_lea.vmem %s0, 224
  %v281 = vld [vmem:[%s280] sm:$0xff]
  %s282 = scalar_lea.vmem %s1, 224
  %v283 = vld [vmem:[%s282] sm:$0xff]
  %284 = xla_tuple %v281, %v283
  %285 = xla_tuple %284
  %v286 = vmul.f32 %v281, %v283
  %287 = xla_tuple %v286
  %s288 = scalar_lea.vmem %s2, 224
  %289 = vst [vmem:[%s288] sm:$0xff] %v286
  %s290 = scalar_lea.vmem %s0, 232
  %v291 = vld [vmem:[%s290] sm:$0xff]
  %s292 = scalar_lea.vmem %s1, 232
  %v293 = vld [vmem:[%s292] sm:$0xff]
  %294 = xla_tuple %v291, %v293
  %295 = xla_tuple %294
  %v296 = vmul.f32 %v291, %v293
  %297 = xla_tuple %v296
  %s298 = scalar_lea.vmem %s2, 232
  %299 = vst [vmem:[%s298] sm:$0xff] %v296
  %s300 = scalar_lea.vmem %s0, 240
  %v301 = vld [vmem:[%s300] sm:$0xff]
  %s302 = scalar_lea.vmem %s1, 240
  %v303 = vld [vmem:[%s302] sm:$0xff]
  %304 = xla_tuple %v301, %v303
  %305 = xla_tuple %304
  %v306 = vmul.f32 %v301, %v303
  %307 = xla_tuple %v306
  %s308 = scalar_lea.vmem %s2, 240
  %309 = vst [vmem:[%s308] sm:$0xff] %v306
  %s310 = scalar_lea.vmem %s0, 248
  %v311 = vld [vmem:[%s310] sm:$0xff]
  %s312 = scalar_lea.vmem %s1, 248
  %v313 = vld [vmem:[%s312] sm:$0xff]
  %314 = xla_tuple %v311, %v313
  %315 = xla_tuple %314
  %v316 = vmul.f32 %v311, %v313
  %317 = xla_tuple %v316
  %s318 = scalar_lea.vmem %s2, 248
  %319 = vst [vmem:[%s318] sm:$0xff] %v316
  %s320 = scalar_lea.vmem %s0, 256
  %v321 = vld [vmem:[%s320] sm:$0xff]
  %s322 = scalar_lea.vmem %s1, 256
  %v323 = vld [vmem:[%s322] sm:$0xff]
  %324 = xla_tuple %v321, %v323
  %325 = xla_tuple %324
  %v326 = vmul.f32 %v321, %v323
  %327 = xla_tuple %v326
  %s328 = scalar_lea.vmem %s2, 256
  %329 = vst [vmem:[%s328] sm:$0xff] %v326
  %s330 = scalar_lea.vmem %s0, 264
  %v331 = vld [vmem:[%s330] sm:$0xff]
  %s332 = scalar_lea.vmem %s1, 264
  %v333 = vld [vmem:[%s332] sm:$0xff]
  %334 = xla_tuple %v331, %v333
  %335 = xla_tuple %334
  %v336 = vmul.f32 %v331, %v333
  %337 = xla_tuple %v336
  %s338 = scalar_lea.vmem %s2, 264
  %339 = vst [vmem:[%s338] sm:$0xff] %v336
  %s340 = scalar_lea.vmem %s0, 272
  %v341 = vld [vmem:[%s340] sm:$0xff]
  %s342 = scalar_lea.vmem %s1, 272
  %v343 = vld [vmem:[%s342] sm:$0xff]
  %344 = xla_tuple %v341, %v343
  %345 = xla_tuple %344
  %v346 = vmul.f32 %v341, %v343
  %347 = xla_tuple %v346
  %s348 = scalar_lea.vmem %s2, 272
  %349 = vst [vmem:[%s348] sm:$0xff] %v346
  %s350 = scalar_lea.vmem %s0, 280
  %v351 = vld [vmem:[%s350] sm:$0xff]
  %s352 = scalar_lea.vmem %s1, 280
  %v353 = vld [vmem:[%s352] sm:$0xff]
  %354 = xla_tuple %v351, %v353
  %355 = xla_tuple %354
  %v356 = vmul.f32 %v351, %v353
  %357 = xla_tuple %v356
  %s358 = scalar_lea.vmem %s2, 280
  %359 = vst [vmem:[%s358] sm:$0xff] %v356
  %s360 = scalar_lea.vmem %s0, 288
  %v361 = vld [vmem:[%s360] sm:$0xff]
  %s362 = scalar_lea.vmem %s1, 288
  %v363 = vld [vmem:[%s362] sm:$0xff]
  %364 = xla_tuple %v361, %v363
  %365 = xla_tuple %364
  %v366 = vmul.f32 %v361, %v363
  %367 = xla_tuple %v366
  %s368 = scalar_lea.vmem %s2, 288
  %369 = vst [vmem:[%s368] sm:$0xff] %v366
  %s370 = scalar_lea.vmem %s0, 296
  %v371 = vld [vmem:[%s370] sm:$0xff]
  %s372 = scalar_lea.vmem %s1, 296
  %v373 = vld [vmem:[%s372] sm:$0xff]
  %374 = xla_tuple %v371, %v373
  %375 = xla_tuple %374
  %v376 = vmul.f32 %v371, %v373
  %377 = xla_tuple %v376
  %s378 = scalar_lea.vmem %s2, 296
  %379 = vst [vmem:[%s378] sm:$0xff] %v376
  %s380 = scalar_lea.vmem %s0, 304
  %v381 = vld [vmem:[%s380] sm:$0xff]
  %s382 = scalar_lea.vmem %s1, 304
  %v383 = vld [vmem:[%s382] sm:$0xff]
  %384 = xla_tuple %v381, %v383
  %385 = xla_tuple %384
  %v386 = vmul.f32 %v381, %v383
  %387 = xla_tuple %v386
  %s388 = scalar_lea.vmem %s2, 304
  %389 = vst [vmem:[%s388] sm:$0xff] %v386
  %s390 = scalar_lea.vmem %s0, 312
  %v391 = vld [vmem:[%s390] sm:$0xff]
  %s392 = scalar_lea.vmem %s1, 312
  %v393 = vld [vmem:[%s392] sm:$0xff]
  %394 = xla_tuple %v391, %v393
  %395 = xla_tuple %394
  %v396 = vmul.f32 %v391, %v393
  %397 = xla_tuple %v396
  %s398 = scalar_lea.vmem %s2, 312
  %399 = vst [vmem:[%s398] sm:$0xff] %v396
  %s400 = scalar_lea.vmem %s0, 320
  %v401 = vld [vmem:[%s400] sm:$0xff]
  %s402 = scalar_lea.vmem %s1, 320
  %v403 = vld [vmem:[%s402] sm:$0xff]
  %404 = xla_tuple %v401, %v403
  %405 = xla_tuple %404
  %v406 = vmul.f32 %v401, %v403
  %407 = xla_tuple %v406
  %s408 = scalar_lea.vmem %s2, 320
  %409 = vst [vmem:[%s408] sm:$0xff] %v406
  %s410 = scalar_lea.vmem %s0, 328
  %v411 = vld [vmem:[%s410] sm:$0xff]
  %s412 = scalar_lea.vmem %s1, 328
  %v413 = vld [vmem:[%s412] sm:$0xff]
  %414 = xla_tuple %v411, %v413
  %415 = xla_tuple %414
  %v416 = vmul.f32 %v411, %v413
  %417 = xla_tuple %v416
  %s418 = scalar_lea.vmem %s2, 328
  %419 = vst [vmem:[%s418] sm:$0xff] %v416
  %s420 = scalar_lea.vmem %s0, 336
  %v421 = vld [vmem:[%s420] sm:$0xff]
  %s422 = scalar_lea.vmem %s1, 336
  %v423 = vld [vmem:[%s422] sm:$0xff]
  %424 = xla_tuple %v421, %v423
  %425 = xla_tuple %424
  %v426 = vmul.f32 %v421, %v423
  %427 = xla_tuple %v426
  %s428 = scalar_lea.vmem %s2, 336
  %429 = vst [vmem:[%s428] sm:$0xff] %v426
  %s430 = scalar_lea.vmem %s0, 344
  %v431 = vld [vmem:[%s430] sm:$0xff]
  %s432 = scalar_lea.vmem %s1, 344
  %v433 = vld [vmem:[%s432] sm:$0xff]
  %434 = xla_tuple %v431, %v433
  %435 = xla_tuple %434
  %v436 = vmul.f32 %v431, %v433
  %437 = xla_tuple %v436
  %s438 = scalar_lea.vmem %s2, 344
  %439 = vst [vmem:[%s438] sm:$0xff] %v436
  %s440 = scalar_lea.vmem %s0, 352
  %v441 = vld [vmem:[%s440] sm:$0xff]
  %s442 = scalar_lea.vmem %s1, 352
  %v443 = vld [vmem:[%s442] sm:$0xff]
  %444 = xla_tuple %v441, %v443
  %445 = xla_tuple %444
  %v446 = vmul.f32 %v441, %v443
  %447 = xla_tuple %v446
  %s448 = scalar_lea.vmem %s2, 352
  %449 = vst [vmem:[%s448] sm:$0xff] %v446
  %s450 = scalar_lea.vmem %s0, 360
  %v451 = vld [vmem:[%s450] sm:$0xff]
  %s452 = scalar_lea.vmem %s1, 360
  %v453 = vld [vmem:[%s452] sm:$0xff]
  %454 = xla_tuple %v451, %v453
  %455 = xla_tuple %454
  %v456 = vmul.f32 %v451, %v453
  %457 = xla_tuple %v456
  %s458 = scalar_lea.vmem %s2, 360
  %459 = vst [vmem:[%s458] sm:$0xff] %v456
  %s460 = scalar_lea.vmem %s0, 368
  %v461 = vld [vmem:[%s460] sm:$0xff]
  %s462 = scalar_lea.vmem %s1, 368
  %v463 = vld [vmem:[%s462] sm:$0xff]
  %464 = xla_tuple %v461, %v463
  %465 = xla_tuple %464
  %v466 = vmul.f32 %v461, %v463
  %467 = xla_tuple %v466
  %s468 = scalar_lea.vmem %s2, 368
  %469 = vst [vmem:[%s468] sm:$0xff] %v466
  %s470 = scalar_lea.vmem %s0, 376
  %v471 = vld [vmem:[%s470] sm:$0xff]
  %s472 = scalar_lea.vmem %s1, 376
  %v473 = vld [vmem:[%s472] sm:$0xff]
  %474 = xla_tuple %v471, %v473
  %475 = xla_tuple %474
  %v476 = vmul.f32 %v471, %v473
  %477 = xla_tuple %v476
  %s478 = scalar_lea.vmem %s2, 376
  %479 = vst [vmem:[%s478] sm:$0xff] %v476
  %s480 = scalar_lea.vmem %s0, 384
  %v481 = vld [vmem:[%s480] sm:$0xff]
  %s482 = scalar_lea.vmem %s1, 384
  %v483 = vld [vmem:[%s482] sm:$0xff]
  %484 = xla_tuple %v481, %v483
  %485 = xla_tuple %484
  %v486 = vmul.f32 %v481, %v483
  %487 = xla_tuple %v486
  %s488 = scalar_lea.vmem %s2, 384
  %489 = vst [vmem:[%s488] sm:$0xff] %v486
  %s490 = scalar_lea.vmem %s0, 392
  %v491 = vld [vmem:[%s490] sm:$0xff]
  %s492 = scalar_lea.vmem %s1, 392
  %v493 = vld [vmem:[%s492] sm:$0xff]
  %494 = xla_tuple %v491, %v493
  %495 = xla_tuple %494
  %v496 = vmul.f32 %v491, %v493
  %497 = xla_tuple %v496
  %s498 = scalar_lea.vmem %s2, 392
  %499 = vst [vmem:[%s498] sm:$0xff] %v496
  %s500 = scalar_lea.vmem %s0, 400
  %v501 = vld [vmem:[%s500] sm:$0xff]
  %s502 = scalar_lea.vmem %s1, 400
  %v503 = vld [vmem:[%s502] sm:$0xff]
  %504 = xla_tuple %v501, %v503
  %505 = xla_tuple %504
  %v506 = vmul.f32 %v501, %v503
  %507 = xla_tuple %v506
  %s508 = scalar_lea.vmem %s2, 400
  %509 = vst [vmem:[%s508] sm:$0xff] %v506
  %s510 = scalar_lea.vmem %s0, 408
  %v511 = vld [vmem:[%s510] sm:$0xff]
  %s512 = scalar_lea.vmem %s1, 408
  %v513 = vld [vmem:[%s512] sm:$0xff]
  %514 = xla_tuple %v511, %v513
  %515 = xla_tuple %514
  %v516 = vmul.f32 %v511, %v513
  %517 = xla_tuple %v516
  %s518 = scalar_lea.vmem %s2, 408
  %519 = vst [vmem:[%s518] sm:$0xff] %v516
  %s520 = scalar_lea.vmem %s0, 416
  %v521 = vld [vmem:[%s520] sm:$0xff]
  %s522 = scalar_lea.vmem %s1, 416
  %v523 = vld [vmem:[%s522] sm:$0xff]
  %524 = xla_tuple %v521, %v523
  %525 = xla_tuple %524
  %v526 = vmul.f32 %v521, %v523
  %527 = xla_tuple %v526
  %s528 = scalar_lea.vmem %s2, 416
  %529 = vst [vmem:[%s528] sm:$0xff] %v526
  %s530 = scalar_lea.vmem %s0, 424
  %v531 = vld [vmem:[%s530] sm:$0xff]
  %s532 = scalar_lea.vmem %s1, 424
  %v533 = vld [vmem:[%s532] sm:$0xff]
  %534 = xla_tuple %v531, %v533
  %535 = xla_tuple %534
  %v536 = vmul.f32 %v531, %v533
  %537 = xla_tuple %v536
  %s538 = scalar_lea.vmem %s2, 424
  %539 = vst [vmem:[%s538] sm:$0xff] %v536
  %s540 = scalar_lea.vmem %s0, 432
  %v541 = vld [vmem:[%s540] sm:$0xff]
  %s542 = scalar_lea.vmem %s1, 432
  %v543 = vld [vmem:[%s542] sm:$0xff]
  %544 = xla_tuple %v541, %v543
  %545 = xla_tuple %544
  %v546 = vmul.f32 %v541, %v543
  %547 = xla_tuple %v546
  %s548 = scalar_lea.vmem %s2, 432
  %549 = vst [vmem:[%s548] sm:$0xff] %v546
  %s550 = scalar_lea.vmem %s0, 440
  %v551 = vld [vmem:[%s550] sm:$0xff]
  %s552 = scalar_lea.vmem %s1, 440
  %v553 = vld [vmem:[%s552] sm:$0xff]
  %554 = xla_tuple %v551, %v553
  %555 = xla_tuple %554
  %v556 = vmul.f32 %v551, %v553
  %557 = xla_tuple %v556
  %s558 = scalar_lea.vmem %s2, 440
  %559 = vst [vmem:[%s558] sm:$0xff] %v556
  %s560 = scalar_lea.vmem %s0, 448
  %v561 = vld [vmem:[%s560] sm:$0xff]
  %s562 = scalar_lea.vmem %s1, 448
  %v563 = vld [vmem:[%s562] sm:$0xff]
  %564 = xla_tuple %v561, %v563
  %565 = xla_tuple %564
  %v566 = vmul.f32 %v561, %v563
  %567 = xla_tuple %v566
  %s568 = scalar_lea.vmem %s2, 448
  %569 = vst [vmem:[%s568] sm:$0xff] %v566
  %s570 = scalar_lea.vmem %s0, 456
  %v571 = vld [vmem:[%s570] sm:$0xff]
  %s572 = scalar_lea.vmem %s1, 456
  %v573 = vld [vmem:[%s572] sm:$0xff]
  %574 = xla_tuple %v571, %v573
  %575 = xla_tuple %574
  %v576 = vmul.f32 %v571, %v573
  %577 = xla_tuple %v576
  %s578 = scalar_lea.vmem %s2, 456
  %579 = vst [vmem:[%s578] sm:$0xff] %v576
  %s580 = scalar_lea.vmem %s0, 464
  %v581 = vld [vmem:[%s580] sm:$0xff]
  %s582 = scalar_lea.vmem %s1, 464
  %v583 = vld [vmem:[%s582] sm:$0xff]
  %584 = xla_tuple %v581, %v583
  %585 = xla_tuple %584
  %v586 = vmul.f32 %v581, %v583
  %587 = xla_tuple %v586
  %s588 = scalar_lea.vmem %s2, 464
  %589 = vst [vmem:[%s588] sm:$0xff] %v586
  %s590 = scalar_lea.vmem %s0, 472
  %v591 = vld [vmem:[%s590] sm:$0xff]
  %s592 = scalar_lea.vmem %s1, 472
  %v593 = vld [vmem:[%s592] sm:$0xff]
  %594 = xla_tuple %v591, %v593
  %595 = xla_tuple %594
  %v596 = vmul.f32 %v591, %v593
  %597 = xla_tuple %v596
  %s598 = scalar_lea.vmem %s2, 472
  %599 = vst [vmem:[%s598] sm:$0xff] %v596
  %s600 = scalar_lea.vmem %s0, 480
  %v601 = vld [vmem:[%s600] sm:$0xff]
  %s602 = scalar_lea.vmem %s1, 480
  %v603 = vld [vmem:[%s602] sm:$0xff]
  %604 = xla_tuple %v601, %v603
  %605 = xla_tuple %604
  %v606 = vmul.f32 %v601, %v603
  %607 = xla_tuple %v606
  %s608 = scalar_lea.vmem %s2, 480
  %609 = vst [vmem:[%s608] sm:$0xff] %v606
  %s610 = scalar_lea.vmem %s0, 488
  %v611 = vld [vmem:[%s610] sm:$0xff]
  %s612 = scalar_lea.vmem %s1, 488
  %v613 = vld [vmem:[%s612] sm:$0xff]
  %614 = xla_tuple %v611, %v613
  %615 = xla_tuple %614
  %v616 = vmul.f32 %v611, %v613
  %617 = xla_tuple %v616
  %s618 = scalar_lea.vmem %s2, 488
  %619 = vst [vmem:[%s618] sm:$0xff] %v616
  %s620 = scalar_lea.vmem %s0, 496
  %v621 = vld [vmem:[%s620] sm:$0xff]
  %s622 = scalar_lea.vmem %s1, 496
  %v623 = vld [vmem:[%s622] sm:$0xff]
  %624 = xla_tuple %v621, %v623
  %625 = xla_tuple %624
  %v626 = vmul.f32 %v621, %v623
  %627 = xla_tuple %v626
  %s628 = scalar_lea.vmem %s2, 496
  %629 = vst [vmem:[%s628] sm:$0xff] %v626
  %s630 = scalar_lea.vmem %s0, 504
  %v631 = vld [vmem:[%s630] sm:$0xff]
  %s632 = scalar_lea.vmem %s1, 504
  %v633 = vld [vmem:[%s632] sm:$0xff]
  %634 = xla_tuple %v631, %v633
  %635 = xla_tuple %634
  %v636 = vmul.f32 %v631, %v633
  %637 = xla_tuple %v636
  %s638 = scalar_lea.vmem %s2, 504
  %639 = vst [vmem:[%s638] sm:$0xff] %v636
  %s640 = scalar_lea.vmem %s0, 512
  %v641 = vld [vmem:[%s640] sm:$0xff]
  %s642 = scalar_lea.vmem %s1, 512
  %v643 = vld [vmem:[%s642] sm:$0xff]
  %644 = xla_tuple %v641, %v643
  %645 = xla_tuple %644
  %v646 = vmul.f32 %v641, %v643
  %647 = xla_tuple %v646
  %s648 = scalar_lea.vmem %s2, 512
  %649 = vst [vmem:[%s648] sm:$0xff] %v646
  %s650 = scalar_lea.vmem %s0, 520
  %v651 = vld [vmem:[%s650] sm:$0xff]
  %s652 = scalar_lea.vmem %s1, 520
  %v653 = vld [vmem:[%s652] sm:$0xff]
  %654 = xla_tuple %v651, %v653
  %655 = xla_tuple %654
  %v656 = vmul.f32 %v651, %v653
  %657 = xla_tuple %v656
  %s658 = scalar_lea.vmem %s2, 520
  %659 = vst [vmem:[%s658] sm:$0xff] %v656
  %s660 = scalar_lea.vmem %s0, 528
  %v661 = vld [vmem:[%s660] sm:$0xff]
  %s662 = scalar_lea.vmem %s1, 528
  %v663 = vld [vmem:[%s662] sm:$0xff]
  %664 = xla_tuple %v661, %v663
  %665 = xla_tuple %664
  %v666 = vmul.f32 %v661, %v663
  %667 = xla_tuple %v666
  %s668 = scalar_lea.vmem %s2, 528
  %669 = vst [vmem:[%s668] sm:$0xff] %v666
  %s670 = scalar_lea.vmem %s0, 536
  %v671 = vld [vmem:[%s670] sm:$0xff]
  %s672 = scalar_lea.vmem %s1, 536
  %v673 = vld [vmem:[%s672] sm:$0xff]
  %674 = xla_tuple %v671, %v673
  %675 = xla_tuple %674
  %v676 = vmul.f32 %v671, %v673
  %677 = xla_tuple %v676
  %s678 = scalar_lea.vmem %s2, 536
  %679 = vst [vmem:[%s678] sm:$0xff] %v676
  %s680 = scalar_lea.vmem %s0, 544
  %v681 = vld [vmem:[%s680] sm:$0xff]
  %s682 = scalar_lea.vmem %s1, 544
  %v683 = vld [vmem:[%s682] sm:$0xff]
  %684 = xla_tuple %v681, %v683
  %685 = xla_tuple %684
  %v686 = vmul.f32 %v681, %v683
  %687 = xla_tuple %v686
  %s688 = scalar_lea.vmem %s2, 544
  %689 = vst [vmem:[%s688] sm:$0xff] %v686
  %s690 = scalar_lea.vmem %s0, 552
  %v691 = vld [vmem:[%s690] sm:$0xff]
  %s692 = scalar_lea.vmem %s1, 552
  %v693 = vld [vmem:[%s692] sm:$0xff]
  %694 = xla_tuple %v691, %v693
  %695 = xla_tuple %694
  %v696 = vmul.f32 %v691, %v693
  %697 = xla_tuple %v696
  %s698 = scalar_lea.vmem %s2, 552
  %699 = vst [vmem:[%s698] sm:$0xff] %v696
  %s700 = scalar_lea.vmem %s0, 560
  %v701 = vld [vmem:[%s700] sm:$0xff]
  %s702 = scalar_lea.vmem %s1, 560
  %v703 = vld [vmem:[%s702] sm:$0xff]
  %704 = xla_tuple %v701, %v703
  %705 = xla_tuple %704
  %v706 = vmul.f32 %v701, %v703
  %707 = xla_tuple %v706
  %s708 = scalar_lea.vmem %s2, 560
  %709 = vst [vmem:[%s708] sm:$0xff] %v706
  %s710 = scalar_lea.vmem %s0, 568
  %v711 = vld [vmem:[%s710] sm:$0xff]
  %s712 = scalar_lea.vmem %s1, 568
  %v713 = vld [vmem:[%s712] sm:$0xff]
  %714 = xla_tuple %v711, %v713
  %715 = xla_tuple %714
  %v716 = vmul.f32 %v711, %v713
  %717 = xla_tuple %v716
  %s718 = scalar_lea.vmem %s2, 568
  %719 = vst [vmem:[%s718] sm:$0xff] %v716
  %s720 = scalar_lea.vmem %s0, 576
  %v721 = vld [vmem:[%s720] sm:$0xff]
  %s722 = scalar_lea.vmem %s1, 576
  %v723 = vld [vmem:[%s722] sm:$0xff]
  %724 = xla_tuple %v721, %v723
  %725 = xla_tuple %724
  %v726 = vmul.f32 %v721, %v723
  %727 = xla_tuple %v726
  %s728 = scalar_lea.vmem %s2, 576
  %729 = vst [vmem:[%s728] sm:$0xff] %v726
  %s730 = scalar_lea.vmem %s0, 584
  %v731 = vld [vmem:[%s730] sm:$0xff]
  %s732 = scalar_lea.vmem %s1, 584
  %v733 = vld [vmem:[%s732] sm:$0xff]
  %734 = xla_tuple %v731, %v733
  %735 = xla_tuple %734
  %v736 = vmul.f32 %v731, %v733
  %737 = xla_tuple %v736
  %s738 = scalar_lea.vmem %s2, 584
  %739 = vst [vmem:[%s738] sm:$0xff] %v736
  %s740 = scalar_lea.vmem %s0, 592
  %v741 = vld [vmem:[%s740] sm:$0xff]
  %s742 = scalar_lea.vmem %s1, 592
  %v743 = vld [vmem:[%s742] sm:$0xff]
  %744 = xla_tuple %v741, %v743
  %745 = xla_tuple %744
  %v746 = vmul.f32 %v741, %v743
  %747 = xla_tuple %v746
  %s748 = scalar_lea.vmem %s2, 592
  %749 = vst [vmem:[%s748] sm:$0xff] %v746
  %s750 = scalar_lea.vmem %s0, 600
  %v751 = vld [vmem:[%s750] sm:$0xff]
  %s752 = scalar_lea.vmem %s1, 600
  %v753 = vld [vmem:[%s752] sm:$0xff]
  %754 = xla_tuple %v751, %v753
  %755 = xla_tuple %754
  %v756 = vmul.f32 %v751, %v753
  %757 = xla_tuple %v756
  %s758 = scalar_lea.vmem %s2, 600
  %759 = vst [vmem:[%s758] sm:$0xff] %v756
  %s760 = scalar_lea.vmem %s0, 608
  %v761 = vld [vmem:[%s760] sm:$0xff]
  %s762 = scalar_lea.vmem %s1, 608
  %v763 = vld [vmem:[%s762] sm:$0xff]
  %764 = xla_tuple %v761, %v763
  %765 = xla_tuple %764
  %v766 = vmul.f32 %v761, %v763
  %767 = xla_tuple %v766
  %s768 = scalar_lea.vmem %s2, 608
  %769 = vst [vmem:[%s768] sm:$0xff] %v766
  %s770 = scalar_lea.vmem %s0, 616
  %v771 = vld [vmem:[%s770] sm:$0xff]
  %s772 = scalar_lea.vmem %s1, 616
  %v773 = vld [vmem:[%s772] sm:$0xff]
  %774 = xla_tuple %v771, %v773
  %775 = xla_tuple %774
  %v776 = vmul.f32 %v771, %v773
  %777 = xla_tuple %v776
  %s778 = scalar_lea.vmem %s2, 616
  %779 = vst [vmem:[%s778] sm:$0xff] %v776
  %s780 = scalar_lea.vmem %s0, 624
  %v781 = vld [vmem:[%s780] sm:$0xff]
  %s782 = scalar_lea.vmem %s1, 624
  %v783 = vld [vmem:[%s782] sm:$0xff]
  %784 = xla_tuple %v781, %v783
  %785 = xla_tuple %784
  %v786 = vmul.f32 %v781, %v783
  %787 = xla_tuple %v786
  %s788 = scalar_lea.vmem %s2, 624
  %789 = vst [vmem:[%s788] sm:$0xff] %v786
  %s790 = scalar_lea.vmem %s0, 632
  %v791 = vld [vmem:[%s790] sm:$0xff]
  %s792 = scalar_lea.vmem %s1, 632
  %v793 = vld [vmem:[%s792] sm:$0xff]
  %794 = xla_tuple %v791, %v793
  %795 = xla_tuple %794
  %v796 = vmul.f32 %v791, %v793
  %797 = xla_tuple %v796
  %s798 = scalar_lea.vmem %s2, 632
  %799 = vst [vmem:[%s798] sm:$0xff] %v796
  %s800 = scalar_lea.vmem %s0, 640
  %v801 = vld [vmem:[%s800] sm:$0xff]
  %s802 = scalar_lea.vmem %s1, 640
  %v803 = vld [vmem:[%s802] sm:$0xff]
  %804 = xla_tuple %v801, %v803
  %805 = xla_tuple %804
  %v806 = vmul.f32 %v801, %v803
  %807 = xla_tuple %v806
  %s808 = scalar_lea.vmem %s2, 640
  %809 = vst [vmem:[%s808] sm:$0xff] %v806
  %s810 = scalar_lea.vmem %s0, 648
  %v811 = vld [vmem:[%s810] sm:$0xff]
  %s812 = scalar_lea.vmem %s1, 648
  %v813 = vld [vmem:[%s812] sm:$0xff]
  %814 = xla_tuple %v811, %v813
  %815 = xla_tuple %814
  %v816 = vmul.f32 %v811, %v813
  %817 = xla_tuple %v816
  %s818 = scalar_lea.vmem %s2, 648
  %819 = vst [vmem:[%s818] sm:$0xff] %v816
  %s820 = scalar_lea.vmem %s0, 656
  %v821 = vld [vmem:[%s820] sm:$0xff]
  %s822 = scalar_lea.vmem %s1, 656
  %v823 = vld [vmem:[%s822] sm:$0xff]
  %824 = xla_tuple %v821, %v823
  %825 = xla_tuple %824
  %v826 = vmul.f32 %v821, %v823
  %827 = xla_tuple %v826
  %s828 = scalar_lea.vmem %s2, 656
  %829 = vst [vmem:[%s828] sm:$0xff] %v826
  %s830 = scalar_lea.vmem %s0, 664
  %v831 = vld [vmem:[%s830] sm:$0xff]
  %s832 = scalar_lea.vmem %s1, 664
  %v833 = vld [vmem:[%s832] sm:$0xff]
  %834 = xla_tuple %v831, %v833
  %835 = xla_tuple %834
  %v836 = vmul.f32 %v831, %v833
  %837 = xla_tuple %v836
  %s838 = scalar_lea.vmem %s2, 664
  %839 = vst [vmem:[%s838] sm:$0xff] %v836
  %s840 = scalar_lea.vmem %s0, 672
  %v841 = vld [vmem:[%s840] sm:$0xff]
  %s842 = scalar_lea.vmem %s1, 672
  %v843 = vld [vmem:[%s842] sm:$0xff]
  %844 = xla_tuple %v841, %v843
  %845 = xla_tuple %844
  %v846 = vmul.f32 %v841, %v843
  %847 = xla_tuple %v846
  %s848 = scalar_lea.vmem %s2, 672
  %849 = vst [vmem:[%s848] sm:$0xff] %v846
  %s850 = scalar_lea.vmem %s0, 680
  %v851 = vld [vmem:[%s850] sm:$0xff]
  %s852 = scalar_lea.vmem %s1, 680
  %v853 = vld [vmem:[%s852] sm:$0xff]
  %854 = xla_tuple %v851, %v853
  %855 = xla_tuple %854
  %v856 = vmul.f32 %v851, %v853
  %857 = xla_tuple %v856
  %s858 = scalar_lea.vmem %s2, 680
  %859 = vst [vmem:[%s858] sm:$0xff] %v856
  %s860 = scalar_lea.vmem %s0, 688
  %v861 = vld [vmem:[%s860] sm:$0xff]
  %s862 = scalar_lea.vmem %s1, 688
  %v863 = vld [vmem:[%s862] sm:$0xff]
  %864 = xla_tuple %v861, %v863
  %865 = xla_tuple %864
  %v866 = vmul.f32 %v861, %v863
  %867 = xla_tuple %v866
  %s868 = scalar_lea.vmem %s2, 688
  %869 = vst [vmem:[%s868] sm:$0xff] %v866
  %s870 = scalar_lea.vmem %s0, 696
  %v871 = vld [vmem:[%s870] sm:$0xff]
  %s872 = scalar_lea.vmem %s1, 696
  %v873 = vld [vmem:[%s872] sm:$0xff]
  %874 = xla_tuple %v871, %v873
  %875 = xla_tuple %874
  %v876 = vmul.f32 %v871, %v873
  %877 = xla_tuple %v876
  %s878 = scalar_lea.vmem %s2, 696
  %879 = vst [vmem:[%s878] sm:$0xff] %v876
  %s880 = scalar_lea.vmem %s0, 704
  %v881 = vld [vmem:[%s880] sm:$0xff]
  %s882 = scalar_lea.vmem %s1, 704
  %v883 = vld [vmem:[%s882] sm:$0xff]
  %884 = xla_tuple %v881, %v883
  %885 = xla_tuple %884
  %v886 = vmul.f32 %v881, %v883
  %887 = xla_tuple %v886
  %s888 = scalar_lea.vmem %s2, 704
  %889 = vst [vmem:[%s888] sm:$0xff] %v886
  %s890 = scalar_lea.vmem %s0, 712
  %v891 = vld [vmem:[%s890] sm:$0xff]
  %s892 = scalar_lea.vmem %s1, 712
  %v893 = vld [vmem:[%s892] sm:$0xff]
  %894 = xla_tuple %v891, %v893
  %895 = xla_tuple %894
  %v896 = vmul.f32 %v891, %v893
  %897 = xla_tuple %v896
  %s898 = scalar_lea.vmem %s2, 712
  %899 = vst [vmem:[%s898] sm:$0xff] %v896
  %s900 = scalar_lea.vmem %s0, 720
  %v901 = vld [vmem:[%s900] sm:$0xff]
  %s902 = scalar_lea.vmem %s1, 720
  %v903 = vld [vmem:[%s902] sm:$0xff]
  %904 = xla_tuple %v901, %v903
  %905 = xla_tuple %904
  %v906 = vmul.f32 %v901, %v903
  %907 = xla_tuple %v906
  %s908 = scalar_lea.vmem %s2, 720
  %909 = vst [vmem:[%s908] sm:$0xff] %v906
  %s910 = scalar_lea.vmem %s0, 728
  %v911 = vld [vmem:[%s910] sm:$0xff]
  %s912 = scalar_lea.vmem %s1, 728
  %v913 = vld [vmem:[%s912] sm:$0xff]
  %914 = xla_tuple %v911, %v913
  %915 = xla_tuple %914
  %v916 = vmul.f32 %v911, %v913
  %917 = xla_tuple %v916
  %s918 = scalar_lea.vmem %s2, 728
  %919 = vst [vmem:[%s918] sm:$0xff] %v916
  %s920 = scalar_lea.vmem %s0, 736
  %v921 = vld [vmem:[%s920] sm:$0xff]
  %s922 = scalar_lea.vmem %s1, 736
  %v923 = vld [vmem:[%s922] sm:$0xff]
  %924 = xla_tuple %v921, %v923
  %925 = xla_tuple %924
  %v926 = vmul.f32 %v921, %v923
  %927 = xla_tuple %v926
  %s928 = scalar_lea.vmem %s2, 736
  %929 = vst [vmem:[%s928] sm:$0xff] %v926
  %s930 = scalar_lea.vmem %s0, 744
  %v931 = vld [vmem:[%s930] sm:$0xff]
  %s932 = scalar_lea.vmem %s1, 744
  %v933 = vld [vmem:[%s932] sm:$0xff]
  %934 = xla_tuple %v931, %v933
  %935 = xla_tuple %934
  %v936 = vmul.f32 %v931, %v933
  %937 = xla_tuple %v936
  %s938 = scalar_lea.vmem %s2, 744
  %939 = vst [vmem:[%s938] sm:$0xff] %v936
  %s940 = scalar_lea.vmem %s0, 752
  %v941 = vld [vmem:[%s940] sm:$0xff]
  %s942 = scalar_lea.vmem %s1, 752
  %v943 = vld [vmem:[%s942] sm:$0xff]
  %944 = xla_tuple %v941, %v943
  %945 = xla_tuple %944
  %v946 = vmul.f32 %v941, %v943
  %947 = xla_tuple %v946
  %s948 = scalar_lea.vmem %s2, 752
  %949 = vst [vmem:[%s948] sm:$0xff] %v946
  %s950 = scalar_lea.vmem %s0, 760
  %v951 = vld [vmem:[%s950] sm:$0xff]
  %s952 = scalar_lea.vmem %s1, 760
  %v953 = vld [vmem:[%s952] sm:$0xff]
  %954 = xla_tuple %v951, %v953
  %955 = xla_tuple %954
  %v956 = vmul.f32 %v951, %v953
  %957 = xla_tuple %v956
  %s958 = scalar_lea.vmem %s2, 760
  %959 = vst [vmem:[%s958] sm:$0xff] %v956
  %s960 = scalar_lea.vmem %s0, 768
  %v961 = vld [vmem:[%s960] sm:$0xff]
  %s962 = scalar_lea.vmem %s1, 768
  %v963 = vld [vmem:[%s962] sm:$0xff]
  %964 = xla_tuple %v961, %v963
  %965 = xla_tuple %964
  %v966 = vmul.f32 %v961, %v963
  %967 = xla_tuple %v966
  %s968 = scalar_lea.vmem %s2, 768
  %969 = vst [vmem:[%s968] sm:$0xff] %v966
  %s970 = scalar_lea.vmem %s0, 776
  %v971 = vld [vmem:[%s970] sm:$0xff]
  %s972 = scalar_lea.vmem %s1, 776
  %v973 = vld [vmem:[%s972] sm:$0xff]
  %974 = xla_tuple %v971, %v973
  %975 = xla_tuple %974
  %v976 = vmul.f32 %v971, %v973
  %977 = xla_tuple %v976
  %s978 = scalar_lea.vmem %s2, 776
  %979 = vst [vmem:[%s978] sm:$0xff] %v976
  %s980 = scalar_lea.vmem %s0, 784
  %v981 = vld [vmem:[%s980] sm:$0xff]
  %s982 = scalar_lea.vmem %s1, 784
  %v983 = vld [vmem:[%s982] sm:$0xff]
  %984 = xla_tuple %v981, %v983
  %985 = xla_tuple %984
  %v986 = vmul.f32 %v981, %v983
  %987 = xla_tuple %v986
  %s988 = scalar_lea.vmem %s2, 784
  %989 = vst [vmem:[%s988] sm:$0xff] %v986
  %s990 = scalar_lea.vmem %s0, 792
  %v991 = vld [vmem:[%s990] sm:$0xff]
  %s992 = scalar_lea.vmem %s1, 792
  %v993 = vld [vmem:[%s992] sm:$0xff]
  %994 = xla_tuple %v991, %v993
  %995 = xla_tuple %994
  %v996 = vmul.f32 %v991, %v993
  %997 = xla_tuple %v996
  %s998 = scalar_lea.vmem %s2, 792
  %999 = vst [vmem:[%s998] sm:$0xff] %v996
  %s1000 = scalar_lea.vmem %s0, 800
  %v1001 = vld [vmem:[%s1000] sm:$0xff]
  %s1002 = scalar_lea.vmem %s1, 800
  %v1003 = vld [vmem:[%s1002] sm:$0xff]
  %1004 = xla_tuple %v1001, %v1003
  %1005 = xla_tuple %1004
  %v1006 = vmul.f32 %v1001, %v1003
  %1007 = xla_tuple %v1006
  %s1008 = scalar_lea.vmem %s2, 800
  %1009 = vst [vmem:[%s1008] sm:$0xff] %v1006
  %s1010 = scalar_lea.vmem %s0, 808
  %v1011 = vld [vmem:[%s1010] sm:$0xff]
  %s1012 = scalar_lea.vmem %s1, 808
  %v1013 = vld [vmem:[%s1012] sm:$0xff]
  %1014 = xla_tuple %v1011, %v1013
  %1015 = xla_tuple %1014
  %v1016 = vmul.f32 %v1011, %v1013
  %1017 = xla_tuple %v1016
  %s1018 = scalar_lea.vmem %s2, 808
  %1019 = vst [vmem:[%s1018] sm:$0xff] %v1016
  %s1020 = scalar_lea.vmem %s0, 816
  %v1021 = vld [vmem:[%s1020] sm:$0xff]
  %s1022 = scalar_lea.vmem %s1, 816
  %v1023 = vld [vmem:[%s1022] sm:$0xff]
  %1024 = xla_tuple %v1021, %v1023
  %1025 = xla_tuple %1024
  %v1026 = vmul.f32 %v1021, %v1023
  %1027 = xla_tuple %v1026
  %s1028 = scalar_lea.vmem %s2, 816
  %1029 = vst [vmem:[%s1028] sm:$0xff] %v1026
  %s1030 = scalar_lea.vmem %s0, 824
  %v1031 = vld [vmem:[%s1030] sm:$0xff]
  %s1032 = scalar_lea.vmem %s1, 824
  %v1033 = vld [vmem:[%s1032] sm:$0xff]
  %1034 = xla_tuple %v1031, %v1033
  %1035 = xla_tuple %1034
  %v1036 = vmul.f32 %v1031, %v1033
  %1037 = xla_tuple %v1036
  %s1038 = scalar_lea.vmem %s2, 824
  %1039 = vst [vmem:[%s1038] sm:$0xff] %v1036
  %s1040 = scalar_lea.vmem %s0, 832
  %v1041 = vld [vmem:[%s1040] sm:$0xff]
  %s1042 = scalar_lea.vmem %s1, 832
  %v1043 = vld [vmem:[%s1042] sm:$0xff]
  %1044 = xla_tuple %v1041, %v1043
  %1045 = xla_tuple %1044
  %v1046 = vmul.f32 %v1041, %v1043
  %1047 = xla_tuple %v1046
  %s1048 = scalar_lea.vmem %s2, 832
  %1049 = vst [vmem:[%s1048] sm:$0xff] %v1046
  %s1050 = scalar_lea.vmem %s0, 840
  %v1051 = vld [vmem:[%s1050] sm:$0xff]
  %s1052 = scalar_lea.vmem %s1, 840
  %v1053 = vld [vmem:[%s1052] sm:$0xff]
  %1054 = xla_tuple %v1051, %v1053
  %1055 = xla_tuple %1054
  %v1056 = vmul.f32 %v1051, %v1053
  %1057 = xla_tuple %v1056
  %s1058 = scalar_lea.vmem %s2, 840
  %1059 = vst [vmem:[%s1058] sm:$0xff] %v1056
  %s1060 = scalar_lea.vmem %s0, 848
  %v1061 = vld [vmem:[%s1060] sm:$0xff]
  %s1062 = scalar_lea.vmem %s1, 848
  %v1063 = vld [vmem:[%s1062] sm:$0xff]
  %1064 = xla_tuple %v1061, %v1063
  %1065 = xla_tuple %1064
  %v1066 = vmul.f32 %v1061, %v1063
  %1067 = xla_tuple %v1066
  %s1068 = scalar_lea.vmem %s2, 848
  %1069 = vst [vmem:[%s1068] sm:$0xff] %v1066
  %s1070 = scalar_lea.vmem %s0, 856
  %v1071 = vld [vmem:[%s1070] sm:$0xff]
  %s1072 = scalar_lea.vmem %s1, 856
  %v1073 = vld [vmem:[%s1072] sm:$0xff]
  %1074 = xla_tuple %v1071, %v1073
  %1075 = xla_tuple %1074
  %v1076 = vmul.f32 %v1071, %v1073
  %1077 = xla_tuple %v1076
  %s1078 = scalar_lea.vmem %s2, 856
  %1079 = vst [vmem:[%s1078] sm:$0xff] %v1076
  %s1080 = scalar_lea.vmem %s0, 864
  %v1081 = vld [vmem:[%s1080] sm:$0xff]
  %s1082 = scalar_lea.vmem %s1, 864
  %v1083 = vld [vmem:[%s1082] sm:$0xff]
  %1084 = xla_tuple %v1081, %v1083
  %1085 = xla_tuple %1084
  %v1086 = vmul.f32 %v1081, %v1083
  %1087 = xla_tuple %v1086
  %s1088 = scalar_lea.vmem %s2, 864
  %1089 = vst [vmem:[%s1088] sm:$0xff] %v1086
  %s1090 = scalar_lea.vmem %s0, 872
  %v1091 = vld [vmem:[%s1090] sm:$0xff]
  %s1092 = scalar_lea.vmem %s1, 872
  %v1093 = vld [vmem:[%s1092] sm:$0xff]
  %1094 = xla_tuple %v1091, %v1093
  %1095 = xla_tuple %1094
  %v1096 = vmul.f32 %v1091, %v1093
  %1097 = xla_tuple %v1096
  %s1098 = scalar_lea.vmem %s2, 872
  %1099 = vst [vmem:[%s1098] sm:$0xff] %v1096
  %s1100 = scalar_lea.vmem %s0, 880
  %v1101 = vld [vmem:[%s1100] sm:$0xff]
  %s1102 = scalar_lea.vmem %s1, 880
  %v1103 = vld [vmem:[%s1102] sm:$0xff]
  %1104 = xla_tuple %v1101, %v1103
  %1105 = xla_tuple %1104
  %v1106 = vmul.f32 %v1101, %v1103
  %1107 = xla_tuple %v1106
  %s1108 = scalar_lea.vmem %s2, 880
  %1109 = vst [vmem:[%s1108] sm:$0xff] %v1106
  %s1110 = scalar_lea.vmem %s0, 888
  %v1111 = vld [vmem:[%s1110] sm:$0xff]
  %s1112 = scalar_lea.vmem %s1, 888
  %v1113 = vld [vmem:[%s1112] sm:$0xff]
  %1114 = xla_tuple %v1111, %v1113
  %1115 = xla_tuple %1114
  %v1116 = vmul.f32 %v1111, %v1113
  %1117 = xla_tuple %v1116
  %s1118 = scalar_lea.vmem %s2, 888
  %1119 = vst [vmem:[%s1118] sm:$0xff] %v1116
  %s1120 = scalar_lea.vmem %s0, 896
  %v1121 = vld [vmem:[%s1120] sm:$0xff]
  %s1122 = scalar_lea.vmem %s1, 896
  %v1123 = vld [vmem:[%s1122] sm:$0xff]
  %1124 = xla_tuple %v1121, %v1123
  %1125 = xla_tuple %1124
  %v1126 = vmul.f32 %v1121, %v1123
  %1127 = xla_tuple %v1126
  %s1128 = scalar_lea.vmem %s2, 896
  %1129 = vst [vmem:[%s1128] sm:$0xff] %v1126
  %s1130 = scalar_lea.vmem %s0, 904
  %v1131 = vld [vmem:[%s1130] sm:$0xff]
  %s1132 = scalar_lea.vmem %s1, 904
  %v1133 = vld [vmem:[%s1132] sm:$0xff]
  %1134 = xla_tuple %v1131, %v1133
  %1135 = xla_tuple %1134
  %v1136 = vmul.f32 %v1131, %v1133
  %1137 = xla_tuple %v1136
  %s1138 = scalar_lea.vmem %s2, 904
  %1139 = vst [vmem:[%s1138] sm:$0xff] %v1136
  %s1140 = scalar_lea.vmem %s0, 912
  %v1141 = vld [vmem:[%s1140] sm:$0xff]
  %s1142 = scalar_lea.vmem %s1, 912
  %v1143 = vld [vmem:[%s1142] sm:$0xff]
  %1144 = xla_tuple %v1141, %v1143
  %1145 = xla_tuple %1144
  %v1146 = vmul.f32 %v1141, %v1143
  %1147 = xla_tuple %v1146
  %s1148 = scalar_lea.vmem %s2, 912
  %1149 = vst [vmem:[%s1148] sm:$0xff] %v1146
  %s1150 = scalar_lea.vmem %s0, 920
  %v1151 = vld [vmem:[%s1150] sm:$0xff]
  %s1152 = scalar_lea.vmem %s1, 920
  %v1153 = vld [vmem:[%s1152] sm:$0xff]
  %1154 = xla_tuple %v1151, %v1153
  %1155 = xla_tuple %1154
  %v1156 = vmul.f32 %v1151, %v1153
  %1157 = xla_tuple %v1156
  %s1158 = scalar_lea.vmem %s2, 920
  %1159 = vst [vmem:[%s1158] sm:$0xff] %v1156
  %s1160 = scalar_lea.vmem %s0, 928
  %v1161 = vld [vmem:[%s1160] sm:$0xff]
  %s1162 = scalar_lea.vmem %s1, 928
  %v1163 = vld [vmem:[%s1162] sm:$0xff]
  %1164 = xla_tuple %v1161, %v1163
  %1165 = xla_tuple %1164
  %v1166 = vmul.f32 %v1161, %v1163
  %1167 = xla_tuple %v1166
  %s1168 = scalar_lea.vmem %s2, 928
  %1169 = vst [vmem:[%s1168] sm:$0xff] %v1166
  %s1170 = scalar_lea.vmem %s0, 936
  %v1171 = vld [vmem:[%s1170] sm:$0xff]
  %s1172 = scalar_lea.vmem %s1, 936
  %v1173 = vld [vmem:[%s1172] sm:$0xff]
  %1174 = xla_tuple %v1171, %v1173
  %1175 = xla_tuple %1174
  %v1176 = vmul.f32 %v1171, %v1173
  %1177 = xla_tuple %v1176
  %s1178 = scalar_lea.vmem %s2, 936
  %1179 = vst [vmem:[%s1178] sm:$0xff] %v1176
  %s1180 = scalar_lea.vmem %s0, 944
  %v1181 = vld [vmem:[%s1180] sm:$0xff]
  %s1182 = scalar_lea.vmem %s1, 944
  %v1183 = vld [vmem:[%s1182] sm:$0xff]
  %1184 = xla_tuple %v1181, %v1183
  %1185 = xla_tuple %1184
  %v1186 = vmul.f32 %v1181, %v1183
  %1187 = xla_tuple %v1186
  %s1188 = scalar_lea.vmem %s2, 944
  %1189 = vst [vmem:[%s1188] sm:$0xff] %v1186
  %s1190 = scalar_lea.vmem %s0, 952
  %v1191 = vld [vmem:[%s1190] sm:$0xff]
  %s1192 = scalar_lea.vmem %s1, 952
  %v1193 = vld [vmem:[%s1192] sm:$0xff]
  %1194 = xla_tuple %v1191, %v1193
  %1195 = xla_tuple %1194
  %v1196 = vmul.f32 %v1191, %v1193
  %1197 = xla_tuple %v1196
  %s1198 = scalar_lea.vmem %s2, 952
  %1199 = vst [vmem:[%s1198] sm:$0xff] %v1196
  %s1200 = scalar_lea.vmem %s0, 960
  %v1201 = vld [vmem:[%s1200] sm:$0xff]
  %s1202 = scalar_lea.vmem %s1, 960
  %v1203 = vld [vmem:[%s1202] sm:$0xff]
  %1204 = xla_tuple %v1201, %v1203
  %1205 = xla_tuple %1204
  %v1206 = vmul.f32 %v1201, %v1203
  %1207 = xla_tuple %v1206
  %s1208 = scalar_lea.vmem %s2, 960
  %1209 = vst [vmem:[%s1208] sm:$0xff] %v1206
  %s1210 = scalar_lea.vmem %s0, 968
  %v1211 = vld [vmem:[%s1210] sm:$0xff]
  %s1212 = scalar_lea.vmem %s1, 968
  %v1213 = vld [vmem:[%s1212] sm:$0xff]
  %1214 = xla_tuple %v1211, %v1213
  %1215 = xla_tuple %1214
  %v1216 = vmul.f32 %v1211, %v1213
  %1217 = xla_tuple %v1216
  %s1218 = scalar_lea.vmem %s2, 968
  %1219 = vst [vmem:[%s1218] sm:$0xff] %v1216
  %s1220 = scalar_lea.vmem %s0, 976
  %v1221 = vld [vmem:[%s1220] sm:$0xff]
  %s1222 = scalar_lea.vmem %s1, 976
  %v1223 = vld [vmem:[%s1222] sm:$0xff]
  %1224 = xla_tuple %v1221, %v1223
  %1225 = xla_tuple %1224
  %v1226 = vmul.f32 %v1221, %v1223
  %1227 = xla_tuple %v1226
  %s1228 = scalar_lea.vmem %s2, 976
  %1229 = vst [vmem:[%s1228] sm:$0xff] %v1226
  %s1230 = scalar_lea.vmem %s0, 984
  %v1231 = vld [vmem:[%s1230] sm:$0xff]
  %s1232 = scalar_lea.vmem %s1, 984
  %v1233 = vld [vmem:[%s1232] sm:$0xff]
  %1234 = xla_tuple %v1231, %v1233
  %1235 = xla_tuple %1234
  %v1236 = vmul.f32 %v1231, %v1233
  %1237 = xla_tuple %v1236
  %s1238 = scalar_lea.vmem %s2, 984
  %1239 = vst [vmem:[%s1238] sm:$0xff] %v1236
  %s1240 = scalar_lea.vmem %s0, 992
  %v1241 = vld [vmem:[%s1240] sm:$0xff]
  %s1242 = scalar_lea.vmem %s1, 992
  %v1243 = vld [vmem:[%s1242] sm:$0xff]
  %1244 = xla_tuple %v1241, %v1243
  %1245 = xla_tuple %1244
  %v1246 = vmul.f32 %v1241, %v1243
  %1247 = xla_tuple %v1246
  %s1248 = scalar_lea.vmem %s2, 992
  %1249 = vst [vmem:[%s1248] sm:$0xff] %v1246
  %s1250 = scalar_lea.vmem %s0, 1000
  %v1251 = vld [vmem:[%s1250] sm:$0xff]
  %s1252 = scalar_lea.vmem %s1, 1000
  %v1253 = vld [vmem:[%s1252] sm:$0xff]
  %1254 = xla_tuple %v1251, %v1253
  %1255 = xla_tuple %1254
  %v1256 = vmul.f32 %v1251, %v1253
  %1257 = xla_tuple %v1256
  %s1258 = scalar_lea.vmem %s2, 1000
  %1259 = vst [vmem:[%s1258] sm:$0xff] %v1256
  %s1260 = scalar_lea.vmem %s0, 1008
  %v1261 = vld [vmem:[%s1260] sm:$0xff]
  %s1262 = scalar_lea.vmem %s1, 1008
  %v1263 = vld [vmem:[%s1262] sm:$0xff]
  %1264 = xla_tuple %v1261, %v1263
  %1265 = xla_tuple %1264
  %v1266 = vmul.f32 %v1261, %v1263
  %1267 = xla_tuple %v1266
  %s1268 = scalar_lea.vmem %s2, 1008
  %1269 = vst [vmem:[%s1268] sm:$0xff] %v1266
  %s1270 = scalar_lea.vmem %s0, 1016
  %v1271 = vld [vmem:[%s1270] sm:$0xff]
  %s1272 = scalar_lea.vmem %s1, 1016
  %v1273 = vld [vmem:[%s1272] sm:$0xff]
  %1274 = xla_tuple %v1271, %v1273
  %1275 = xla_tuple %1274
  %v1276 = vmul.f32 %v1271, %v1273
  %1277 = xla_tuple %v1276
  %s1278 = scalar_lea.vmem %s2, 1016
  %1279 = vst [vmem:[%s1278] sm:$0xff] %v1276
  %s1280 = scalar_lea.vmem %s0, 1024
  %v1281 = vld [vmem:[%s1280] sm:$0xff]
  %s1282 = scalar_lea.vmem %s1, 1024
  %v1283 = vld [vmem:[%s1282] sm:$0xff]
  %1284 = xla_tuple %v1281, %v1283
  %1285 = xla_tuple %1284
  %v1286 = vmul.f32 %v1281, %v1283
  %1287 = xla_tuple %v1286
  %s1288 = scalar_lea.vmem %s2, 1024
  %1289 = vst [vmem:[%s1288] sm:$0xff] %v1286
  %s1290 = scalar_lea.vmem %s0, 1032
  %v1291 = vld [vmem:[%s1290] sm:$0xff]
  %s1292 = scalar_lea.vmem %s1, 1032
  %v1293 = vld [vmem:[%s1292] sm:$0xff]
  %1294 = xla_tuple %v1291, %v1293
  %1295 = xla_tuple %1294
  %v1296 = vmul.f32 %v1291, %v1293
  %1297 = xla_tuple %v1296
  %s1298 = scalar_lea.vmem %s2, 1032
  %1299 = vst [vmem:[%s1298] sm:$0xff] %v1296
  %s1300 = scalar_lea.vmem %s0, 1040
  %v1301 = vld [vmem:[%s1300] sm:$0xff]
  %s1302 = scalar_lea.vmem %s1, 1040
  %v1303 = vld [vmem:[%s1302] sm:$0xff]
  %1304 = xla_tuple %v1301, %v1303
  %1305 = xla_tuple %1304
  %v1306 = vmul.f32 %v1301, %v1303
  %1307 = xla_tuple %v1306
  %s1308 = scalar_lea.vmem %s2, 1040
  %1309 = vst [vmem:[%s1308] sm:$0xff] %v1306
  %s1310 = scalar_lea.vmem %s0, 1048
  %v1311 = vld [vmem:[%s1310] sm:$0xff]
  %s1312 = scalar_lea.vmem %s1, 1048
  %v1313 = vld [vmem:[%s1312] sm:$0xff]
  %1314 = xla_tuple %v1311, %v1313
  %1315 = xla_tuple %1314
  %v1316 = vmul.f32 %v1311, %v1313
  %1317 = xla_tuple %v1316
  %s1318 = scalar_lea.vmem %s2, 1048
  %1319 = vst [vmem:[%s1318] sm:$0xff] %v1316
  %s1320 = scalar_lea.vmem %s0, 1056
  %v1321 = vld [vmem:[%s1320] sm:$0xff]
  %s1322 = scalar_lea.vmem %s1, 1056
  %v1323 = vld [vmem:[%s1322] sm:$0xff]
  %1324 = xla_tuple %v1321, %v1323
  %1325 = xla_tuple %1324
  %v1326 = vmul.f32 %v1321, %v1323
  %1327 = xla_tuple %v1326
  %s1328 = scalar_lea.vmem %s2, 1056
  %1329 = vst [vmem:[%s1328] sm:$0xff] %v1326
  %s1330 = scalar_lea.vmem %s0, 1064
  %v1331 = vld [vmem:[%s1330] sm:$0xff]
  %s1332 = scalar_lea.vmem %s1, 1064
  %v1333 = vld [vmem:[%s1332] sm:$0xff]
  %1334 = xla_tuple %v1331, %v1333
  %1335 = xla_tuple %1334
  %v1336 = vmul.f32 %v1331, %v1333
  %1337 = xla_tuple %v1336
  %s1338 = scalar_lea.vmem %s2, 1064
  %1339 = vst [vmem:[%s1338] sm:$0xff] %v1336
  %s1340 = scalar_lea.vmem %s0, 1072
  %v1341 = vld [vmem:[%s1340] sm:$0xff]
  %s1342 = scalar_lea.vmem %s1, 1072
  %v1343 = vld [vmem:[%s1342] sm:$0xff]
  %1344 = xla_tuple %v1341, %v1343
  %1345 = xla_tuple %1344
  %v1346 = vmul.f32 %v1341, %v1343
  %1347 = xla_tuple %v1346
  %s1348 = scalar_lea.vmem %s2, 1072
  %1349 = vst [vmem:[%s1348] sm:$0xff] %v1346
  %s1350 = scalar_lea.vmem %s0, 1080
  %v1351 = vld [vmem:[%s1350] sm:$0xff]
  %s1352 = scalar_lea.vmem %s1, 1080
  %v1353 = vld [vmem:[%s1352] sm:$0xff]
  %1354 = xla_tuple %v1351, %v1353
  %1355 = xla_tuple %1354
  %v1356 = vmul.f32 %v1351, %v1353
  %1357 = xla_tuple %v1356
  %s1358 = scalar_lea.vmem %s2, 1080
  %1359 = vst [vmem:[%s1358] sm:$0xff] %v1356
  %s1360 = scalar_lea.vmem %s0, 1088
  %v1361 = vld [vmem:[%s1360] sm:$0xff]
  %s1362 = scalar_lea.vmem %s1, 1088
  %v1363 = vld [vmem:[%s1362] sm:$0xff]
  %1364 = xla_tuple %v1361, %v1363
  %1365 = xla_tuple %1364
  %v1366 = vmul.f32 %v1361, %v1363
  %1367 = xla_tuple %v1366
  %s1368 = scalar_lea.vmem %s2, 1088
  %1369 = vst [vmem:[%s1368] sm:$0xff] %v1366
  %s1370 = scalar_lea.vmem %s0, 1096
  %v1371 = vld [vmem:[%s1370] sm:$0xff]
  %s1372 = scalar_lea.vmem %s1, 1096
  %v1373 = vld [vmem:[%s1372] sm:$0xff]
  %1374 = xla_tuple %v1371, %v1373
  %1375 = xla_tuple %1374
  %v1376 = vmul.f32 %v1371, %v1373
  %1377 = xla_tuple %v1376
  %s1378 = scalar_lea.vmem %s2, 1096
  %1379 = vst [vmem:[%s1378] sm:$0xff] %v1376
  %s1380 = scalar_lea.vmem %s0, 1104
  %v1381 = vld [vmem:[%s1380] sm:$0xff]
  %s1382 = scalar_lea.vmem %s1, 1104
  %v1383 = vld [vmem:[%s1382] sm:$0xff]
  %1384 = xla_tuple %v1381, %v1383
  %1385 = xla_tuple %1384
  %v1386 = vmul.f32 %v1381, %v1383
  %1387 = xla_tuple %v1386
  %s1388 = scalar_lea.vmem %s2, 1104
  %1389 = vst [vmem:[%s1388] sm:$0xff] %v1386
  %s1390 = scalar_lea.vmem %s0, 1112
  %v1391 = vld [vmem:[%s1390] sm:$0xff]
  %s1392 = scalar_lea.vmem %s1, 1112
  %v1393 = vld [vmem:[%s1392] sm:$0xff]
  %1394 = xla_tuple %v1391, %v1393
  %1395 = xla_tuple %1394
  %v1396 = vmul.f32 %v1391, %v1393
  %1397 = xla_tuple %v1396
  %s1398 = scalar_lea.vmem %s2, 1112
  %1399 = vst [vmem:[%s1398] sm:$0xff] %v1396
  %s1400 = scalar_lea.vmem %s0, 1120
  %v1401 = vld [vmem:[%s1400] sm:$0xff]
  %s1402 = scalar_lea.vmem %s1, 1120
  %v1403 = vld [vmem:[%s1402] sm:$0xff]
  %1404 = xla_tuple %v1401, %v1403
  %1405 = xla_tuple %1404
  %v1406 = vmul.f32 %v1401, %v1403
  %1407 = xla_tuple %v1406
  %s1408 = scalar_lea.vmem %s2, 1120
  %1409 = vst [vmem:[%s1408] sm:$0xff] %v1406
  %s1410 = scalar_lea.vmem %s0, 1128
  %v1411 = vld [vmem:[%s1410] sm:$0xff]
  %s1412 = scalar_lea.vmem %s1, 1128
  %v1413 = vld [vmem:[%s1412] sm:$0xff]
  %1414 = xla_tuple %v1411, %v1413
  %1415 = xla_tuple %1414
  %v1416 = vmul.f32 %v1411, %v1413
  %1417 = xla_tuple %v1416
  %s1418 = scalar_lea.vmem %s2, 1128
  %1419 = vst [vmem:[%s1418] sm:$0xff] %v1416
  %s1420 = scalar_lea.vmem %s0, 1136
  %v1421 = vld [vmem:[%s1420] sm:$0xff]
  %s1422 = scalar_lea.vmem %s1, 1136
  %v1423 = vld [vmem:[%s1422] sm:$0xff]
  %1424 = xla_tuple %v1421, %v1423
  %1425 = xla_tuple %1424
  %v1426 = vmul.f32 %v1421, %v1423
  %1427 = xla_tuple %v1426
  %s1428 = scalar_lea.vmem %s2, 1136
  %1429 = vst [vmem:[%s1428] sm:$0xff] %v1426
  %s1430 = scalar_lea.vmem %s0, 1144
  %v1431 = vld [vmem:[%s1430] sm:$0xff]
  %s1432 = scalar_lea.vmem %s1, 1144
  %v1433 = vld [vmem:[%s1432] sm:$0xff]
  %1434 = xla_tuple %v1431, %v1433
  %1435 = xla_tuple %1434
  %v1436 = vmul.f32 %v1431, %v1433
  %1437 = xla_tuple %v1436
  %s1438 = scalar_lea.vmem %s2, 1144
  %1439 = vst [vmem:[%s1438] sm:$0xff] %v1436
  %s1440 = scalar_lea.vmem %s0, 1152
  %v1441 = vld [vmem:[%s1440] sm:$0xff]
  %s1442 = scalar_lea.vmem %s1, 1152
  %v1443 = vld [vmem:[%s1442] sm:$0xff]
  %1444 = xla_tuple %v1441, %v1443
  %1445 = xla_tuple %1444
  %v1446 = vmul.f32 %v1441, %v1443
  %1447 = xla_tuple %v1446
  %s1448 = scalar_lea.vmem %s2, 1152
  %1449 = vst [vmem:[%s1448] sm:$0xff] %v1446
  %s1450 = scalar_lea.vmem %s0, 1160
  %v1451 = vld [vmem:[%s1450] sm:$0xff]
  %s1452 = scalar_lea.vmem %s1, 1160
  %v1453 = vld [vmem:[%s1452] sm:$0xff]
  %1454 = xla_tuple %v1451, %v1453
  %1455 = xla_tuple %1454
  %v1456 = vmul.f32 %v1451, %v1453
  %1457 = xla_tuple %v1456
  %s1458 = scalar_lea.vmem %s2, 1160
  %1459 = vst [vmem:[%s1458] sm:$0xff] %v1456
  %s1460 = scalar_lea.vmem %s0, 1168
  %v1461 = vld [vmem:[%s1460] sm:$0xff]
  %s1462 = scalar_lea.vmem %s1, 1168
  %v1463 = vld [vmem:[%s1462] sm:$0xff]
  %1464 = xla_tuple %v1461, %v1463
  %1465 = xla_tuple %1464
  %v1466 = vmul.f32 %v1461, %v1463
  %1467 = xla_tuple %v1466
  %s1468 = scalar_lea.vmem %s2, 1168
  %1469 = vst [vmem:[%s1468] sm:$0xff] %v1466
  %s1470 = scalar_lea.vmem %s0, 1176
  %v1471 = vld [vmem:[%s1470] sm:$0xff]
  %s1472 = scalar_lea.vmem %s1, 1176
  %v1473 = vld [vmem:[%s1472] sm:$0xff]
  %1474 = xla_tuple %v1471, %v1473
  %1475 = xla_tuple %1474
  %v1476 = vmul.f32 %v1471, %v1473
  %1477 = xla_tuple %v1476
  %s1478 = scalar_lea.vmem %s2, 1176
  %1479 = vst [vmem:[%s1478] sm:$0xff] %v1476
  %s1480 = scalar_lea.vmem %s0, 1184
  %v1481 = vld [vmem:[%s1480] sm:$0xff]
  %s1482 = scalar_lea.vmem %s1, 1184
  %v1483 = vld [vmem:[%s1482] sm:$0xff]
  %1484 = xla_tuple %v1481, %v1483
  %1485 = xla_tuple %1484
  %v1486 = vmul.f32 %v1481, %v1483
  %1487 = xla_tuple %v1486
  %s1488 = scalar_lea.vmem %s2, 1184
  %1489 = vst [vmem:[%s1488] sm:$0xff] %v1486
  %s1490 = scalar_lea.vmem %s0, 1192
  %v1491 = vld [vmem:[%s1490] sm:$0xff]
  %s1492 = scalar_lea.vmem %s1, 1192
  %v1493 = vld [vmem:[%s1492] sm:$0xff]
  %1494 = xla_tuple %v1491, %v1493
  %1495 = xla_tuple %1494
  %v1496 = vmul.f32 %v1491, %v1493
  %1497 = xla_tuple %v1496
  %s1498 = scalar_lea.vmem %s2, 1192
  %1499 = vst [vmem:[%s1498] sm:$0xff] %v1496
  %s1500 = scalar_lea.vmem %s0, 1200
  %v1501 = vld [vmem:[%s1500] sm:$0xff]
  %s1502 = scalar_lea.vmem %s1, 1200
  %v1503 = vld [vmem:[%s1502] sm:$0xff]
  %1504 = xla_tuple %v1501, %v1503
  %1505 = xla_tuple %1504
  %v1506 = vmul.f32 %v1501, %v1503
  %1507 = xla_tuple %v1506
  %s1508 = scalar_lea.vmem %s2, 1200
  %1509 = vst [vmem:[%s1508] sm:$0xff] %v1506
  %s1510 = scalar_lea.vmem %s0, 1208
  %v1511 = vld [vmem:[%s1510] sm:$0xff]
  %s1512 = scalar_lea.vmem %s1, 1208
  %v1513 = vld [vmem:[%s1512] sm:$0xff]
  %1514 = xla_tuple %v1511, %v1513
  %1515 = xla_tuple %1514
  %v1516 = vmul.f32 %v1511, %v1513
  %1517 = xla_tuple %v1516
  %s1518 = scalar_lea.vmem %s2, 1208
  %1519 = vst [vmem:[%s1518] sm:$0xff] %v1516
  %s1520 = scalar_lea.vmem %s0, 1216
  %v1521 = vld [vmem:[%s1520] sm:$0xff]
  %s1522 = scalar_lea.vmem %s1, 1216
  %v1523 = vld [vmem:[%s1522] sm:$0xff]
  %1524 = xla_tuple %v1521, %v1523
  %1525 = xla_tuple %1524
  %v1526 = vmul.f32 %v1521, %v1523
  %1527 = xla_tuple %v1526
  %s1528 = scalar_lea.vmem %s2, 1216
  %1529 = vst [vmem:[%s1528] sm:$0xff] %v1526
  %s1530 = scalar_lea.vmem %s0, 1224
  %v1531 = vld [vmem:[%s1530] sm:$0xff]
  %s1532 = scalar_lea.vmem %s1, 1224
  %v1533 = vld [vmem:[%s1532] sm:$0xff]
  %1534 = xla_tuple %v1531, %v1533
  %1535 = xla_tuple %1534
  %v1536 = vmul.f32 %v1531, %v1533
  %1537 = xla_tuple %v1536
  %s1538 = scalar_lea.vmem %s2, 1224
  %1539 = vst [vmem:[%s1538] sm:$0xff] %v1536
  %s1540 = scalar_lea.vmem %s0, 1232
  %v1541 = vld [vmem:[%s1540] sm:$0xff]
  %s1542 = scalar_lea.vmem %s1, 1232
  %v1543 = vld [vmem:[%s1542] sm:$0xff]
  %1544 = xla_tuple %v1541, %v1543
  %1545 = xla_tuple %1544
  %v1546 = vmul.f32 %v1541, %v1543
  %1547 = xla_tuple %v1546
  %s1548 = scalar_lea.vmem %s2, 1232
  %1549 = vst [vmem:[%s1548] sm:$0xff] %v1546
  %s1550 = scalar_lea.vmem %s0, 1240
  %v1551 = vld [vmem:[%s1550] sm:$0xff]
  %s1552 = scalar_lea.vmem %s1, 1240
  %v1553 = vld [vmem:[%s1552] sm:$0xff]
  %1554 = xla_tuple %v1551, %v1553
  %1555 = xla_tuple %1554
  %v1556 = vmul.f32 %v1551, %v1553
  %1557 = xla_tuple %v1556
  %s1558 = scalar_lea.vmem %s2, 1240
  %1559 = vst [vmem:[%s1558] sm:$0xff] %v1556
  %s1560 = scalar_lea.vmem %s0, 1248
  %v1561 = vld [vmem:[%s1560] sm:$0xff]
  %s1562 = scalar_lea.vmem %s1, 1248
  %v1563 = vld [vmem:[%s1562] sm:$0xff]
  %1564 = xla_tuple %v1561, %v1563
  %1565 = xla_tuple %1564
  %v1566 = vmul.f32 %v1561, %v1563
  %1567 = xla_tuple %v1566
  %s1568 = scalar_lea.vmem %s2, 1248
  %1569 = vst [vmem:[%s1568] sm:$0xff] %v1566
  %s1570 = scalar_lea.vmem %s0, 1256
  %v1571 = vld [vmem:[%s1570] sm:$0xff]
  %s1572 = scalar_lea.vmem %s1, 1256
  %v1573 = vld [vmem:[%s1572] sm:$0xff]
  %1574 = xla_tuple %v1571, %v1573
  %1575 = xla_tuple %1574
  %v1576 = vmul.f32 %v1571, %v1573
  %1577 = xla_tuple %v1576
  %s1578 = scalar_lea.vmem %s2, 1256
  %1579 = vst [vmem:[%s1578] sm:$0xff] %v1576
  %s1580 = scalar_lea.vmem %s0, 1264
  %v1581 = vld [vmem:[%s1580] sm:$0xff]
  %s1582 = scalar_lea.vmem %s1, 1264
  %v1583 = vld [vmem:[%s1582] sm:$0xff]
  %1584 = xla_tuple %v1581, %v1583
  %1585 = xla_tuple %1584
  %v1586 = vmul.f32 %v1581, %v1583
  %1587 = xla_tuple %v1586
  %s1588 = scalar_lea.vmem %s2, 1264
  %1589 = vst [vmem:[%s1588] sm:$0xff] %v1586
  %s1590 = scalar_lea.vmem %s0, 1272
  %v1591 = vld [vmem:[%s1590] sm:$0xff]
  %s1592 = scalar_lea.vmem %s1, 1272
  %v1593 = vld [vmem:[%s1592] sm:$0xff]
  %1594 = xla_tuple %v1591, %v1593
  %1595 = xla_tuple %1594
  %v1596 = vmul.f32 %v1591, %v1593
  %1597 = xla_tuple %v1596
  %s1598 = scalar_lea.vmem %s2, 1272
  %1599 = vst [vmem:[%s1598] sm:$0xff] %v1596
  %s1600 = scalar_lea.vmem %s0, 1280
  %v1601 = vld [vmem:[%s1600] sm:$0xff]
  %s1602 = scalar_lea.vmem %s1, 1280
  %v1603 = vld [vmem:[%s1602] sm:$0xff]
  %1604 = xla_tuple %v1601, %v1603
  %1605 = xla_tuple %1604
  %v1606 = vmul.f32 %v1601, %v1603
  %1607 = xla_tuple %v1606
  %s1608 = scalar_lea.vmem %s2, 1280
  %1609 = vst [vmem:[%s1608] sm:$0xff] %v1606
  %s1610 = scalar_lea.vmem %s0, 1288
  %v1611 = vld [vmem:[%s1610] sm:$0xff]
  %s1612 = scalar_lea.vmem %s1, 1288
  %v1613 = vld [vmem:[%s1612] sm:$0xff]
  %1614 = xla_tuple %v1611, %v1613
  %1615 = xla_tuple %1614
  %v1616 = vmul.f32 %v1611, %v1613
  %1617 = xla_tuple %v1616
  %s1618 = scalar_lea.vmem %s2, 1288
  %1619 = vst [vmem:[%s1618] sm:$0xff] %v1616
  %s1620 = scalar_lea.vmem %s0, 1296
  %v1621 = vld [vmem:[%s1620] sm:$0xff]
  %s1622 = scalar_lea.vmem %s1, 1296
  %v1623 = vld [vmem:[%s1622] sm:$0xff]
  %1624 = xla_tuple %v1621, %v1623
  %1625 = xla_tuple %1624
  %v1626 = vmul.f32 %v1621, %v1623
  %1627 = xla_tuple %v1626
  %s1628 = scalar_lea.vmem %s2, 1296
  %1629 = vst [vmem:[%s1628] sm:$0xff] %v1626
  %s1630 = scalar_lea.vmem %s0, 1304
  %v1631 = vld [vmem:[%s1630] sm:$0xff]
  %s1632 = scalar_lea.vmem %s1, 1304
  %v1633 = vld [vmem:[%s1632] sm:$0xff]
  %1634 = xla_tuple %v1631, %v1633
  %1635 = xla_tuple %1634
  %v1636 = vmul.f32 %v1631, %v1633
  %1637 = xla_tuple %v1636
  %s1638 = scalar_lea.vmem %s2, 1304
  %1639 = vst [vmem:[%s1638] sm:$0xff] %v1636
  %s1640 = scalar_lea.vmem %s0, 1312
  %v1641 = vld [vmem:[%s1640] sm:$0xff]
  %s1642 = scalar_lea.vmem %s1, 1312
  %v1643 = vld [vmem:[%s1642] sm:$0xff]
  %1644 = xla_tuple %v1641, %v1643
  %1645 = xla_tuple %1644
  %v1646 = vmul.f32 %v1641, %v1643
  %1647 = xla_tuple %v1646
  %s1648 = scalar_lea.vmem %s2, 1312
  %1649 = vst [vmem:[%s1648] sm:$0xff] %v1646
  %s1650 = scalar_lea.vmem %s0, 1320
  %v1651 = vld [vmem:[%s1650] sm:$0xff]
  %s1652 = scalar_lea.vmem %s1, 1320
  %v1653 = vld [vmem:[%s1652] sm:$0xff]
  %1654 = xla_tuple %v1651, %v1653
  %1655 = xla_tuple %1654
  %v1656 = vmul.f32 %v1651, %v1653
  %1657 = xla_tuple %v1656
  %s1658 = scalar_lea.vmem %s2, 1320
  %1659 = vst [vmem:[%s1658] sm:$0xff] %v1656
  %s1660 = scalar_lea.vmem %s0, 1328
  %v1661 = vld [vmem:[%s1660] sm:$0xff]
  %s1662 = scalar_lea.vmem %s1, 1328
  %v1663 = vld [vmem:[%s1662] sm:$0xff]
  %1664 = xla_tuple %v1661, %v1663
  %1665 = xla_tuple %1664
  %v1666 = vmul.f32 %v1661, %v1663
  %1667 = xla_tuple %v1666
  %s1668 = scalar_lea.vmem %s2, 1328
  %1669 = vst [vmem:[%s1668] sm:$0xff] %v1666
  %s1670 = scalar_lea.vmem %s0, 1336
  %v1671 = vld [vmem:[%s1670] sm:$0xff]
  %s1672 = scalar_lea.vmem %s1, 1336
  %v1673 = vld [vmem:[%s1672] sm:$0xff]
  %1674 = xla_tuple %v1671, %v1673
  %1675 = xla_tuple %1674
  %v1676 = vmul.f32 %v1671, %v1673
  %1677 = xla_tuple %v1676
  %s1678 = scalar_lea.vmem %s2, 1336
  %1679 = vst [vmem:[%s1678] sm:$0xff] %v1676
  %s1680 = scalar_lea.vmem %s0, 1344
  %v1681 = vld [vmem:[%s1680] sm:$0xff]
  %s1682 = scalar_lea.vmem %s1, 1344
  %v1683 = vld [vmem:[%s1682] sm:$0xff]
  %1684 = xla_tuple %v1681, %v1683
  %1685 = xla_tuple %1684
  %v1686 = vmul.f32 %v1681, %v1683
  %1687 = xla_tuple %v1686
  %s1688 = scalar_lea.vmem %s2, 1344
  %1689 = vst [vmem:[%s1688] sm:$0xff] %v1686
  %s1690 = scalar_lea.vmem %s0, 1352
  %v1691 = vld [vmem:[%s1690] sm:$0xff]
  %s1692 = scalar_lea.vmem %s1, 1352
  %v1693 = vld [vmem:[%s1692] sm:$0xff]
  %1694 = xla_tuple %v1691, %v1693
  %1695 = xla_tuple %1694
  %v1696 = vmul.f32 %v1691, %v1693
  %1697 = xla_tuple %v1696
  %s1698 = scalar_lea.vmem %s2, 1352
  %1699 = vst [vmem:[%s1698] sm:$0xff] %v1696
  %s1700 = scalar_lea.vmem %s0, 1360
  %v1701 = vld [vmem:[%s1700] sm:$0xff]
  %s1702 = scalar_lea.vmem %s1, 1360
  %v1703 = vld [vmem:[%s1702] sm:$0xff]
  %1704 = xla_tuple %v1701, %v1703
  %1705 = xla_tuple %1704
  %v1706 = vmul.f32 %v1701, %v1703
  %1707 = xla_tuple %v1706
  %s1708 = scalar_lea.vmem %s2, 1360
  %1709 = vst [vmem:[%s1708] sm:$0xff] %v1706
  %s1710 = scalar_lea.vmem %s0, 1368
  %v1711 = vld [vmem:[%s1710] sm:$0xff]
  %s1712 = scalar_lea.vmem %s1, 1368
  %v1713 = vld [vmem:[%s1712] sm:$0xff]
  %1714 = xla_tuple %v1711, %v1713
  %1715 = xla_tuple %1714
  %v1716 = vmul.f32 %v1711, %v1713
  %1717 = xla_tuple %v1716
  %s1718 = scalar_lea.vmem %s2, 1368
  %1719 = vst [vmem:[%s1718] sm:$0xff] %v1716
  %s1720 = scalar_lea.vmem %s0, 1376
  %v1721 = vld [vmem:[%s1720] sm:$0xff]
  %s1722 = scalar_lea.vmem %s1, 1376
  %v1723 = vld [vmem:[%s1722] sm:$0xff]
  %1724 = xla_tuple %v1721, %v1723
  %1725 = xla_tuple %1724
  %v1726 = vmul.f32 %v1721, %v1723
  %1727 = xla_tuple %v1726
  %s1728 = scalar_lea.vmem %s2, 1376
  %1729 = vst [vmem:[%s1728] sm:$0xff] %v1726
  %s1730 = scalar_lea.vmem %s0, 1384
  %v1731 = vld [vmem:[%s1730] sm:$0xff]
  %s1732 = scalar_lea.vmem %s1, 1384
  %v1733 = vld [vmem:[%s1732] sm:$0xff]
  %1734 = xla_tuple %v1731, %v1733
  %1735 = xla_tuple %1734
  %v1736 = vmul.f32 %v1731, %v1733
  %1737 = xla_tuple %v1736
  %s1738 = scalar_lea.vmem %s2, 1384
  %1739 = vst [vmem:[%s1738] sm:$0xff] %v1736
  %s1740 = scalar_lea.vmem %s0, 1392
  %v1741 = vld [vmem:[%s1740] sm:$0xff]
  %s1742 = scalar_lea.vmem %s1, 1392
  %v1743 = vld [vmem:[%s1742] sm:$0xff]
  %1744 = xla_tuple %v1741, %v1743
  %1745 = xla_tuple %1744
  %v1746 = vmul.f32 %v1741, %v1743
  %1747 = xla_tuple %v1746
  %s1748 = scalar_lea.vmem %s2, 1392
  %1749 = vst [vmem:[%s1748] sm:$0xff] %v1746
  %s1750 = scalar_lea.vmem %s0, 1400
  %v1751 = vld [vmem:[%s1750] sm:$0xff]
  %s1752 = scalar_lea.vmem %s1, 1400
  %v1753 = vld [vmem:[%s1752] sm:$0xff]
  %1754 = xla_tuple %v1751, %v1753
  %1755 = xla_tuple %1754
  %v1756 = vmul.f32 %v1751, %v1753
  %1757 = xla_tuple %v1756
  %s1758 = scalar_lea.vmem %s2, 1400
  %1759 = vst [vmem:[%s1758] sm:$0xff] %v1756
  %s1760 = scalar_lea.vmem %s0, 1408
  %v1761 = vld [vmem:[%s1760] sm:$0xff]
  %s1762 = scalar_lea.vmem %s1, 1408
  %v1763 = vld [vmem:[%s1762] sm:$0xff]
  %1764 = xla_tuple %v1761, %v1763
  %1765 = xla_tuple %1764
  %v1766 = vmul.f32 %v1761, %v1763
  %1767 = xla_tuple %v1766
  %s1768 = scalar_lea.vmem %s2, 1408
  %1769 = vst [vmem:[%s1768] sm:$0xff] %v1766
  %s1770 = scalar_lea.vmem %s0, 1416
  %v1771 = vld [vmem:[%s1770] sm:$0xff]
  %s1772 = scalar_lea.vmem %s1, 1416
  %v1773 = vld [vmem:[%s1772] sm:$0xff]
  %1774 = xla_tuple %v1771, %v1773
  %1775 = xla_tuple %1774
  %v1776 = vmul.f32 %v1771, %v1773
  %1777 = xla_tuple %v1776
  %s1778 = scalar_lea.vmem %s2, 1416
  %1779 = vst [vmem:[%s1778] sm:$0xff] %v1776
  %s1780 = scalar_lea.vmem %s0, 1424
  %v1781 = vld [vmem:[%s1780] sm:$0xff]
  %s1782 = scalar_lea.vmem %s1, 1424
  %v1783 = vld [vmem:[%s1782] sm:$0xff]
  %1784 = xla_tuple %v1781, %v1783
  %1785 = xla_tuple %1784
  %v1786 = vmul.f32 %v1781, %v1783
  %1787 = xla_tuple %v1786
  %s1788 = scalar_lea.vmem %s2, 1424
  %1789 = vst [vmem:[%s1788] sm:$0xff] %v1786
  %s1790 = scalar_lea.vmem %s0, 1432
  %v1791 = vld [vmem:[%s1790] sm:$0xff]
  %s1792 = scalar_lea.vmem %s1, 1432
  %v1793 = vld [vmem:[%s1792] sm:$0xff]
  %1794 = xla_tuple %v1791, %v1793
  %1795 = xla_tuple %1794
  %v1796 = vmul.f32 %v1791, %v1793
  %1797 = xla_tuple %v1796
  %s1798 = scalar_lea.vmem %s2, 1432
  %1799 = vst [vmem:[%s1798] sm:$0xff] %v1796
  %s1800 = scalar_lea.vmem %s0, 1440
  %v1801 = vld [vmem:[%s1800] sm:$0xff]
  %s1802 = scalar_lea.vmem %s1, 1440
  %v1803 = vld [vmem:[%s1802] sm:$0xff]
  %1804 = xla_tuple %v1801, %v1803
  %1805 = xla_tuple %1804
  %v1806 = vmul.f32 %v1801, %v1803
  %1807 = xla_tuple %v1806
  %s1808 = scalar_lea.vmem %s2, 1440
  %1809 = vst [vmem:[%s1808] sm:$0xff] %v1806
  %s1810 = scalar_lea.vmem %s0, 1448
  %v1811 = vld [vmem:[%s1810] sm:$0xff]
  %s1812 = scalar_lea.vmem %s1, 1448
  %v1813 = vld [vmem:[%s1812] sm:$0xff]
  %1814 = xla_tuple %v1811, %v1813
  %1815 = xla_tuple %1814
  %v1816 = vmul.f32 %v1811, %v1813
  %1817 = xla_tuple %v1816
  %s1818 = scalar_lea.vmem %s2, 1448
  %1819 = vst [vmem:[%s1818] sm:$0xff] %v1816
  %s1820 = scalar_lea.vmem %s0, 1456
  %v1821 = vld [vmem:[%s1820] sm:$0xff]
  %s1822 = scalar_lea.vmem %s1, 1456
  %v1823 = vld [vmem:[%s1822] sm:$0xff]
  %1824 = xla_tuple %v1821, %v1823
  %1825 = xla_tuple %1824
  %v1826 = vmul.f32 %v1821, %v1823
  %1827 = xla_tuple %v1826
  %s1828 = scalar_lea.vmem %s2, 1456
  %1829 = vst [vmem:[%s1828] sm:$0xff] %v1826
  %s1830 = scalar_lea.vmem %s0, 1464
  %v1831 = vld [vmem:[%s1830] sm:$0xff]
  %s1832 = scalar_lea.vmem %s1, 1464
  %v1833 = vld [vmem:[%s1832] sm:$0xff]
  %1834 = xla_tuple %v1831, %v1833
  %1835 = xla_tuple %1834
  %v1836 = vmul.f32 %v1831, %v1833
  %1837 = xla_tuple %v1836
  %s1838 = scalar_lea.vmem %s2, 1464
  %1839 = vst [vmem:[%s1838] sm:$0xff] %v1836
  %s1840 = scalar_lea.vmem %s0, 1472
  %v1841 = vld [vmem:[%s1840] sm:$0xff]
  %s1842 = scalar_lea.vmem %s1, 1472
  %v1843 = vld [vmem:[%s1842] sm:$0xff]
  %1844 = xla_tuple %v1841, %v1843
  %1845 = xla_tuple %1844
  %v1846 = vmul.f32 %v1841, %v1843
  %1847 = xla_tuple %v1846
  %s1848 = scalar_lea.vmem %s2, 1472
  %1849 = vst [vmem:[%s1848] sm:$0xff] %v1846
  %s1850 = scalar_lea.vmem %s0, 1480
  %v1851 = vld [vmem:[%s1850] sm:$0xff]
  %s1852 = scalar_lea.vmem %s1, 1480
  %v1853 = vld [vmem:[%s1852] sm:$0xff]
  %1854 = xla_tuple %v1851, %v1853
  %1855 = xla_tuple %1854
  %v1856 = vmul.f32 %v1851, %v1853
  %1857 = xla_tuple %v1856
  %s1858 = scalar_lea.vmem %s2, 1480
  %1859 = vst [vmem:[%s1858] sm:$0xff] %v1856
  %s1860 = scalar_lea.vmem %s0, 1488
  %v1861 = vld [vmem:[%s1860] sm:$0xff]
  %s1862 = scalar_lea.vmem %s1, 1488
  %v1863 = vld [vmem:[%s1862] sm:$0xff]
  %1864 = xla_tuple %v1861, %v1863
  %1865 = xla_tuple %1864
  %v1866 = vmul.f32 %v1861, %v1863
  %1867 = xla_tuple %v1866
  %s1868 = scalar_lea.vmem %s2, 1488
  %1869 = vst [vmem:[%s1868] sm:$0xff] %v1866
  %s1870 = scalar_lea.vmem %s0, 1496
  %v1871 = vld [vmem:[%s1870] sm:$0xff]
  %s1872 = scalar_lea.vmem %s1, 1496
  %v1873 = vld [vmem:[%s1872] sm:$0xff]
  %1874 = xla_tuple %v1871, %v1873
  %1875 = xla_tuple %1874
  %v1876 = vmul.f32 %v1871, %v1873
  %1877 = xla_tuple %v1876
  %s1878 = scalar_lea.vmem %s2, 1496
  %1879 = vst [vmem:[%s1878] sm:$0xff] %v1876
  %s1880 = scalar_lea.vmem %s0, 1504
  %v1881 = vld [vmem:[%s1880] sm:$0xff]
  %s1882 = scalar_lea.vmem %s1, 1504
  %v1883 = vld [vmem:[%s1882] sm:$0xff]
  %1884 = xla_tuple %v1881, %v1883
  %1885 = xla_tuple %1884
  %v1886 = vmul.f32 %v1881, %v1883
  %1887 = xla_tuple %v1886
  %s1888 = scalar_lea.vmem %s2, 1504
  %1889 = vst [vmem:[%s1888] sm:$0xff] %v1886
  %s1890 = scalar_lea.vmem %s0, 1512
  %v1891 = vld [vmem:[%s1890] sm:$0xff]
  %s1892 = scalar_lea.vmem %s1, 1512
  %v1893 = vld [vmem:[%s1892] sm:$0xff]
  %1894 = xla_tuple %v1891, %v1893
  %1895 = xla_tuple %1894
  %v1896 = vmul.f32 %v1891, %v1893
  %1897 = xla_tuple %v1896
  %s1898 = scalar_lea.vmem %s2, 1512
  %1899 = vst [vmem:[%s1898] sm:$0xff] %v1896
  %s1900 = scalar_lea.vmem %s0, 1520
  %v1901 = vld [vmem:[%s1900] sm:$0xff]
  %s1902 = scalar_lea.vmem %s1, 1520
  %v1903 = vld [vmem:[%s1902] sm:$0xff]
  %1904 = xla_tuple %v1901, %v1903
  %1905 = xla_tuple %1904
  %v1906 = vmul.f32 %v1901, %v1903
  %1907 = xla_tuple %v1906
  %s1908 = scalar_lea.vmem %s2, 1520
  %1909 = vst [vmem:[%s1908] sm:$0xff] %v1906
  %s1910 = scalar_lea.vmem %s0, 1528
  %v1911 = vld [vmem:[%s1910] sm:$0xff]
  %s1912 = scalar_lea.vmem %s1, 1528
  %v1913 = vld [vmem:[%s1912] sm:$0xff]
  %1914 = xla_tuple %v1911, %v1913
  %1915 = xla_tuple %1914
  %v1916 = vmul.f32 %v1911, %v1913
  %1917 = xla_tuple %v1916
  %s1918 = scalar_lea.vmem %s2, 1528
  %1919 = vst [vmem:[%s1918] sm:$0xff] %v1916
  %s1920 = scalar_lea.vmem %s0, 1536
  %v1921 = vld [vmem:[%s1920] sm:$0xff]
  %s1922 = scalar_lea.vmem %s1, 1536
  %v1923 = vld [vmem:[%s1922] sm:$0xff]
  %1924 = xla_tuple %v1921, %v1923
  %1925 = xla_tuple %1924
  %v1926 = vmul.f32 %v1921, %v1923
  %1927 = xla_tuple %v1926
  %s1928 = scalar_lea.vmem %s2, 1536
  %1929 = vst [vmem:[%s1928] sm:$0xff] %v1926
  %s1930 = scalar_lea.vmem %s0, 1544
  %v1931 = vld [vmem:[%s1930] sm:$0xff]
  %s1932 = scalar_lea.vmem %s1, 1544
  %v1933 = vld [vmem:[%s1932] sm:$0xff]
  %1934 = xla_tuple %v1931, %v1933
  %1935 = xla_tuple %1934
  %v1936 = vmul.f32 %v1931, %v1933
  %1937 = xla_tuple %v1936
  %s1938 = scalar_lea.vmem %s2, 1544
  %1939 = vst [vmem:[%s1938] sm:$0xff] %v1936
  %s1940 = scalar_lea.vmem %s0, 1552
  %v1941 = vld [vmem:[%s1940] sm:$0xff]
  %s1942 = scalar_lea.vmem %s1, 1552
  %v1943 = vld [vmem:[%s1942] sm:$0xff]
  %1944 = xla_tuple %v1941, %v1943
  %1945 = xla_tuple %1944
  %v1946 = vmul.f32 %v1941, %v1943
  %1947 = xla_tuple %v1946
  %s1948 = scalar_lea.vmem %s2, 1552
  %1949 = vst [vmem:[%s1948] sm:$0xff] %v1946

// kernel: mul.0
$region0: #{mul.0}
  #allocation0 [shape = 's32[1]{0}', space=sflag, size = 0x4, scoped, tag = 'scoped memory for mul.0']
  %s0 = inlined_call_operand.vmem [shape: f32[34944], index: 0, kind: input, shape index: {}]
  %s1 = inlined_call_operand.vmem [shape: f32[34944], index: 1, kind: input, shape index: {}]
  %s2 = inlined_call_operand.vmem [shape: f32[34944], index: 2, kind: output, shape index: {}]
  %v3 = vld [vmem:[%s0] sm:$0xff]
  %v4 = vld [vmem:[%s1] sm:$0xff]
  %5 = xla_tuple %v3, %v4
  %6 = xla_tuple %5
  %v7 = vmul.f32 %v3, %v4
  %8 = xla_tuple %v7
  %9 = vst [vmem:[%s2] sm:$0xff] %v7
  %s10 = scalar_lea.vmem %s0, 8
  %v11 = vld [vmem:[%s10] sm:$0xff]
  %s12 = scalar_lea.vmem %s1, 8
  %v13 = vld [vmem:[%s12] sm:$0xff]
  %14 = xla_tuple %v11, %v13
  %15 = xla_tuple %14
  %v16 = vmul.f32 %v11, %v13
  %17 = xla_tuple %v16
  %s18 = scalar_lea.vmem %s2, 8
  %19 = vst [vmem:[%s18] sm:$0xff] %v16
  %s20 = scalar_lea.vmem %s0, 16
  %v21 = vld [vmem:[%s20] sm:$0xff]
  %s22 = scalar_lea.vmem %s1, 16
  %v23 = vld [vmem:[%s22] sm:$0xff]
  %24 = xla_tuple %v21, %v23
  %25 = xla_tuple %24
  %v26 = vmul.f32 %v21, %v23
  %27 = xla_tuple %v26
  %s28 = scalar_lea.vmem %s2, 16
  %29 = vst [vmem:[%s28] sm:$0xff] %v26
  %s30 = scalar_lea.vmem %s0, 24
  %v31 = vld [vmem:[%s30] sm:$0xff]
  %s32 = scalar_lea.vmem %s1, 24
  %v33 = vld [vmem:[%s32] sm:$0xff]
  %34 = xla_tuple %v31, %v33
  %35 = xla_tuple %34
  %v36 = vmul.f32 %v31, %v33
  %37 = xla_tuple %v36
  %s38 = scalar_lea.vmem %s2, 24
  %39 = vst [vmem:[%s38] sm:$0xff] %v36
  %s40 = scalar_lea.vmem %s0, 32
  %v41 = vld [vmem:[%s40] sm:$0xff]
  %s42 = scalar_lea.vmem %s1, 32
  %v43 = vld [vmem:[%s42] sm:$0xff]
  %44 = xla_tuple %v41, %v43
  %45 = xla_tuple %44
  %v46 = vmul.f32 %v41, %v43
  %47 = xla_tuple %v46
  %s48 = scalar_lea.vmem %s2, 32
  %49 = vst [vmem:[%s48] sm:$0xff] %v46
  %s50 = scalar_lea.vmem %s0, 40
  %v51 = vld [vmem:[%s50] sm:$0xff]
  %s52 = scalar_lea.vmem %s1, 40
  %v53 = vld [vmem:[%s52] sm:$0xff]
  %54 = xla_tuple %v51, %v53
  %55 = xla_tuple %54
  %v56 = vmul.f32 %v51, %v53
  %57 = xla_tuple %v56
  %s58 = scalar_lea.vmem %s2, 40
  %59 = vst [vmem:[%s58] sm:$0xff] %v56
  %s60 = scalar_lea.vmem %s0, 48
  %v61 = vld [vmem:[%s60] sm:$0xff]
  %s62 = scalar_lea.vmem %s1, 48
  %v63 = vld [vmem:[%s62] sm:$0xff]
  %64 = xla_tuple %v61, %v63
  %65 = xla_tuple %64
  %v66 = vmul.f32 %v61, %v63
  %67 = xla_tuple %v66
  %s68 = scalar_lea.vmem %s2, 48
  %69 = vst [vmem:[%s68] sm:$0xff] %v66
  %s70 = scalar_lea.vmem %s0, 56
  %v71 = vld [vmem:[%s70] sm:$0xff]
  %s72 = scalar_lea.vmem %s1, 56
  %v73 = vld [vmem:[%s72] sm:$0xff]
  %74 = xla_tuple %v71, %v73
  %75 = xla_tuple %74
  %v76 = vmul.f32 %v71, %v73
  %77 = xla_tuple %v76
  %s78 = scalar_lea.vmem %s2, 56
  %79 = vst [vmem:[%s78] sm:$0xff] %v76
  %s80 = scalar_lea.vmem %s0, 64
  %v81 = vld [vmem:[%s80] sm:$0xff]
  %s82 = scalar_lea.vmem %s1, 64
  %v83 = vld [vmem:[%s82] sm:$0xff]
  %84 = xla_tuple %v81, %v83
  %85 = xla_tuple %84
  %v86 = vmul.f32 %v81, %v83
  %87 = xla_tuple %v86
  %s88 = scalar_lea.vmem %s2, 64
  %89 = vst [vmem:[%s88] sm:$0xff] %v86
  %s90 = scalar_lea.vmem %s0, 72
  %v91 = vld [vmem:[%s90] sm:$0xff]
  %s92 = scalar_lea.vmem %s1, 72
  %v93 = vld [vmem:[%s92] sm:$0xff]
  %94 = xla_tuple %v91, %v93
  %95 = xla_tuple %94
  %v96 = vmul.f32 %v91, %v93
  %97 = xla_tuple %v96
  %s98 = scalar_lea.vmem %s2, 72
  %99 = vst [vmem:[%s98] sm:$0xff] %v96
  %s100 = scalar_lea.vmem %s0, 80
  %v101 = vld [vmem:[%s100] sm:$0xff]
  %s102 = scalar_lea.vmem %s1, 80
  %v103 = vld [vmem:[%s102] sm:$0xff]
  %104 = xla_tuple %v101, %v103
  %105 = xla_tuple %104
  %v106 = vmul.f32 %v101, %v103
  %107 = xla_tuple %v106
  %s108 = scalar_lea.vmem %s2, 80
  %109 = vst [vmem:[%s108] sm:$0xff] %v106
  %s110 = scalar_lea.vmem %s0, 88
  %v111 = vld [vmem:[%s110] sm:$0xff]
  %s112 = scalar_lea.vmem %s1, 88
  %v113 = vld [vmem:[%s112] sm:$0xff]
  %114 = xla_tuple %v111, %v113
  %115 = xla_tuple %114
  %v116 = vmul.f32 %v111, %v113
  %117 = xla_tuple %v116
  %s118 = scalar_lea.vmem %s2, 88
  %119 = vst [vmem:[%s118] sm:$0xff] %v116
  %s120 = scalar_lea.vmem %s0, 96
  %v121 = vld [vmem:[%s120] sm:$0xff]
  %s122 = scalar_lea.vmem %s1, 96
  %v123 = vld [vmem:[%s122] sm:$0xff]
  %124 = xla_tuple %v121, %v123
  %125 = xla_tuple %124
  %v126 = vmul.f32 %v121, %v123
  %127 = xla_tuple %v126
  %s128 = scalar_lea.vmem %s2, 96
  %129 = vst [vmem:[%s128] sm:$0xff] %v126
  %s130 = scalar_lea.vmem %s0, 104
  %v131 = vld [vmem:[%s130] sm:$0xff]
  %s132 = scalar_lea.vmem %s1, 104
  %v133 = vld [vmem:[%s132] sm:$0xff]
  %134 = xla_tuple %v131, %v133
  %135 = xla_tuple %134
  %v136 = vmul.f32 %v131, %v133
  %137 = xla_tuple %v136
  %s138 = scalar_lea.vmem %s2, 104
  %139 = vst [vmem:[%s138] sm:$0xff] %v136
  %s140 = scalar_lea.vmem %s0, 112
  %v141 = vld [vmem:[%s140] sm:$0xff]
  %s142 = scalar_lea.vmem %s1, 112
  %v143 = vld [vmem:[%s142] sm:$0xff]
  %144 = xla_tuple %v141, %v143
  %145 = xla_tuple %144
  %v146 = vmul.f32 %v141, %v143
  %147 = xla_tuple %v146
  %s148 = scalar_lea.vmem %s2, 112
  %149 = vst [vmem:[%s148] sm:$0xff] %v146
  %s150 = scalar_lea.vmem %s0, 120
  %v151 = vld [vmem:[%s150] sm:$0xff]
  %s152 = scalar_lea.vmem %s1, 120
  %v153 = vld [vmem:[%s152] sm:$0xff]
  %154 = xla_tuple %v151, %v153
  %155 = xla_tuple %154
  %v156 = vmul.f32 %v151, %v153
  %157 = xla_tuple %v156
  %s158 = scalar_lea.vmem %s2, 120
  %159 = vst [vmem:[%s158] sm:$0xff] %v156
  %s160 = scalar_lea.vmem %s0, 128
  %v161 = vld [vmem:[%s160] sm:$0xff]
  %s162 = scalar_lea.vmem %s1, 128
  %v163 = vld [vmem:[%s162] sm:$0xff]
  %164 = xla_tuple %v161, %v163
  %165 = xla_tuple %164
  %v166 = vmul.f32 %v161, %v163
  %167 = xla_tuple %v166
  %s168 = scalar_lea.vmem %s2, 128
  %169 = vst [vmem:[%s168] sm:$0xff] %v166
  %s170 = scalar_lea.vmem %s0, 136
  %v171 = vld [vmem:[%s170] sm:$0xff]
  %s172 = scalar_lea.vmem %s1, 136
  %v173 = vld [vmem:[%s172] sm:$0xff]
  %174 = xla_tuple %v171, %v173
  %175 = xla_tuple %174
  %v176 = vmul.f32 %v171, %v173
  %177 = xla_tuple %v176
  %s178 = scalar_lea.vmem %s2, 136
  %179 = vst [vmem:[%s178] sm:$0xff] %v176
  %s180 = scalar_lea.vmem %s0, 144
  %v181 = vld [vmem:[%s180] sm:$0xff]
  %s182 = scalar_lea.vmem %s1, 144
  %v183 = vld [vmem:[%s182] sm:$0xff]
  %184 = xla_tuple %v181, %v183
  %185 = xla_tuple %184
  %v186 = vmul.f32 %v181, %v183
  %187 = xla_tuple %v186
  %s188 = scalar_lea.vmem %s2, 144
  %189 = vst [vmem:[%s188] sm:$0xff] %v186
  %s190 = scalar_lea.vmem %s0, 152
  %v191 = vld [vmem:[%s190] sm:$0xff]
  %s192 = scalar_lea.vmem %s1, 152
  %v193 = vld [vmem:[%s192] sm:$0xff]
  %194 = xla_tuple %v191, %v193
  %195 = xla_tuple %194
  %v196 = vmul.f32 %v191, %v193
  %197 = xla_tuple %v196
  %s198 = scalar_lea.vmem %s2, 152
  %199 = vst [vmem:[%s198] sm:$0xff] %v196
  %s200 = scalar_lea.vmem %s0, 160
  %v201 = vld [vmem:[%s200] sm:$0xff]
  %s202 = scalar_lea.vmem %s1, 160
  %v203 = vld [vmem:[%s202] sm:$0xff]
  %204 = xla_tuple %v201, %v203
  %205 = xla_tuple %204
  %v206 = vmul.f32 %v201, %v203
  %207 = xla_tuple %v206
  %s208 = scalar_lea.vmem %s2, 160
  %209 = vst [vmem:[%s208] sm:$0xff] %v206
  %s210 = scalar_lea.vmem %s0, 168
  %v211 = vld [vmem:[%s210] sm:$0xff]
  %s212 = scalar_lea.vmem %s1, 168
  %v213 = vld [vmem:[%s212] sm:$0xff]
  %214 = xla_tuple %v211, %v213
  %215 = xla_tuple %214
  %v216 = vmul.f32 %v211, %v213
  %217 = xla_tuple %v216
  %s218 = scalar_lea.vmem %s2, 168
  %219 = vst [vmem:[%s218] sm:$0xff] %v216
  %s220 = scalar_lea.vmem %s0, 176
  %v221 = vld [vmem:[%s220] sm:$0xff]
  %s222 = scalar_lea.vmem %s1, 176
  %v223 = vld [vmem:[%s222] sm:$0xff]
  %224 = xla_tuple %v221, %v223
  %225 = xla_tuple %224
  %v226 = vmul.f32 %v221, %v223
  %227 = xla_tuple %v226
  %s228 = scalar_lea.vmem %s2, 176
  %229 = vst [vmem:[%s228] sm:$0xff] %v226
  %s230 = scalar_lea.vmem %s0, 184
  %v231 = vld [vmem:[%s230] sm:$0xff]
  %s232 = scalar_lea.vmem %s1, 184
  %v233 = vld [vmem:[%s232] sm:$0xff]
  %234 = xla_tuple %v231, %v233
  %235 = xla_tuple %234
  %v236 = vmul.f32 %v231, %v233
  %237 = xla_tuple %v236
  %s238 = scalar_lea.vmem %s2, 184
  %239 = vst [vmem:[%s238] sm:$0xff] %v236
  %s240 = scalar_lea.vmem %s0, 192
  %v241 = vld [vmem:[%s240] sm:$0xff]
  %s242 = scalar_lea.vmem %s1, 192
  %v243 = vld [vmem:[%s242] sm:$0xff]
  %244 = xla_tuple %v241, %v243
  %245 = xla_tuple %244
  %v246 = vmul.f32 %v241, %v243
  %247 = xla_tuple %v246
  %s248 = scalar_lea.vmem %s2, 192
  %249 = vst [vmem:[%s248] sm:$0xff] %v246
  %s250 = scalar_lea.vmem %s0, 200
  %v251 = vld [vmem:[%s250] sm:$0xff]
  %s252 = scalar_lea.vmem %s1, 200
  %v253 = vld [vmem:[%s252] sm:$0xff]
  %254 = xla_tuple %v251, %v253
  %255 = xla_tuple %254
  %v256 = vmul.f32 %v251, %v253
  %257 = xla_tuple %v256
  %s258 = scalar_lea.vmem %s2, 200
  %259 = vst [vmem:[%s258] sm:$0xff] %v256
  %s260 = scalar_lea.vmem %s0, 208
  %v261 = vld [vmem:[%s260] sm:$0xff]
  %s262 = scalar_lea.vmem %s1, 208
  %v263 = vld [vmem:[%s262] sm:$0xff]
  %264 = xla_tuple %v261, %v263
  %265 = xla_tuple %264
  %v266 = vmul.f32 %v261, %v263
  %267 = xla_tuple %v266
  %s268 = scalar_lea.vmem %s2, 208
  %269 = vst [vmem:[%s268] sm:$0xff] %v266
  %s270 = scalar_lea.vmem %s0, 216
  %v271 = vld [vmem:[%s270] sm:$0xff]
  %s272 = scalar_lea.vmem %s1, 216
  %v273 = vld [vmem:[%s272] sm:$0xff]
  %274 = xla_tuple %v271, %v273
  %275 = xla_tuple %274
  %v276 = vmul.f32 %v271, %v273
  %277 = xla_tuple %v276
  %s278 = scalar_lea.vmem %s2, 216
  %279 = vst [vmem:[%s278] sm:$0xff] %v276
  %s280 = scalar_lea.vmem %s0, 224
  %v281 = vld [vmem:[%s280] sm:$0xff]
  %s282 = scalar_lea.vmem %s1, 224
  %v283 = vld [vmem:[%s282] sm:$0xff]
  %284 = xla_tuple %v281, %v283
  %285 = xla_tuple %284
  %v286 = vmul.f32 %v281, %v283
  %287 = xla_tuple %v286
  %s288 = scalar_lea.vmem %s2, 224
  %289 = vst [vmem:[%s288] sm:$0xff] %v286
  %s290 = scalar_lea.vmem %s0, 232
  %v291 = vld [vmem:[%s290] sm:$0xff]
  %s292 = scalar_lea.vmem %s1, 232
  %v293 = vld [vmem:[%s292] sm:$0xff]
  %294 = xla_tuple %v291, %v293
  %295 = xla_tuple %294
  %v296 = vmul.f32 %v291, %v293
  %297 = xla_tuple %v296
  %s298 = scalar_lea.vmem %s2, 232
  %299 = vst [vmem:[%s298] sm:$0xff] %v296
  %s300 = scalar_lea.vmem %s0, 240
  %v301 = vld [vmem:[%s300] sm:$0xff]
  %s302 = scalar_lea.vmem %s1, 240
  %v303 = vld [vmem:[%s302] sm:$0xff]
  %304 = xla_tuple %v301, %v303
  %305 = xla_tuple %304
  %v306 = vmul.f32 %v301, %v303
  %307 = xla_tuple %v306
  %s308 = scalar_lea.vmem %s2, 240
  %309 = vst [vmem:[%s308] sm:$0xff] %v306
  %s310 = scalar_lea.vmem %s0, 248
  %v311 = vld [vmem:[%s310] sm:$0xff]
  %s312 = scalar_lea.vmem %s1, 248
  %v313 = vld [vmem:[%s312] sm:$0xff]
  %314 = xla_tuple %v311, %v313
  %315 = xla_tuple %314
  %v316 = vmul.f32 %v311, %v313
  %317 = xla_tuple %v316
  %s318 = scalar_lea.vmem %s2, 248
  %319 = vst [vmem:[%s318] sm:$0xff] %v316
  %s320 = scalar_lea.vmem %s0, 256
  %v321 = vld [vmem:[%s320] sm:$0xff]
  %s322 = scalar_lea.vmem %s1, 256
  %v323 = vld [vmem:[%s322] sm:$0xff]
  %324 = xla_tuple %v321, %v323
  %325 = xla_tuple %324
  %v326 = vmul.f32 %v321, %v323
  %327 = xla_tuple %v326
  %s328 = scalar_lea.vmem %s2, 256
  %329 = vst [vmem:[%s328] sm:$0xff] %v326
  %s330 = scalar_lea.vmem %s0, 264
  %v331 = vld [vmem:[%s330] sm:$0xff]
  %s332 = scalar_lea.vmem %s1, 264
  %v333 = vld [vmem:[%s332] sm:$0xff]
  %334 = xla_tuple %v331, %v333
  %335 = xla_tuple %334
  %v336 = vmul.f32 %v331, %v333
  %337 = xla_tuple %v336
  %s338 = scalar_lea.vmem %s2, 264
  %339 = vst [vmem:[%s338] sm:$0xff] %v336
  %s340 = scalar_lea.vmem %s0, 272
  %v341 = vld [vmem:[%s340] sm:$0xff]
  %s342 = scalar_lea.vmem %s1, 272
  %v343 = vld [vmem:[%s342] sm:$0xff]
  %344 = xla_tuple %v341, %v343
  %345 = xla_tuple %344
  %v346 = vmul.f32 %v341, %v343
  %347 = xla_tuple %v346
  %s348 = scalar_lea.vmem %s2, 272
  %349 = vst [vmem:[%s348] sm:$0xff] %v346

// kernel: tile.13
$region0: #{tile.13}
  #allocation0 [shape = 's32[1]{0}', space=sflag, size = 0x4, scoped, tag = 'scoped memory for tile.13']
  %s0 = inlined_call_operand.vmem [shape: f32[16], index: 0, kind: input, shape index: {}]
  %s1 = inlined_call_operand.vmem [shape: f32[13,16], index: 1, kind: output, shape index: {}]
  // Predicated region
  $region2: #{tile.13} parent=0 // pred_check
    _
  $region3: #{tile.13} parent=0 // pred_check_branch
    %3 = sbr.rel (0) target = $region5
  $region4: #{tile.13} parent=0 // pred_region
    _
  $region5: #{tile.13} parent=0 // pred_fallthru
    _
  %v4 = vld [vmem:[%s0] ss:$0 sm:$0xff]
  %5 = vst [vmem:[%s1] sm:$0xff] %v4
  %s6 = scalar_lea.vmem %s1, 8
  %7 = vst [vmem:[%s6] sm:$0xff] %v4

// kernel: tile.14
$region0: #{tile.14}
  %s0 = inlined_call_operand.vmem [shape: f32[13,16], index: 0, kind: input, shape index: {}]
  %s1 = inlined_call_operand.vmem [shape: f32[1,208], index: 1, kind: output, shape index: {}]
  $region1: #{tile.14} parent=0
    #allocation0 [shape = 'u8[8192]{0}', space=vmem, size = 0x2000, scoped, tag = 'scoped mem for output reshape']
    %s2 = smov 3
    %v3 = vld [vmem:[%s0] ss:$8 sm:%s2]
    %vm4 = vcmask 130048
    %5 = vst.msk [vmem:[#allocation0] ss:$8 sm:$0x3] %vm4, %v3
    %s6 = scalar_lea.vmem %s0, 7
    %v7 = vld [vmem:[%s6] sm:$0x1]
    %8 = vrot.lane.b32.xlu0 %v7, 112
    %v9 = vpop.permute.xlu0 %8
    %vm10 = vcmask 1048448
    %11 = vst.msk [vmem:[#allocation0] sm:$0x1] %vm10, %v9
    %s12 = scalar_lea.vmem %s0, 6
    %v13 = vld [vmem:[%s12] sm:$0x1]
    %14 = vrot.lane.b32.xlu0 %v13, 96
    %v15 = vpop.permute.xlu0 %14
    %vm16 = vcmask 917248
    %17 = vst.msk [vmem:[#allocation0] sm:$0x1] %vm16, %v15
    %s18 = scalar_lea.vmem %s0, 5
    %v19 = vld [vmem:[%s18] sm:$0x1]
    %20 = vrot.lane.b32.xlu0 %v19, 80
    %v21 = vpop.permute.xlu0 %20
    %vm22 = vcmask 786048
    %23 = vst.msk [vmem:[#allocation0] sm:$0x1] %vm22, %v21
    %s24 = scalar_lea.vmem %s0, 4
    %s25 = smov 3
    %v26 = vld [vmem:[%s24] ss:$8 sm:%s25]
    %27 = vrot.lane.b32.xlu0 %v26, 64
    %v28 = vpop.permute.xlu0 %27
    %vm29 = vcmask 654848
    %30 = vst.msk [vmem:[#allocation0] ss:$8 sm:$0x3] %vm29, %v28
    %s31 = scalar_lea.vmem %s0, 3
    %s32 = smov 3
    %v33 = vld [vmem:[%s31] ss:$8 sm:%s32]
    %34 = vrot.lane.b32.xlu0 %v33, 48
    %v35 = vpop.permute.xlu0 %34
    %vm36 = vcmask 523648
    %37 = vst.msk [vmem:[#allocation0] ss:$8 sm:$0x3] %vm36, %v35
    %s38 = scalar_lea.vmem %s0, 2
    %s39 = smov 3
    %v40 = vld [vmem:[%s38] ss:$8 sm:%s39]
    %41 = vrot.lane.b32.xlu0 %v40, 32
    %v42 = vpop.permute.xlu0 %41
    %vm43 = vcmask 392448
    %44 = vst.msk [vmem:[#allocation0] ss:$8 sm:$0x3] %vm43, %v42
    %s45 = scalar_lea.vmem %s0, 1
    %s46 = smov 3
    %v47 = vld [vmem:[%s45] ss:$8 sm:%s46]
    %48 = vrot.lane.b32.xlu0 %v47, 16
    %v49 = vpop.permute.xlu0 %48
    %vm50 = vcmask 261248
    %51 = vst.msk [vmem:[#allocation0] ss:$8 sm:$0x3] %vm50, %v49
    %s53 = sshllo.u32 0, 1
    %v55 = vld [vmem:[#allocation0] sm:%s53]
    %s56 = sshllo.u32 0, 1
    %57 = vst [vmem:[%s1] sm:%s56] %v55
    %s58 = scalar_lea.vmem [#allocation0], 8
    %v59 = vld [vmem:[%s58] sm:%s53]
    %s60 = sshllo.u32 0, 1
    %s61 = scalar_lea.vmem %s1, 1
    %62 = vst [vmem:[%s61] sm:%s60] %v59

// kernel: tile.18
$region0: #{tile.18}
  #allocation0 [shape = 's32[1]{0}', space=sflag, size = 0x4, scoped, tag = 'scoped memory for tile.18']
  %s0 = inlined_call_operand.vmem [shape: f32[32], index: 0, kind: input, shape index: {}]
  %s1 = inlined_call_operand.vmem [shape: f32[5,32], index: 1, kind: output, shape index: {}]
  // Predicated region
  $region2: #{tile.18} parent=0 // pred_check
    _
  $region3: #{tile.18} parent=0 // pred_check_branch
    %3 = sbr.rel (0) target = $region5
  $region4: #{tile.18} parent=0 // pred_region
    _
  $region5: #{tile.18} parent=0 // pred_fallthru
    _
  %v4 = vld [vmem:[%s0] ss:$0 sm:$0xff]
  %5 = vst [vmem:[%s1] sm:$0xff] %v4

// kernel: tile.19
$region0: #{tile.19}
  %s0 = inlined_call_operand.vmem [shape: f32[5,32], index: 0, kind: input, shape index: {}]
  %s1 = inlined_call_operand.vmem [shape: f32[1,160], index: 1, kind: output, shape index: {}]
  $region1: #{tile.19} parent=0
    #allocation0 [shape = 'u8[8192]{0}', space=vmem, size = 0x2000, scoped, tag = 'scoped mem for output reshape']
    %s2 = smov 3
    %v3 = vld [vmem:[%s0] ss:$4 sm:%s2]
    %vm4 = vcmask 261120
    %5 = vst.msk [vmem:[#allocation0] ss:$8 sm:$0x3] %vm4, %v3
    %s6 = scalar_lea.vmem %s0, 3
    %v7 = vld [vmem:[%s6] sm:$0x1]
    %8 = vrot.lane.b32.xlu0 %v7, 96
    %v9 = vpop.permute.xlu0 %8
    %vm10 = vcmask 1048320
    %11 = vst.msk [vmem:[#allocation0] sm:$0x1] %vm10, %v9
    %s12 = scalar_lea.vmem %s0, 2
    %v13 = vld [vmem:[%s12] sm:$0x1]
    %14 = vrot.lane.b32.xlu0 %v13, 64
    %v15 = vpop.permute.xlu0 %14
    %vm16 = vcmask 785920
    %17 = vst.msk [vmem:[#allocation0] sm:$0x1] %vm16, %v15
    %s18 = scalar_lea.vmem %s0, 1
    %v19 = vld [vmem:[%s18] sm:$0x1]
    %20 = vrot.lane.b32.xlu0 %v19, 32
    %v21 = vpop.permute.xlu0 %20
    %vm22 = vcmask 523520
    %23 = vst.msk [vmem:[#allocation0] sm:$0x1] %vm22, %v21
    %s25 = sshllo.u32 0, 1
    %v27 = vld [vmem:[#allocation0] sm:%s25]
    %s28 = sshllo.u32 0, 1
    %29 = vst [vmem:[%s1] sm:%s28] %v27
    %s30 = scalar_lea.vmem [#allocation0], 8
    %v31 = vld [vmem:[%s30] sm:%s25]
    %s32 = sshllo.u32 0, 1
    %s33 = scalar_lea.vmem %s1, 1
    %34 = vst [vmem:[%s33] sm:%s32] %v31

// kernel: net_forward.1
$region0: #{net_forward.1}
  #allocation0 [shape = 'u32[]', space=smem, size = 0x4, offset = 0x4, fixed_abs, tag = 'smem constant byte address 0x4 - core index']
  #allocation1 [shape = 'u32[144,128]{1,0:T(1,128)}', space=vmem, size = 0x12000, scoped, tag = 'internal scratch']
  %s0 = inlined_call_operand.vmem [shape: f32[2,28,28], index: 0, kind: input, shape index: {}]
  %s1 = inlined_call_operand.vmem [shape: f32[6,28,208], index: 1, kind: input, shape index: {}]
  %s2 = inlined_call_operand.vmem [shape: f32[1,208], index: 2, kind: input, shape index: {}]
  %s3 = inlined_call_operand.vmem [shape: f32[2,13,26], index: 3, kind: input, shape index: {}]
  %s4 = inlined_call_operand.vmem [shape: f32[6,208,160], index: 4, kind: input, shape index: {}]
  %s5 = inlined_call_operand.vmem [shape: f32[1,160], index: 5, kind: input, shape index: {}]
  %s6 = inlined_call_operand.vmem [shape: f32[2,5,11], index: 6, kind: input, shape index: {}]
  %s7 = inlined_call_operand.vmem [shape: f32[5,160,200], index: 7, kind: input, shape index: {}]
  %s8 = inlined_call_operand.vmem [shape: f32[1,200], index: 8, kind: input, shape index: {}]
  %s9 = inlined_call_operand.vmem [shape: f32[200,10], index: 9, kind: input, shape index: {}]
  %s10 = inlined_call_operand.vmem [shape: f32[1,10], index: 10, kind: input, shape index: {}]
  %s11 = inlined_call_operand.hbm [shape: f32[2,1,10], index: 11, kind: output, shape index: {}]
  %s12 = sld [smem:[#allocation0]]
  $region77: #{net_forward.1} parent=0
    _
  %s14 = ssub.s32 1, %s12
  %s15 = scalar_select 0, %s14, %s12
  $region1: #{net_forward.1} parent=0
    #allocation2 [shape = 'u8[1024]{0}', space=vmem, size = 0x400, scoped, tag = 'output window, operand 0']
    #allocation3 [shape = 's32[2]{0}', space=sflag, size = 0x8, scoped, tag = 'scoped memory for net_forward.1']
    %16 = vsyncpa [#allocation3], 0
    %s17 = scalar_lea.sflag [#allocation3], 1
    %18 = vsyncpa %s17, 0
    loop: start=0, step=1, limit=4
    $region2: #{net_forward.1} parent=1 // loop_pre_header
      _
    $region3: #{net_forward.1} parent=1 // loop_header
      %s20 = sphi 0, %s24
      %p21 = scmp.ge.s32.totalorder %s20, 4
      %s30 = sphi 0, %s32
      %s33 = sphi 0, %s30
      %s34 = sphi 0, %s33
      %s50 = sphi 0, %s34
      %s54 = sphi 0, %s54
      %s56 = sphi 0, %s54
      %s57 = sphi 0, %s56
      %s71 = sphi 0, %s57
      %s75 = sphi 0, %s75
      %s77 = sphi 0, %s75
      %s78 = sphi 0, %s77
      %s92 = sphi 0, %s78
      %s96 = sphi 0, %s96
      %s98 = sphi 0, %s96
      %s99 = sphi 0, %s98
      %s113 = sphi 0, %s99
      %s117 = sphi 0, %s117
      %s119 = sphi 0, %s117
      %s120 = sphi 0, %s119
      %s134 = sphi 0, %s120
      %s138 = sphi 0, %s138
      %s140 = sphi 0, %s138
      %s141 = sphi 0, %s140
      %s155 = sphi 0, %s141
      %s159 = sphi 0, %s159
      %s161 = sphi 0, %s159
      %s162 = sphi 0, %s161
      %s176 = sphi 0, %s162
      %s180 = sphi 0, %s180
      %s182 = sphi 0, %s180
      %s183 = sphi 0, %s182
      %s197 = sphi 0, %s183
      %s201 = sphi 0, %s201
      %s203 = sphi 0, %s201
      %s204 = sphi 0, %s203
      %s218 = sphi 0, %s204
      %s222 = sphi 0, %s222
      %s224 = sphi 0, %s222
      %s225 = sphi 0, %s224
      %s239 = sphi 0, %s225
      %s243 = sphi 0, %s243
      %s245 = sphi 0, %s243
      %s246 = sphi 0, %s245
      %s260 = sphi 0, %s246
      %s266 = sphi 0, %s268
      %s269 = sphi 0, %s266
      %s270 = sphi 0, %s269
      %s286 = sphi 0, %s270
    $region4: #{net_forward.1} parent=1 // loop_header_branch
      %23 = sbr.rel (%p21) target = $region8
    $region5: #{net_forward.1} parent=1 // loop_body
      %s25 = ssub.s32 %s20, 1
      %s26 = ssub.s32 %s20, 2
      %s27 = sadd.s32 %s20, 1
      %s28 = ssub.s32 %s20, %s27
      %p29 = scmp.eq.s32.totalorder %s28, 0
      %s31 = sadd.s32 %s30, 1
      %s32 = scalar_select %p29, %s30, %s31
      %p35 = pneg %p29
      %p36 = scmp.eq.s32.totalorder %s20, 1
      %p37 = por %p35, %p36
      %p38 = scmp.ne.s32.totalorder %s30, %s33
      %p39 = scmp.eq.s32.totalorder %s20, 0
      %p40 = por %p38, %p39
      %p41 = scmp.ne.s32.totalorder %s30, %s33
      %p42 = scmp.eq.s32.totalorder %s25, 1
      %p43 = por %p41, %p42
      %p44 = scmp.ne.s32.totalorder %s33, %s34
      %p45 = scmp.eq.s32.totalorder %s25, 0
      %p46 = por %p44, %p45
      %p47 = scmp.ne.s32.totalorder %s33, %s34
      %p48 = scmp.eq.s32.totalorder %s26, 1
      %p49 = por %p47, %p48
      %p51 = scmp.ne.s32.totalorder %s34, %s50
      %p52 = scmp.eq.s32.totalorder %s26, 0
      %p53 = por %p51, %p52
      %s55 = sadd.s32 %s54, 1
      %p58 = scmp.eq.s32.totalorder %s20, 1
      %p59 = scmp.ne.s32.totalorder %s54, %s56
      %p60 = scmp.eq.s32.totalorder %s20, 0
      %p61 = por %p59, %p60
      %p62 = scmp.ne.s32.totalorder %s54, %s56
      %p63 = scmp.eq.s32.totalorder %s25, 1
      %p64 = por %p62, %p63
      %p65 = scmp.ne.s32.totalorder %s56, %s57
      %p66 = scmp.eq.s32.totalorder %s25, 0
      %p67 = por %p65, %p66
      %p68 = scmp.ne.s32.totalorder %s56, %s57
      %p69 = scmp.eq.s32.totalorder %s26, 1
      %p70 = por %p68, %p69
      %p72 = scmp.ne.s32.totalorder %s57, %s71
      %p73 = scmp.eq.s32.totalorder %s26, 0
      %p74 = por %p72, %p73
      %s76 = sadd.s32 %s75, 1
      %p79 = scmp.eq.s32.totalorder %s20, 1
      %p80 = scmp.ne.s32.totalorder %s75, %s77
      %p81 = scmp.eq.s32.totalorder %s20, 0
      %p82 = por %p80, %p81
      %p83 = scmp.ne.s32.totalorder %s75, %s77
      %p84 = scmp.eq.s32.totalorder %s25, 1
      %p85 = por %p83, %p84
      %p86 = scmp.ne.s32.totalorder %s77, %s78
      %p87 = scmp.eq.s32.totalorder %s25, 0
      %p88 = por %p86, %p87
      %p89 = scmp.ne.s32.totalorder %s77, %s78
      %p90 = scmp.eq.s32.totalorder %s26, 1
      %p91 = por %p89, %p90
      %p93 = scmp.ne.s32.totalorder %s78, %s92
      %p94 = scmp.eq.s32.totalorder %s26, 0
      %p95 = por %p93, %p94
      %s97 = sadd.s32 %s96, 1
      %p100 = scmp.eq.s32.totalorder %s20, 1
      %p101 = scmp.ne.s32.totalorder %s96, %s98
      %p102 = scmp.eq.s32.totalorder %s20, 0
      %p103 = por %p101, %p102
      %p104 = scmp.ne.s32.totalorder %s96, %s98
      %p105 = scmp.eq.s32.totalorder %s25, 1
      %p106 = por %p104, %p105
      %p107 = scmp.ne.s32.totalorder %s98, %s99
      %p108 = scmp.eq.s32.totalorder %s25, 0
      %p109 = por %p107, %p108
      %p110 = scmp.ne.s32.totalorder %s98, %s99
      %p111 = scmp.eq.s32.totalorder %s26, 1
      %p112 = por %p110, %p111
      %p114 = scmp.ne.s32.totalorder %s99, %s113
      %p115 = scmp.eq.s32.totalorder %s26, 0
      %p116 = por %p114, %p115
      %s118 = sadd.s32 %s117, 1
      %p121 = scmp.eq.s32.totalorder %s20, 1
      %p122 = scmp.ne.s32.totalorder %s117, %s119
      %p123 = scmp.eq.s32.totalorder %s20, 0
      %p124 = por %p122, %p123
      %p125 = scmp.ne.s32.totalorder %s117, %s119
      %p126 = scmp.eq.s32.totalorder %s25, 1
      %p127 = por %p125, %p126
      %p128 = scmp.ne.s32.totalorder %s119, %s120
      %p129 = scmp.eq.s32.totalorder %s25, 0
      %p130 = por %p128, %p129
      %p131 = scmp.ne.s32.totalorder %s119, %s120
      %p132 = scmp.eq.s32.totalorder %s26, 1
      %p133 = por %p131, %p132
      %p135 = scmp.ne.s32.totalorder %s120, %s134
      %p136 = scmp.eq.s32.totalorder %s26, 0
      %p137 = por %p135, %p136
      %s139 = sadd.s32 %s138, 1
      %p142 = scmp.eq.s32.totalorder %s20, 1
      %p143 = scmp.ne.s32.totalorder %s138, %s140
      %p144 = scmp.eq.s32.totalorder %s20, 0
      %p145 = por %p143, %p144
      %p146 = scmp.ne.s32.totalorder %s138, %s140
      %p147 = scmp.eq.s32.totalorder %s25, 1
      %p148 = por %p146, %p147
      %p149 = scmp.ne.s32.totalorder %s140, %s141
      %p150 = scmp.eq.s32.totalorder %s25, 0
      %p151 = por %p149, %p150
      %p152 = scmp.ne.s32.totalorder %s140, %s141
      %p153 = scmp.eq.s32.totalorder %s26, 1
      %p154 = por %p152, %p153
      %p156 = scmp.ne.s32.totalorder %s141, %s155
      %p157 = scmp.eq.s32.totalorder %s26, 0
      %p158 = por %p156, %p157
      %s160 = sadd.s32 %s159, 1
      %p163 = scmp.eq.s32.totalorder %s20, 1
      %p164 = scmp.ne.s32.totalorder %s159, %s161
      %p165 = scmp.eq.s32.totalorder %s20, 0
      %p166 = por %p164, %p165
      %p167 = scmp.ne.s32.totalorder %s159, %s161
      %p168 = scmp.eq.s32.totalorder %s25, 1
      %p169 = por %p167, %p168
      %p170 = scmp.ne.s32.totalorder %s161, %s162
      %p171 = scmp.eq.s32.totalorder %s25, 0
      %p172 = por %p170, %p171
      %p173 = scmp.ne.s32.totalorder %s161, %s162
      %p174 = scmp.eq.s32.totalorder %s26, 1
      %p175 = por %p173, %p174
      %p177 = scmp.ne.s32.totalorder %s162, %s176
      %p178 = scmp.eq.s32.totalorder %s26, 0
      %p179 = por %p177, %p178
      %s181 = sadd.s32 %s180, 1
      %p184 = scmp.eq.s32.totalorder %s20, 1
      %p185 = scmp.ne.s32.totalorder %s180, %s182
      %p186 = scmp.eq.s32.totalorder %s20, 0
      %p187 = por %p185, %p186
      %p188 = scmp.ne.s32.totalorder %s180, %s182
      %p189 = scmp.eq.s32.totalorder %s25, 1
      %p190 = por %p188, %p189
      %p191 = scmp.ne.s32.totalorder %s182, %s183
      %p192 = scmp.eq.s32.totalorder %s25, 0
      %p193 = por %p191, %p192
      %p194 = scmp.ne.s32.totalorder %s182, %s183
      %p195 = scmp.eq.s32.totalorder %s26, 1
      %p196 = por %p194, %p195
      %p198 = scmp.ne.s32.totalorder %s183, %s197
      %p199 = scmp.eq.s32.totalorder %s26, 0
      %p200 = por %p198, %p199
      %s202 = sadd.s32 %s201, 1
      %p205 = scmp.eq.s32.totalorder %s20, 1
      %p206 = scmp.ne.s32.totalorder %s201, %s203
      %p207 = scmp.eq.s32.totalorder %s20, 0
      %p208 = por %p206, %p207
      %p209 = scmp.ne.s32.totalorder %s201, %s203
      %p210 = scmp.eq.s32.totalorder %s25, 1
      %p211 = por %p209, %p210
      %p212 = scmp.ne.s32.totalorder %s203, %s204
      %p213 = scmp.eq.s32.totalorder %s25, 0
      %p214 = por %p212, %p213
      %p215 = scmp.ne.s32.totalorder %s203, %s204
      %p216 = scmp.eq.s32.totalorder %s26, 1
      %p217 = por %p215, %p216
      %p219 = scmp.ne.s32.totalorder %s204, %s218
      %p220 = scmp.eq.s32.totalorder %s26, 0
      %p221 = por %p219, %p220
      %s223 = sadd.s32 %s222, 1
      %p226 = scmp.eq.s32.totalorder %s20, 1
      %p227 = scmp.ne.s32.totalorder %s222, %s224
      %p228 = scmp.eq.s32.totalorder %s20, 0
      %p229 = por %p227, %p228
      %p230 = scmp.ne.s32.totalorder %s222, %s224
      %p231 = scmp.eq.s32.totalorder %s25, 1
      %p232 = por %p230, %p231
      %p233 = scmp.ne.s32.totalorder %s224, %s225
      %p234 = scmp.eq.s32.totalorder %s25, 0
      %p235 = por %p233, %p234
      %p236 = scmp.ne.s32.totalorder %s224, %s225
      %p237 = scmp.eq.s32.totalorder %s26, 1
      %p238 = por %p236, %p237
      %p240 = scmp.ne.s32.totalorder %s225, %s239
      %p241 = scmp.eq.s32.totalorder %s26, 0
      %p242 = por %p240, %p241
      %s244 = sadd.s32 %s243, 1
      %p247 = scmp.eq.s32.totalorder %s20, 1
      %p248 = scmp.ne.s32.totalorder %s243, %s245
      %p249 = scmp.eq.s32.totalorder %s20, 0
      %p250 = por %p248, %p249
      %p251 = scmp.ne.s32.totalorder %s243, %s245
      %p252 = scmp.eq.s32.totalorder %s25, 1
      %p253 = por %p251, %p252
      %p254 = scmp.ne.s32.totalorder %s245, %s246
      %p255 = scmp.eq.s32.totalorder %s25, 0
      %p256 = por %p254, %p255
      %p257 = scmp.ne.s32.totalorder %s245, %s246
      %p258 = scmp.eq.s32.totalorder %s26, 1
      %p259 = por %p257, %p258
      %p261 = scmp.ne.s32.totalorder %s246, %s260
      %p262 = scmp.eq.s32.totalorder %s26, 0
      %p263 = por %p261, %p262
      %s264 = ssub.s32 %s20, %s27
      %p265 = scmp.eq.s32.totalorder %s264, 0
      %s267 = sadd.s32 %s266, 1
      %s268 = scalar_select %p265, %s266, %s267
      %p271 = pneg %p265
      %p272 = scmp.eq.s32.totalorder %s20, 1
      %p273 = por %p271, %p272
      %p274 = scmp.ne.s32.totalorder %s266, %s269
      %p275 = scmp.eq.s32.totalorder %s20, 0
      %p276 = por %p274, %p275
      %p277 = scmp.ne.s32.totalorder %s266, %s269
      %p278 = scmp.eq.s32.totalorder %s25, 1
      %p279 = por %p277, %p278
      %p280 = scmp.ne.s32.totalorder %s269, %s270
      %p281 = scmp.eq.s32.totalorder %s25, 0
      %p282 = por %p280, %p281
      %p283 = scmp.ne.s32.totalorder %s269, %s270
      %p284 = scmp.eq.s32.totalorder %s26, 1
      %p285 = por %p283, %p284
      %p287 = scmp.ne.s32.totalorder %s270, %s286
      %p288 = scmp.eq.s32.totalorder %s26, 0
      %p289 = por %p287, %p288
      %p290 = scmp.le.s32.totalorder 1, %s20
      %p291 = scmp.lt.s32.totalorder %s20, 3
      %p292 = pnand %p290, %p291
      %p293 = pneg %p292
      // Predicated region
      $region9: #{net_forward.1} parent=5 // pred_check
        _
      $region10: #{net_forward.1} parent=5 // pred_check_branch
        %295 = sbr.rel (%p292) target = $region12
      $region11: #{net_forward.1} parent=5 // pred_region
        %s296 = ssub.s32 %s20, 1
        // Predicated region
        $region13: #{net_forward.1} parent=11 // pred_check
          %p297 = pneg %p67
        $region14: #{net_forward.1} parent=11 // pred_check_branch
          %299 = sbr.rel (%p297) target = $region16
        $region15: #{net_forward.1} parent=11 // pred_region
          _
        $region16: #{net_forward.1} parent=11 // pred_fallthru
          _
        // Predicated region
        $region17: #{net_forward.1} parent=11 // pred_check
          %p300 = pneg %p88
        $region18: #{net_forward.1} parent=11 // pred_check_branch
          %302 = sbr.rel (%p300) target = $region20
        $region19: #{net_forward.1} parent=11 // pred_region
          _
        $region20: #{net_forward.1} parent=11 // pred_fallthru
          _
        // Predicated region
        $region21: #{net_forward.1} parent=11 // pred_check
          %p303 = pneg %p109
        $region22: #{net_forward.1} parent=11 // pred_check_branch
          %305 = sbr.rel (%p303) target = $region24
        $region23: #{net_forward.1} parent=11 // pred_region
          _
        $region24: #{net_forward.1} parent=11 // pred_fallthru
          _
        // Predicated region
        $region25: #{net_forward.1} parent=11 // pred_check
          %p306 = pneg %p130
        $region26: #{net_forward.1} parent=11 // pred_check_branch
          %308 = sbr.rel (%p306) target = $region28
        $region27: #{net_forward.1} parent=11 // pred_region
          _
        $region28: #{net_forward.1} parent=11 // pred_fallthru
          _
        // Predicated region
        $region29: #{net_forward.1} parent=11 // pred_check
          %p309 = pneg %p151
        $region30: #{net_forward.1} parent=11 // pred_check_branch
          %311 = sbr.rel (%p309) target = $region32
        $region31: #{net_forward.1} parent=11 // pred_region
          _
        $region32: #{net_forward.1} parent=11 // pred_fallthru
          _
        // Predicated region
        $region33: #{net_forward.1} parent=11 // pred_check
          %p312 = pneg %p172
        $region34: #{net_forward.1} parent=11 // pred_check_branch
          %314 = sbr.rel (%p312) target = $region36
        $region35: #{net_forward.1} parent=11 // pred_region
          _
        $region36: #{net_forward.1} parent=11 // pred_fallthru
          _
        // Predicated region
        $region37: #{net_forward.1} parent=11 // pred_check
          %p315 = pneg %p193
        $region38: #{net_forward.1} parent=11 // pred_check_branch
          %317 = sbr.rel (%p315) target = $region40
        $region39: #{net_forward.1} parent=11 // pred_region
          _
        $region40: #{net_forward.1} parent=11 // pred_fallthru
          _
        // Predicated region
        $region41: #{net_forward.1} parent=11 // pred_check
          %p318 = pneg %p214
        $region42: #{net_forward.1} parent=11 // pred_check_branch
          %320 = sbr.rel (%p318) target = $region44
        $region43: #{net_forward.1} parent=11 // pred_region
          _
        $region44: #{net_forward.1} parent=11 // pred_fallthru
          _
        // Predicated region
        $region45: #{net_forward.1} parent=11 // pred_check
          %p321 = pneg %p235
        $region46: #{net_forward.1} parent=11 // pred_check_branch
          %323 = sbr.rel (%p321) target = $region48
        $region47: #{net_forward.1} parent=11 // pred_region
          _
        $region48: #{net_forward.1} parent=11 // pred_fallthru
          _
        // Predicated region
        $region49: #{net_forward.1} parent=11 // pred_check
          %p324 = pneg %p256
        $region50: #{net_forward.1} parent=11 // pred_check_branch
          %326 = sbr.rel (%p324) target = $region52
        $region51: #{net_forward.1} parent=11 // pred_region
          _
        $region52: #{net_forward.1} parent=11 // pred_fallthru
          _
      $region12: #{net_forward.1} parent=5 // pred_fallthru
        _
      %p327 = scmp.lt.s32.totalorder %s20, 2
      // Predicated region
      $region53: #{net_forward.1} parent=5 // pred_check
        %p328 = pneg %p327
      $region54: #{net_forward.1} parent=5 // pred_check_branch
        %330 = sbr.rel (%p328) target = $region56
      $region55: #{net_forward.1} parent=5 // pred_region
        // Predicated region
        $region57: #{net_forward.1} parent=55 // pred_check
          %p331 = pneg %p40
        $region58: #{net_forward.1} parent=55 // pred_check_branch
          %333 = sbr.rel (%p331) target = $region60
        $region59: #{net_forward.1} parent=55 // pred_region
          %p334 = scmp.lt.s32.totalorder %s20, 1
          %s335 = scalar_select %p334, %s20, 1
          %s336 = smul.addr %s335, 4
          %s337 = smul.addr %s336, 8
          %s338 = scalar_lea.vmem %s0, %s337
        $region60: #{net_forward.1} parent=55 // pred_fallthru
          _
      $region56: #{net_forward.1} parent=5 // pred_fallthru
        _
      %p339 = scmp.le.s32.totalorder 1, %s20
      %p340 = scmp.lt.s32.totalorder %s20, 3
      %p341 = pnand %p339, %p340
      %p342 = pneg %p341
      // Predicated region
      $region61: #{net_forward.1} parent=5 // pred_check
        _
      $region62: #{net_forward.1} parent=5 // pred_check_branch
        %344 = sbr.rel (%p341) target = $region64
      $region63: #{net_forward.1} parent=5 // pred_region
        %s345 = ssub.s32 %s20, 1
        %p346 = scmp.lt.s32.totalorder %s25, 1
        %s347 = scalar_select %p346, %s25, 1
        %s348 = smul.addr %s347, 4
        %s349 = smul.addr %s348, 8
        %s350 = scalar_lea.vmem %s0, %s349
        %p351 = pneg %p46
        %p352 = pneg %p43
        %p353 = pneg %p67
        %p354 = pneg %p64
        %p355 = pneg %p88
        %p356 = pneg %p85
        %p357 = pneg %p109
        %p358 = pneg %p106
        %p359 = pneg %p130
        %p360 = pneg %p127
        %p361 = pneg %p151
        %p362 = pneg %p148
        %p363 = pneg %p172
        %p364 = pneg %p169
        %p365 = pneg %p193
        %p366 = pneg %p190
        %p367 = pneg %p214
        %p368 = pneg %p211
        %p369 = pneg %p235
        %p370 = pneg %p232
        %p371 = pneg %p256
        %p372 = pneg %p253
        %p373 = pneg %p282
        %p374 = pneg %p279
        %s375 = sand.u32 %s269, 1
        %s376 = scalar_lea.sflag [#allocation3], %s375
        %s377 = sand.u32 %s269, 1
        %s378 = scalar_lea.vmem [#allocation2], %s377
        %p379 = scmp.lt.s32.totalorder %s25, 1
        %s380 = scalar_select %p379, %s25, 1
        %s381 = smul.addr %s380, 4
        %s382 = smul.addr %s381, 8
        %s383 = scalar_lea.vmem %s0, %s382
        %v384 = vld [vmem:[%s383] sm:$0xff]
        %v385 = vld [vmem:[%s383 + $0x8] sm:$0xff]
        %v386 = vld [vmem:[%s383 + $0x10] sm:$0xff]
        %v387 = vld [vmem:[%s383 + $0x18] sm:$0xf]
        %v388 = vld [vmem:[%s2] sm:$0x3]
        %v389 = vld [vmem:[%s1] sm:$0xff]
        %v390 = vld [vmem:[%s1 + $0x8] sm:$0xff]
        %v391 = vld [vmem:[%s1 + $0x10] sm:$0xff]
        %v392 = vld [vmem:[%s1 + $0x18] sm:$0xff]
        %v393 = vld [vmem:[%s1 + $0x20] sm:$0xff]
        %v394 = vld [vmem:[%s1 + $0x28] sm:$0xff]
        %v395 = vld [vmem:[%s1 + $0x30] sm:$0xf]
        %v396 = vld [vmem:[%s1 + $0x38] sm:$0xf]
        %vm397 = vcmask 228352
        %v399 = vsel %vm397, %v384, 0
        %v402 = vsel %vm397, %v385, 0
        %v405 = vsel %vm397, %v386, 0
        %v408 = vsel %vm397, %v387, 0
        %vm410 = vcmask 1043456
        %v412 = vsel %vm410, %v395, 0
        %v415 = vsel %vm410, %v396, 0
        %417 = vmatprep.subr.mxu0 %v390
        %418 = vmatpush1.msra.mxu0 %v389
        %419 = vmatprep.subr.mxu0 %v392
        %420 = vmatpush1.msra.mxu0 %v391
        %421 = vmatprep.subr.mxu0 %v394
        %422 = vmatpush1.msra.mxu0 %v393
        %423 = vmatprep.subr.mxu0 %v415
        %424 = vmatpush1.msra.mxu0 %v412
        %425 = vmatprep.subr.mxu0 0.0
        %426 = vmatpush1.msra.mxu0 0.0
        %427 = vmatprep.subr.mxu0 0.0
        %428 = vmatpush1.msra.mxu0 0.0
        %429 = vmatprep.subr.mxu0 0.0
        %430 = vmatpush1.msra.mxu0 0.0
        %431 = vmatprep.subr.mxu0 0.0
        %432 = vmatpush1.msra.mxu0 0.0
        %433 = vmatprep.subr.mxu0 0.0
        %434 = vmatpush1.msra.mxu0 0.0
        %435 = vmatprep.subr.mxu0 0.0
        %436 = vmatpush1.msra.mxu0 0.0
        %437 = vmatprep.subr.mxu0 0.0
        %438 = vmatpush1.msra.mxu0 0.0
        %439 = vmatprep.subr.mxu0 0.0
        %440 = vmatpush1.msra.mxu0 0.0
        %441 = vmatprep.subr.mxu0 0.0
        %442 = vmatpush1.msra.mxu0 0.0
        %443 = vmatprep.subr.mxu0 0.0
        %444 = vmatpush1.msra.mxu0 0.0
        %445 = vmatprep.subr.mxu0 0.0
        %446 = vmatpush1.msra.mxu0 0.0
        %447 = vmatprep.subr.mxu0 0.0
        %448 = vmatpush1.msra.mxu0 0.0
        %449 = vmatprep.subr.mxu0 0.0
        %450 = vmatpush1.msra.mxu0 0.0
        %451 = vmatprep.subr.mxu0 0.0
        %452 = vmatpush1.msra.mxu0 0.0
        %453 = vmatprep.subr.mxu0 0.0
        %454 = vmatpush1.msra.mxu0 0.0
        %455 = vmatprep.subr.mxu0 0.0
        %456 = vmatpush1.msra.mxu0 0.0
        %457 = vmatprep.subr.mxu0 0.0
        %458 = vmatpush1.msra.mxu0 0.0
        %459 = vmatprep.subr.mxu0 0.0
        %460 = vmatpush1.msra.mxu0 0.0
        %461 = vmatprep.subr.mxu0 0.0
        %462 = vmatpush1.msra.mxu0 0.0
        %463 = vmatprep.subr.mxu0 0.0
        %464 = vmatpush1.msra.mxu0 0.0
        %465 = vmatprep.subr.mxu0 0.0
        %466 = vmatpush1.msra.mxu0 0.0
        %467 = vmatprep.subr.mxu0 0.0
        %468 = vmatpush1.msra.mxu0 0.0
        %469 = vmatprep.subr.mxu0 0.0
        %470 = vmatpush1.msra.mxu0 0.0
        %471 = vmatprep.subr.mxu0 0.0
        %472 = vmatpush1.msra.mxu0 0.0
        %473 = vmatprep.subr.mxu0 0.0
        %474 = vmatpush1.msra.mxu0 0.0
        %475 = vmatprep.subr.mxu0 0.0
        %476 = vmatpush1.msra.mxu0 0.0
        %477 = vmatprep.subr.mxu0 0.0
        %478 = vmatpush1.msra.mxu0 0.0
        %479 = vmatprep.subr.mxu0 0.0
        %480 = vmatpush1.msra.mxu0 0.0
        %481 = vmatprep.mubr.f32.mxu0 0.0
        %482 = vmatmul.mubr.f32.gmra.mrb[0].mxu0 %v399
        %v483 = vpop.f32.mrb[0].mxu0
        %v484 = vadd.f32 0.0, %v483
        %v485 = vpop.f32.mrb[0].mxu0
        %v486 = vadd.f32 0.0, %v485
        %487 = vmatprep.mubr.f32.mxu0 0.0
        %488 = vmatmul.mubr.f32.gmra.mrb[0].mxu0 %v402
        %v489 = vpop.f32.mrb[0].mxu0
        %v490 = vadd.f32 0.0, %v489
        %v491 = vpop.f32.mrb[0].mxu0
        %v492 = vadd.f32 0.0, %v491
        %493 = vmatprep.mubr.f32.mxu0 0.0
        %494 = vmatmul.mubr.f32.gmra.mrb[0].mxu0 %v405
        %v495 = vpop.f32.mrb[0].mxu0
        %v496 = vadd.f32 0.0, %v495
        %v497 = vpop.f32.mrb[0].mxu0
        %v498 = vadd.f32 0.0, %v497
        %499 = vmatprep.mubr.f32.mxu0 0.0
        %500 = vmatmul.mubr.f32.gmra.mrb[0].mxu0 %v408
        %v501 = vpop.f32.mrb[0].mxu0
        %v502 = vadd.f32 0.0, %v501
        %v503 = vpop.f32.mrb[0].mxu0
        %v504 = vadd.f32 0.0, %v503
        %505 = vdwg.mxu0
        %v507 = vlaneseq
        %v508 = vshrl.u32 %v507, 7
        %v509 = vsub.s32 0, %v508
        %v510 = vrot.slane %v388, %v509
        %v511 = vlaneseq
        %v512 = vshrl.u32 %v511, 7
        %v513 = vsub.s32 1, %v512
        %v514 = vrot.slane %v388, %v513
        %v517 = vadd.f32 %v510, %v484
        %v518 = vadd.f32 %v514, %v486
        %v519 = vadd.f32 %v510, %v490
        %v520 = vadd.f32 %v514, %v492
        %v521 = vadd.f32 %v510, %v496
        %v522 = vadd.f32 %v514, %v498
        %v523 = vadd.f32 %v510, %v502
        %v524 = vadd.f32 %v514, %v504
        %s525 = scalar_lea.vmem %s1, 64
        %v526 = vld [vmem:[%s525] sm:$0xff]
        %v527 = vld [vmem:[%s525 + $0x8] sm:$0xff]
        %v528 = vld [vmem:[%s525 + $0x10] sm:$0xff]
        %v529 = vld [vmem:[%s525 + $0x18] sm:$0xff]
        %v530 = vld [vmem:[%s525 + $0x20] sm:$0xff]
        %v531 = vld [vmem:[%s525 + $0x28] sm:$0xff]
        %v532 = vld [vmem:[%s525 + $0x30] sm:$0xf]
        %v533 = vld [vmem:[%s525 + $0x38] sm:$0xf]
        %vm534 = vcmask 1046528
        %v535 = vrot.slane %v384, 1
        %v536 = vrot.slane %v385, 1
        %v537 = vsel %vm534, %v535, %v536
        %v538 = vrot.slane %v386, 1
        %v539 = vsel %vm534, %v536, %v538
        %v540 = vrot.slane %v387, 1
        %v541 = vsel %vm534, %v538, %v540
        %v542 = vsel %vm397, %v537, 0
        %v544 = vsel %vm397, %v539, 0
        %v546 = vsel %vm397, %v541, 0
        %v548 = vsel %vm397, %v540, 0
        %v551 = vsel %vm410, %v532, 0
        %v554 = vsel %vm410, %v533, 0
        %556 = vmatprep.subr.mxu0 %v527
        %557 = vmatpush1.msra.mxu0 %v526
        %558 = vmatprep.subr.mxu0 %v529
        %559 = vmatpush1.msra.mxu0 %v528
        %560 = vmatprep.subr.mxu0 %v531
        %561 = vmatpush1.msra.mxu0 %v530
        %562 = vmatprep.subr.mxu0 %v554
        %563 = vmatpush1.msra.mxu0 %v551
        %564 = vmatprep.subr.mxu0 0.0
        %565 = vmatpush1.msra.mxu0 0.0
        %566 = vmatprep.subr.mxu0 0.0
        %567 = vmatpush1.msra.mxu0 0.0
        %568 = vmatprep.subr.mxu0 0.0
        %569 = vmatpush1.msra.mxu0 0.0
        %570 = vmatprep.subr.mxu0 0.0
        %571 = vmatpush1.msra.mxu0 0.0
        %572 = vmatprep.subr.mxu0 0.0
        %573 = vmatpush1.msra.mxu0 0.0
        %574 = vmatprep.subr.mxu0 0.0
        %575 = vmatpush1.msra.mxu0 0.0
        %576 = vmatprep.subr.mxu0 0.0
        %577 = vmatpush1.msra.mxu0 0.0
        %578 = vmatprep.subr.mxu0 0.0
        %579 = vmatpush1.msra.mxu0 0.0
        %580 = vmatprep.subr.mxu0 0.0
        %581 = vmatpush1.msra.mxu0 0.0
        %582 = vmatprep.subr.mxu0 0.0
        %583 = vmatpush1.msra.mxu0 0.0
        %584 = vmatprep.subr.mxu0 0.0
        %585 = vmatpush1.msra.mxu0 0.0
        %586 = vmatprep.subr.mxu0 0.0
        %587 = vmatpush1.msra.mxu0 0.0
        %588 = vmatprep.subr.mxu0 0.0
        %589 = vmatpush1.msra.mxu0 0.0
        %590 = vmatprep.subr.mxu0 0.0
        %591 = vmatpush1.msra.mxu0 0.0
        %592 = vmatprep.subr.mxu0 0.0
        %593 = vmatpush1.msra.mxu0 0.0
        %594 = vmatprep.subr.mxu0 0.0
        %595 = vmatpush1.msra.mxu0 0.0
        %596 = vmatprep.subr.mxu0 0.0
        %597 = vmatpush1.msra.mxu0 0.0
        %598 = vmatprep.subr.mxu0 0.0
        %599 = vmatpush1.msra.mxu0 0.0
        %600 = vmatprep.subr.mxu0 0.0
        %601 = vmatpush1.msra.mxu0 0.0
        %602 = vmatprep.subr.mxu0 0.0
        %603 = vmatpush1.msra.mxu0 0.0
        %604 = vmatprep.subr.mxu0 0.0
        %605 = vmatpush1.msra.mxu0 0.0
        %606 = vmatprep.subr.mxu0 0.0
        %607 = vmatpush1.msra.mxu0 0.0
        %608 = vmatprep.subr.mxu0 0.0
        %609 = vmatpush1.msra.mxu0 0.0
        %610 = vmatprep.subr.mxu0 0.0
        %611 = vmatpush1.msra.mxu0 0.0
        %612 = vmatprep.subr.mxu0 0.0
        %613 = vmatpush1.msra.mxu0 0.0
        %614 = vmatprep.subr.mxu0 0.0
        %615 = vmatpush1.msra.mxu0 0.0
        %616 = vmatprep.subr.mxu0 0.0
        %617 = vmatpush1.msra.mxu0 0.0
        %618 = vmatprep.subr.mxu0 0.0
        %619 = vmatpush1.msra.mxu0 0.0
        %620 = vmatprep.mubr.f32.mxu0 0.0
        %621 = vmatmul.mubr.f32.gmra.mrb[0].mxu0 %v542
        %v622 = vpop.f32.mrb[0].mxu0
        %v623 = vadd.f32 0.0, %v622
        %v624 = vpop.f32.mrb[0].mxu0
        %v625 = vadd.f32 0.0, %v624
        %626 = vmatprep.mubr.f32.mxu0 0.0
        %627 = vmatmul.mubr.f32.gmra.mrb[0].mxu0 %v544
        %v628 = vpop.f32.mrb[0].mxu0
        %v629 = vadd.f32 0.0, %v628
        %v630 = vpop.f32.mrb[0].mxu0
        %v631 = vadd.f32 0.0, %v630
        %632 = vmatprep.mubr.f32.mxu0 0.0
        %633 = vmatmul.mubr.f32.gmra.mrb[0].mxu0 %v546
        %v634 = vpop.f32.mrb[0].mxu0
        %v635 = vadd.f32 0.0, %v634
        %v636 = vpop.f32.mrb[0].mxu0
        %v637 = vadd.f32 0.0, %v636
        %638 = vmatprep.mubr.f32.mxu0 0.0
        %639 = vmatmul.mubr.f32.gmra.mrb[0].mxu0 %v548
        %v640 = vpop.f32.mrb[0].mxu0
        %v641 = vadd.f32 0.0, %v640
        %v642 = vpop.f32.mrb[0].mxu0
        %v643 = vadd.f32 0.0, %v642
        %644 = vdwg.mxu0
        %v645 = vadd.f32 %v517, %v623
        %v646 = vadd.f32 %v518, %v625
        %v647 = vadd.f32 %v519, %v629
        %v648 = vadd.f32 %v520, %v631
        %v649 = vadd.f32 %v521, %v635
        %v650 = vadd.f32 %v522, %v637
        %v651 = vadd.f32 %v523, %v641
        %v652 = vadd.f32 %v524, %v643
        %s653 = scalar_lea.vmem %s1, 128
        %v654 = vld [vmem:[%s653] sm:$0xff]
        %v655 = vld [vmem:[%s653 + $0x8] sm:$0xff]
        %v656 = vld [vmem:[%s653 + $0x10] sm:$0xff]
        %v657 = vld [vmem:[%s653 + $0x18] sm:$0xff]
        %v658 = vld [vmem:[%s653 + $0x20] sm:$0xff]
        %v659 = vld [vmem:[%s653 + $0x28] sm:$0xff]
        %v660 = vld [vmem:[%s653 + $0x30] sm:$0xf]
        %v661 = vld [vmem:[%s653 + $0x38] sm:$0xf]
        %vm662 = vcmask 1045504
        %v663 = vrot.slane %v384, 2
        %v664 = vrot.slane %v385, 2
        %v665 = vsel %vm662, %v663, %v664
        %v666 = vrot.slane %v386, 2
        %v667 = vsel %vm662, %v664, %v666
        %v668 = vrot.slane %v387, 2
        %v669 = vsel %vm662, %v666, %v668
        %v670 = vsel %vm397, %v665, 0
        %v672 = vsel %vm397, %v667, 0
        %v674 = vsel %vm397, %v669, 0
        %v676 = vsel %vm397, %v668, 0
        %v679 = vsel %vm410, %v660, 0
        %v682 = vsel %vm410, %v661, 0
        %684 = vmatprep.subr.mxu0 %v655
        %685 = vmatpush1.msra.mxu0 %v654
        %686 = vmatprep.subr.mxu0 %v657
        %687 = vmatpush1.msra.mxu0 %v656
        %688 = vmatprep.subr.mxu0 %v659
        %689 = vmatpush1.msra.mxu0 %v658
        %690 = vmatprep.subr.mxu0 %v682
        %691 = vmatpush1.msra.mxu0 %v679
        %692 = vmatprep.subr.mxu0 0.0
        %693 = vmatpush1.msra.mxu0 0.0
        %694 = vmatprep.subr.mxu0 0.0
        %695 = vmatpush1.msra.mxu0 0.0
        %696 = vmatprep.subr.mxu0 0.0
        %697 = vmatpush1.msra.mxu0 0.0
        %698 = vmatprep.subr.mxu0 0.0
        %699 = vmatpush1.msra.mxu0 0.0
        %700 = vmatprep.subr.mxu0 0.0
        %701 = vmatpush1.msra.mxu0 0.0
        %702 = vmatprep.subr.mxu0 0.0
        %703 = vmatpush1.msra.mxu0 0.0
        %704 = vmatprep.subr.mxu0 0.0
        %705 = vmatpush1.msra.mxu0 0.0
        %706 = vmatprep.subr.mxu0 0.0
        %707 = vmatpush1.msra.mxu0 0.0
        %708 = vmatprep.subr.mxu0 0.0
        %709 = vmatpush1.msra.mxu0 0.0
        %710 = vmatprep.subr.mxu0 0.0
        %711 = vmatpush1.msra.mxu0 0.0
        %712 = vmatprep.subr.mxu0 0.0
        %713 = vmatpush1.msra.mxu0 0.0
        %714 = vmatprep.subr.mxu0 0.0
        %715 = vmatpush1.msra.mxu0 0.0
        %716 = vmatprep.subr.mxu0 0.0
        %717 = vmatpush1.msra.mxu0 0.0
        %718 = vmatprep.subr.mxu0 0.0
        %719 = vmatpush1.msra.mxu0 0.0
        %720 = vmatprep.subr.mxu0 0.0
        %721 = vmatpush1.msra.mxu0 0.0
        %722 = vmatprep.subr.mxu0 0.0
        %723 = vmatpush1.msra.mxu0 0.0
        %724 = vmatprep.subr.mxu0 0.0
        %725 = vmatpush1.msra.mxu0 0.0
        %726 = vmatprep.subr.mxu0 0.0
        %727 = vmatpush1.msra.mxu0 0.0
        %728 = vmatprep.subr.mxu0 0.0
        %729 = vmatpush1.msra.mxu0 0.0
        %730 = vmatprep.subr.mxu0 0.0
        %731 = vmatpush1.msra.mxu0 0.0
        %732 = vmatprep.subr.mxu0 0.0
        %733 = vmatpush1.msra.mxu0 0.0
        %734 = vmatprep.subr.mxu0 0.0
        %735 = vmatpush1.msra.mxu0 0.0
        %736 = vmatprep.subr.mxu0 0.0
        %737 = vmatpush1.msra.mxu0 0.0
        %738 = vmatprep.subr.mxu0 0.0
        %739 = vmatpush1.msra.mxu0 0.0
        %740 = vmatprep.subr.mxu0 0.0
        %741 = vmatpush1.msra.mxu0 0.0
        %742 = vmatprep.subr.mxu0 0.0
        %743 = vmatpush1.msra.mxu0 0.0
        %744 = vmatprep.subr.mxu0 0.0
        %745 = vmatpush1.msra.mxu0 0.0
        %746 = vmatprep.subr.mxu0 0.0
        %747 = vmatpush1.msra.mxu0 0.0
        %748 = vmatprep.mubr.f32.mxu0 0.0
        %749 = vmatmul.mubr.f32.gmra.mrb[0].mxu0 %v670
        %v750 = vpop.f32.mrb[0].mxu0
        %v751 = vadd.f32 0.0, %v750
        %v752 = vpop.f32.mrb[0].mxu0
        %v753 = vadd.f32 0.0, %v752
        %754 = vmatprep.mubr.f32.mxu0 0.0
        %755 = vmatmul.mubr.f32.gmra.mrb[0].mxu0 %v672
        %v756 = vpop.f32.mrb[0].mxu0
        %v757 = vadd.f32 0.0, %v756
        %v758 = vpop.f32.mrb[0].mxu0
        %v759 = vadd.f32 0.0, %v758
        %760 = vmatprep.mubr.f32.mxu0 0.0
        %761 = vmatmul.mubr.f32.gmra.mrb[0].mxu0 %v674
        %v762 = vpop.f32.mrb[0].mxu0
        %v763 = vadd.f32 0.0, %v762
        %v764 = vpop.f32.mrb[0].mxu0
        %v765 = vadd.f32 0.0, %v764
        %766 = vmatprep.mubr.f32.mxu0 0.0
        %767 = vmatmul.mubr.f32.gmra.mrb[0].mxu0 %v676
        %v768 = vpop.f32.mrb[0].mxu0
        %v769 = vadd.f32 0.0, %v768
        %v770 = vpop.f32.mrb[0].mxu0
        %v771 = vadd.f32 0.0, %v770
        %772 = vdwg.mxu0
        %v773 = vadd.f32 %v645, %v751
        %v774 = vadd.f32 %v646, %v753
        %v775 = vadd.f32 %v647, %v757
        %v776 = vadd.f32 %v648, %v759
        %v777 = vadd.f32 %v649, %v763
        %v778 = vadd.f32 %v650, %v765
        %v779 = vadd.f32 %v651, %v769
        %v780 = vadd.f32 %v652, %v771
        %s781 = scalar_lea.vmem %s1, 192
        %v782 = vld [vmem:[%s781] sm:$0xff]
        %v783 = vld [vmem:[%s781 + $0x8] sm:$0xff]
        %v784 = vld [vmem:[%s781 + $0x10] sm:$0xff]
        %v785 = vld [vmem:[%s781 + $0x18] sm:$0xff]
        %v786 = vld [vmem:[%s781 + $0x20] sm:$0xff]
        %v787 = vld [vmem:[%s781 + $0x28] sm:$0xff]
        %v788 = vld [vmem:[%s781 + $0x30] sm:$0xf]
        %v789 = vld [vmem:[%s781 + $0x38] sm:$0xf]
        %v791 = vsel %vm410, %v788, 0
        %v794 = vsel %vm410, %v789, 0
        %796 = vmatprep.subr.mxu0 %v783
        %797 = vmatpush1.msra.mxu0 %v782
        %798 = vmatprep.subr.mxu0 %v785
        %799 = vmatpush1.msra.mxu0 %v784
        %800 = vmatprep.subr.mxu0 %v787
        %801 = vmatpush1.msra.mxu0 %v786
        %802 = vmatprep.subr.mxu0 %v794
        %803 = vmatpush1.msra.mxu0 %v791
        %804 = vmatprep.subr.mxu0 0.0
        %805 = vmatpush1.msra.mxu0 0.0
        %806 = vmatprep.subr.mxu0 0.0
        %807 = vmatpush1.msra.mxu0 0.0
        %808 = vmatprep.subr.mxu0 0.0
        %809 = vmatpush1.msra.mxu0 0.0
        %810 = vmatprep.subr.mxu0 0.0
        %811 = vmatpush1.msra.mxu0 0.0
        %812 = vmatprep.subr.mxu0 0.0
        %813 = vmatpush1.msra.mxu0 0.0
        %814 = vmatprep.subr.mxu0 0.0
        %815 = vmatpush1.msra.mxu0 0.0
        %816 = vmatprep.subr.mxu0 0.0
        %817 = vmatpush1.msra.mxu0 0.0
        %818 = vmatprep.subr.mxu0 0.0
        %819 = vmatpush1.msra.mxu0 0.0
        %820 = vmatprep.subr.mxu0 0.0
        %821 = vmatpush1.msra.mxu0 0.0
        %822 = vmatprep.subr.mxu0 0.0
        %823 = vmatpush1.msra.mxu0 0.0
        %824 = vmatprep.subr.mxu0 0.0
        %825 = vmatpush1.msra.mxu0 0.0
        %826 = vmatprep.subr.mxu0 0.0
        %827 = vmatpush1.msra.mxu0 0.0
        %828 = vmatprep.subr.mxu0 0.0
        %829 = vmatpush1.msra.mxu0 0.0
        %830 = vmatprep.subr.mxu0 0.0
        %831 = vmatpush1.msra.mxu0 0.0
        %832 = vmatprep.subr.mxu0 0.0
        %833 = vmatpush1.msra.mxu0 0.0
        %834 = vmatprep.subr.mxu0 0.0
        %835 = vmatpush1.msra.mxu0 0.0
        %836 = vmatprep.subr.mxu0 0.0
        %837 = vmatpush1.msra.mxu0 0.0
        %838 = vmatprep.subr.mxu0 0.0
        %839 = vmatpush1.msra.mxu0 0.0
        %840 = vmatprep.subr.mxu0 0.0
        %841 = vmatpush1.msra.mxu0 0.0
        %842 = vmatprep.subr.mxu0 0.0
        %843 = vmatpush1.msra.mxu0 0.0
        %844 = vmatprep.subr.mxu0 0.0
        %845 = vmatpush1.msra.mxu0 0.0
        %846 = vmatprep.subr.mxu0 0.0
        %847 = vmatpush1.msra.mxu0 0.0
        %848 = vmatprep.subr.mxu0 0.0
        %849 = vmatpush1.msra.mxu0 0.0
        %850 = vmatprep.subr.mxu0 0.0
        %851 = vmatpush1.msra.mxu0 0.0
        %852 = vmatprep.subr.mxu0 0.0
        %853 = vmatpush1.msra.mxu0 0.0
        %854 = vmatprep.subr.mxu0 0.0
        %855 = vmatpush1.msra.mxu0 0.0
        %856 = vmatprep.subr.mxu0 0.0
        %857 = vmatpush1.msra.mxu0 0.0
        %858 = vmatprep.subr.mxu0 0.0
        %859 = vmatpush1.msra.mxu0 0.0
        %860 = vmatprep.mubr.f32.mxu0 0.0
        %861 = vmatmul.mubr.f32.gmra.mrb[0].mxu0 %v399
        %v862 = vpop.f32.mrb[0].mxu0
        %v863 = vadd.f32 0.0, %v862
        %v864 = vpop.f32.mrb[0].mxu0
        %v865 = vadd.f32 0.0, %v864
        %866 = vmatprep.mubr.f32.mxu0 0.0
        %867 = vmatmul.mubr.f32.gmra.mrb[0].mxu0 %v402
        %v868 = vpop.f32.mrb[0].mxu0
        %v869 = vadd.f32 0.0, %v868
        %v870 = vpop.f32.mrb[0].mxu0
        %v871 = vadd.f32 0.0, %v870
        %872 = vmatprep.mubr.f32.mxu0 0.0
        %873 = vmatmul.mubr.f32.gmra.mrb[0].mxu0 %v405
        %v874 = vpop.f32.mrb[0].mxu0
        %v875 = vadd.f32 0.0, %v874
        %v876 = vpop.f32.mrb[0].mxu0
        %v877 = vadd.f32 0.0, %v876
        %878 = vmatprep.mubr.f32.mxu0 0.0
        %879 = vmatmul.mubr.f32.gmra.mrb[0].mxu0 %v408
        %v880 = vpop.f32.mrb[0].mxu0
        %v881 = vadd.f32 0.0, %v880
        %v882 = vpop.f32.mrb[0].mxu0
        %v883 = vadd.f32 0.0, %v882
        %884 = vdwg.mxu0
        %v885 = vadd.f32 %v510, %v863
        %v886 = vadd.f32 %v514, %v865
        %v887 = vadd.f32 %v510, %v869
        %v888 = vadd.f32 %v514, %v871
        %v889 = vadd.f32 %v510, %v875
        %v890 = vadd.f32 %v514, %v877
        %v891 = vadd.f32 %v510, %v881
        %v892 = vadd.f32 %v514, %v883
        %s893 = scalar_lea.vmem %s1, 256
        %v894 = vld [vmem:[%s893] sm:$0xff]
        %v895 = vld [vmem:[%s893 + $0x8] sm:$0xff]
        %v896 = vld [vmem:[%s893 + $0x10] sm:$0xff]
        %v897 = vld [vmem:[%s893 + $0x18] sm:$0xff]
        %v898 = vld [vmem:[%s893 + $0x20] sm:$0xff]
        %v899 = vld [vmem:[%s893 + $0x28] sm:$0xff]
        %v900 = vld [vmem:[%s893 + $0x30] sm:$0xf]
        %v901 = vld [vmem:[%s893 + $0x38] sm:$0xf]
        %v903 = vsel %vm410, %v900, 0
        %v906 = vsel %vm410, %v901, 0
        %908 = vmatprep.subr.mxu0 %v895
        %909 = vmatpush1.msra.mxu0 %v894
        %910 = vmatprep.subr.mxu0 %v897
        %911 = vmatpush1.msra.mxu0 %v896
        %912 = vmatprep.subr.mxu0 %v899
        %913 = vmatpush1.msra.mxu0 %v898
        %914 = vmatprep.subr.mxu0 %v906
        %915 = vmatpush1.msra.mxu0 %v903
        %916 = vmatprep.subr.mxu0 0.0
        %917 = vmatpush1.msra.mxu0 0.0
        %918 = vmatprep.subr.mxu0 0.0
        %919 = vmatpush1.msra.mxu0 0.0
        %920 = vmatprep.subr.mxu0 0.0
        %921 = vmatpush1.msra.mxu0 0.0
        %922 = vmatprep.subr.mxu0 0.0
        %923 = vmatpush1.msra.mxu0 0.0
        %924 = vmatprep.subr.mxu0 0.0
        %925 = vmatpush1.msra.mxu0 0.0
        %926 = vmatprep.subr.mxu0 0.0
        %927 = vmatpush1.msra.mxu0 0.0
        %928 = vmatprep.subr.mxu0 0.0
        %929 = vmatpush1.msra.mxu0 0.0
        %930 = vmatprep.subr.mxu0 0.0
        %931 = vmatpush1.msra.mxu0 0.0
        %932 = vmatprep.subr.mxu0 0.0
        %933 = vmatpush1.msra.mxu0 0.0
        %934 = vmatprep.subr.mxu0 0.0
        %935 = vmatpush1.msra.mxu0 0.0
        %936 = vmatprep.subr.mxu0 0.0
        %937 = vmatpush1.msra.mxu0 0.0
        %938 = vmatprep.subr.mxu0 0.0
        %939 = vmatpush1.msra.mxu0 0.0
        %940 = vmatprep.subr.mxu0 0.0
        %941 = vmatpush1.msra.mxu0 0.0
        %942 = vmatprep.subr.mxu0 0.0
        %943 = vmatpush1.msra.mxu0 0.0
        %944 = vmatprep.subr.mxu0 0.0
        %945 = vmatpush1.msra.mxu0 0.0
        %946 = vmatprep.subr.mxu0 0.0
        %947 = vmatpush1.msra.mxu0 0.0
        %948 = vmatprep.subr.mxu0 0.0
        %949 = vmatpush1.msra.mxu0 0.0
        %950 = vmatprep.subr.mxu0 0.0
        %951 = vmatpush1.msra.mxu0 0.0
        %952 = vmatprep.subr.mxu0 0.0
        %953 = vmatpush1.msra.mxu0 0.0
        %954 = vmatprep.subr.mxu0 0.0
        %955 = vmatpush1.msra.mxu0 0.0
        %956 = vmatprep.subr.mxu0 0.0
        %957 = vmatpush1.msra.mxu0 0.0
        %958 = vmatprep.subr.mxu0 0.0
        %959 = vmatpush1.msra.mxu0 0.0
        %960 = vmatprep.subr.mxu0 0.0
        %961 = vmatpush1.msra.mxu0 0.0
        %962 = vmatprep.subr.mxu0 0.0
        %963 = vmatpush1.msra.mxu0 0.0
        %964 = vmatprep.subr.mxu0 0.0
        %965 = vmatpush1.msra.mxu0 0.0
        %966 = vmatprep.subr.mxu0 0.0
        %967 = vmatpush1.msra.mxu0 0.0
        %968 = vmatprep.subr.mxu0 0.0
        %969 = vmatpush1.msra.mxu0 0.0
        %970 = vmatprep.subr.mxu0 0.0
        %971 = vmatpush1.msra.mxu0 0.0
        %972 = vmatprep.mubr.f32.mxu0 0.0
        %973 = vmatmul.mubr.f32.gmra.mrb[0].mxu0 %v542
        %v974 = vpop.f32.mrb[0].mxu0
        %v975 = vadd.f32 0.0, %v974
        %v976 = vpop.f32.mrb[0].mxu0
        %v977 = vadd.f32 0.0, %v976
        %978 = vmatprep.mubr.f32.mxu0 0.0
        %979 = vmatmul.mubr.f32.gmra.mrb[0].mxu0 %v544
        %v980 = vpop.f32.mrb[0].mxu0
        %v981 = vadd.f32 0.0, %v980
        %v982 = vpop.f32.mrb[0].mxu0
        %v983 = vadd.f32 0.0, %v982
        %984 = vmatprep.mubr.f32.mxu0 0.0
        %985 = vmatmul.mubr.f32.gmra.mrb[0].mxu0 %v546
        %v986 = vpop.f32.mrb[0].mxu0
        %v987 = vadd.f32 0.0, %v986
        %v988 = vpop.f32.mrb[0].mxu0
        %v989 = vadd.f32 0.0, %v988
        %990 = vmatprep.mubr.f32.mxu0 0.0
        %991 = vmatmul.mubr.f32.gmra.mrb[0].mxu0 %v548
        %v992 = vpop.f32.mrb[0].mxu0
        %v993 = vadd.f32 0.0, %v992
        %v994 = vpop.f32.mrb[0].mxu0
        %v995 = vadd.f32 0.0, %v994
        %996 = vdwg.mxu0
        %v997 = vadd.f32 %v885, %v975
        %v998 = vadd.f32 %v886, %v977
        %v999 = vadd.f32 %v887, %v981
        %v1000 = vadd.f32 %v888, %v983
        %v1001 = vadd.f32 %v889, %v987
        %v1002 = vadd.f32 %v890, %v989
        %v1003 = vadd.f32 %v891, %v993
        %v1004 = vadd.f32 %v892, %v995
        %s1005 = scalar_lea.vmem %s1, 320
        %v1006 = vld [vmem:[%s1005] sm:$0xff]
        %v1007 = vld [vmem:[%s1005 + $0x8] sm:$0xff]
        %v1008 = vld [vmem:[%s1005 + $0x10] sm:$0xff]
        %v1009 = vld [vmem:[%s1005 + $0x18] sm:$0xff]
        %v1010 = vld [vmem:[%s1005 + $0x20] sm:$0xff]
        %v1011 = vld [vmem:[%s1005 + $0x28] sm:$0xff]
        %v1012 = vld [vmem:[%s1005 + $0x30] sm:$0xf]
        %v1013 = vld [vmem:[%s1005 + $0x38] sm:$0xf]
        %v1015 = vsel %vm410, %v1012, 0
        %v1018 = vsel %vm410, %v1013, 0
        %1020 = vmatprep.subr.mxu0 %v1007
        %1021 = vmatpush1.msra.mxu0 %v1006
        %1022 = vmatprep.subr.mxu0 %v1009
        %1023 = vmatpush1.msra.mxu0 %v1008
        %1024 = vmatprep.subr.mxu0 %v1011
        %1025 = vmatpush1.msra.mxu0 %v1010
        %1026 = vmatprep.subr.mxu0 %v1018
        %1027 = vmatpush1.msra.mxu0 %v1015
        %1028 = vmatprep.subr.mxu0 0.0
        %1029 = vmatpush1.msra.mxu0 0.0
        %1030 = vmatprep.subr.mxu0 0.0
        %1031 = vmatpush1.msra.mxu0 0.0
        %1032 = vmatprep.subr.mxu0 0.0
        %1033 = vmatpush1.msra.mxu0 0.0
        %1034 = vmatprep.subr.mxu0 0.0
        %1035 = vmatpush1.msra.mxu0 0.0
        %1036 = vmatprep.subr.mxu0 0.0
        %1037 = vmatpush1.msra.mxu0 0.0
        %1038 = vmatprep.subr.mxu0 0.0
        %1039 = vmatpush1.msra.mxu0 0.0
        %1040 = vmatprep.subr.mxu0 0.0
        %1041 = vmatpush1.msra.mxu0 0.0
        %1042 = vmatprep.subr.mxu0 0.0
        %1043 = vmatpush1.msra.mxu0 0.0
        %1044 = vmatprep.subr.mxu0 0.0
        %1045 = vmatpush1.msra.mxu0 0.0
        %1046 = vmatprep.subr.mxu0 0.0
        %1047 = vmatpush1.msra.mxu0 0.0
        %1048 = vmatprep.subr.mxu0 0.0
        %1049 = vmatpush1.msra.mxu0 0.0
        %1050 = vmatprep.subr.mxu0 0.0
        %1051 = vmatpush1.msra.mxu0 0.0
        %1052 = vmatprep.subr.mxu0 0.0
        %1053 = vmatpush1.msra.mxu0 0.0
        %1054 = vmatprep.subr.mxu0 0.0
        %1055 = vmatpush1.msra.mxu0 0.0
        %1056 = vmatprep.subr.mxu0 0.0
        %1057 = vmatpush1.msra.mxu0 0.0
        %1058 = vmatprep.subr.mxu0 0.0
        %1059 = vmatpush1.msra.mxu0 0.0
        %1060 = vmatprep.subr.mxu0 0.0
        %1061 = vmatpush1.msra.mxu0 0.0
        %1062 = vmatprep.subr.mxu0 0.0
        %1063 = vmatpush1.msra.mxu0 0.0
        %1064 = vmatprep.subr.mxu0 0.0
        %1065 = vmatpush1.msra.mxu0 0.0
        %1066 = vmatprep.subr.mxu0 0.0
        %1067 = vmatpush1.msra.mxu0 0.0
        %1068 = vmatprep.subr.mxu0 0.0
        %1069 = vmatpush1.msra.mxu0 0.0
        %1070 = vmatprep.subr.mxu0 0.0
        %1071 = vmatpush1.msra.mxu0 0.0
        %1072 = vmatprep.subr.mxu0 0.0
        %1073 = vmatpush1.msra.mxu0 0.0
        %1074 = vmatprep.subr.mxu0 0.0
        %1075 = vmatpush1.msra.mxu0 0.0
        %1076 = vmatprep.subr.mxu0 0.0
        %1077 = vmatpush1.msra.mxu0 0.0
        %1078 = vmatprep.subr.mxu0 0.0
        %1079 = vmatpush1.msra.mxu0 0.0
        %1080 = vmatprep.subr.mxu0 0.0
        %1081 = vmatpush1.msra.mxu0 0.0
        %1082 = vmatprep.subr.mxu0 0.0
        %1083 = vmatpush1.msra.mxu0 0.0
        %1084 = vmatprep.mubr.f32.mxu0 0.0
        %1085 = vmatmul.mubr.f32.gmra.mrb[0].mxu0 %v670
        %v1086 = vpop.f32.mrb[0].mxu0
        %v1087 = vadd.f32 0.0, %v1086
        %v1088 = vpop.f32.mrb[0].mxu0
        %v1089 = vadd.f32 0.0, %v1088
        %1090 = vmatprep.mubr.f32.mxu0 0.0
        %1091 = vmatmul.mubr.f32.gmra.mrb[0].mxu0 %v672
        %v1092 = vpop.f32.mrb[0].mxu0
        %v1093 = vadd.f32 0.0, %v1092
        %v1094 = vpop.f32.mrb[0].mxu0
        %v1095 = vadd.f32 0.0, %v1094
        %1096 = vmatprep.mubr.f32.mxu0 0.0
        %1097 = vmatmul.mubr.f32.gmra.mrb[0].mxu0 %v674
        %v1098 = vpop.f32.mrb[0].mxu0
        %v1099 = vadd.f32 0.0, %v1098
        %v1100 = vpop.f32.mrb[0].mxu0
        %v1101 = vadd.f32 0.0, %v1100
        %1102 = vmatprep.mubr.f32.mxu0 0.0
        %1103 = vmatmul.mubr.f32.gmra.mrb[0].mxu0 %v676
        %v1104 = vpop.f32.mrb[0].mxu0
        %v1105 = vadd.f32 0.0, %v1104
        %v1106 = vpop.f32.mrb[0].mxu0
        %v1107 = vadd.f32 0.0, %v1106
        %1108 = vdwg.mxu0
        %v1109 = vadd.f32 %v997, %v1087
        %v1110 = vadd.f32 %v998, %v1089
        %v1111 = vadd.f32 %v999, %v1093
        %v1112 = vadd.f32 %v1000, %v1095
        %v1113 = vadd.f32 %v1001, %v1099
        %v1114 = vadd.f32 %v1002, %v1101
        %v1115 = vadd.f32 %v1003, %v1105
        %v1116 = vadd.f32 %v1004, %v1107
        %v1117 = vmax.f32 %v773, %v1109
        %v1118 = vmax.f32 %v774, %v1110
        %v1119 = vmax.f32 %v775, %v1111
        %v1120 = vmax.f32 %v776, %v1112
        %v1121 = vmax.f32 %v777, %v1113
        %v1122 = vmax.f32 %v778, %v1114
        %v1123 = vmax.f32 %v779, %v1115
        %v1124 = vmax.f32 %v780, %v1116
        %v1125 = vld [vmem:[%s3] sm:$0xff]
        %v1126 = vld [vmem:[%s3 + $0x8] sm:$0x1f]
        %vm1127 = vcmask 211968
        %v1129 = vsel %vm1127, %v1125, 0
        %v1132 = vsel %vm1127, %v1126, 0
        %vm1134 = vcmask 1041408
        %v1136 = vsel %vm1134, %v1123, 0
        %v1139 = vsel %vm1134, %v1124, 0
        %1141 = vmatprep.subr.mxu0 %v1118
        %1142 = vmatpush1.msra.mxu0 %v1117
        %1143 = vmatprep.subr.mxu0 %v1120
        %1144 = vmatpush1.msra.mxu0 %v1119
        %1145 = vmatprep.subr.mxu0 %v1122
        %1146 = vmatpush1.msra.mxu0 %v1121
        %1147 = vmatprep.subr.mxu0 %v1139
        %1148 = vmatpush1.msra.mxu0 %v1136
        %1149 = vmatprep.subr.mxu0 0.0
        %1150 = vmatpush1.msra.mxu0 0.0
        %1151 = vmatprep.subr.mxu0 0.0
        %1152 = vmatpush1.msra.mxu0 0.0
        %1153 = vmatprep.subr.mxu0 0.0
        %1154 = vmatpush1.msra.mxu0 0.0
        %1155 = vmatprep.subr.mxu0 0.0
        %1156 = vmatpush1.msra.mxu0 0.0
        %1157 = vmatprep.subr.mxu0 0.0
        %1158 = vmatpush1.msra.mxu0 0.0
        %1159 = vmatprep.subr.mxu0 0.0
        %1160 = vmatpush1.msra.mxu0 0.0
        %1161 = vmatprep.subr.mxu0 0.0
        %1162 = vmatpush1.msra.mxu0 0.0
        %1163 = vmatprep.subr.mxu0 0.0
        %1164 = vmatpush1.msra.mxu0 0.0
        %1165 = vmatprep.subr.mxu0 0.0
        %1166 = vmatpush1.msra.mxu0 0.0
        %1167 = vmatprep.subr.mxu0 0.0
        %1168 = vmatpush1.msra.mxu0 0.0
        %1169 = vmatprep.subr.mxu0 0.0
        %1170 = vmatpush1.msra.mxu0 0.0
        %1171 = vmatprep.subr.mxu0 0.0
        %1172 = vmatpush1.msra.mxu0 0.0
        %1173 = vmatprep.subr.mxu0 0.0
        %1174 = vmatpush1.msra.mxu0 0.0
        %1175 = vmatprep.subr.mxu0 0.0
        %1176 = vmatpush1.msra.mxu0 0.0
        %1177 = vmatprep.subr.mxu0 0.0
        %1178 = vmatpush1.msra.mxu0 0.0
        %1179 = vmatprep.subr.mxu0 0.0
        %1180 = vmatpush1.msra.mxu0 0.0
        %1181 = vmatprep.subr.mxu0 0.0
        %1182 = vmatpush1.msra.mxu0 0.0
        %1183 = vmatprep.subr.mxu0 0.0
        %1184 = vmatpush1.msra.mxu0 0.0
        %1185 = vmatprep.subr.mxu0 0.0
        %1186 = vmatpush1.msra.mxu0 0.0
        %1187 = vmatprep.subr.mxu0 0.0
        %1188 = vmatpush1.msra.mxu0 0.0
        %1189 = vmatprep.subr.mxu0 0.0
        %1190 = vmatpush1.msra.mxu0 0.0
        %1191 = vmatprep.subr.mxu0 0.0
        %1192 = vmatpush1.msra.mxu0 0.0
        %1193 = vmatprep.subr.mxu0 0.0
        %1194 = vmatpush1.msra.mxu0 0.0
        %1195 = vmatprep.subr.mxu0 0.0
        %1196 = vmatpush1.msra.mxu0 0.0
        %1197 = vmatprep.subr.mxu0 0.0
        %1198 = vmatpush1.msra.mxu0 0.0
        %1199 = vmatprep.subr.mxu0 0.0
        %1200 = vmatpush1.msra.mxu0 0.0
        %1201 = vmatprep.subr.mxu0 0.0
        %1202 = vmatpush1.msra.mxu0 0.0
        %1203 = vmatprep.subr.mxu0 0.0
        %1204 = vmatpush1.msra.mxu0 0.0
        %1205 = vmatprep.mubr.f32.mxu0 0.0
        %1206 = vmatmul.mubr.f32.gmra.mrb[0].mxu0 %v1129
        %v1207 = vpop.f32.mrb[0].mxu0
        %v1208 = vadd.f32 0.0, %v1207
        %v1209 = vpop.f32.mrb[0].mxu0
        %v1210 = vadd.f32 0.0, %v1209
        %1211 = vmatprep.mubr.f32.mxu0 0.0
        %1212 = vmatmul.mubr.f32.gmra.mrb[0].mxu0 %v1132
        %v1213 = vpop.f32.mrb[0].mxu0
        %v1214 = vadd.f32 0.0, %v1213
        %v1215 = vpop.f32.mrb[0].mxu0
        %v1216 = vadd.f32 0.0, %v1215
        %1217 = vdwg.mxu0
        %s1218 = scalar_lea.vmem %s3, 16
        %v1219 = vld [vmem:[%s1218] sm:$0xff]
        %v1220 = vld [vmem:[%s1218 + $0x8] sm:$0x1f]
        %v1222 = vsel %vm1127, %v1219, 0
        %v1225 = vsel %vm1127, %v1220, 0
        %1227 = vmatprep.subr.mxu0 %v1118
        %1228 = vmatpush1.msra.mxu0 %v1117
        %1229 = vmatprep.subr.mxu0 %v1120
        %1230 = vmatpush1.msra.mxu0 %v1119
        %1231 = vmatprep.subr.mxu0 %v1122
        %1232 = vmatpush1.msra.mxu0 %v1121
        %1233 = vmatprep.subr.mxu0 %v1139
        %1234 = vmatpush1.msra.mxu0 %v1136
        %1235 = vmatprep.subr.mxu0 0.0
        %1236 = vmatpush1.msra.mxu0 0.0
        %1237 = vmatprep.subr.mxu0 0.0
        %1238 = vmatpush1.msra.mxu0 0.0
        %1239 = vmatprep.subr.mxu0 0.0
        %1240 = vmatpush1.msra.mxu0 0.0
        %1241 = vmatprep.subr.mxu0 0.0
        %1242 = vmatpush1.msra.mxu0 0.0
        %1243 = vmatprep.subr.mxu0 0.0
        %1244 = vmatpush1.msra.mxu0 0.0
        %1245 = vmatprep.subr.mxu0 0.0
        %1246 = vmatpush1.msra.mxu0 0.0
        %1247 = vmatprep.subr.mxu0 0.0
        %1248 = vmatpush1.msra.mxu0 0.0
        %1249 = vmatprep.subr.mxu0 0.0
        %1250 = vmatpush1.msra.mxu0 0.0
        %1251 = vmatprep.subr.mxu0 0.0
        %1252 = vmatpush1.msra.mxu0 0.0
        %1253 = vmatprep.subr.mxu0 0.0
        %1254 = vmatpush1.msra.mxu0 0.0
        %1255 = vmatprep.subr.mxu0 0.0
        %1256 = vmatpush1.msra.mxu0 0.0
        %1257 = vmatprep.subr.mxu0 0.0
        %1258 = vmatpush1.msra.mxu0 0.0
        %1259 = vmatprep.subr.mxu0 0.0
        %1260 = vmatpush1.msra.mxu0 0.0
        %1261 = vmatprep.subr.mxu0 0.0
        %1262 = vmatpush1.msra.mxu0 0.0
        %1263 = vmatprep.subr.mxu0 0.0
        %1264 = vmatpush1.msra.mxu0 0.0
        %1265 = vmatprep.subr.mxu0 0.0
        %1266 = vmatpush1.msra.mxu0 0.0
        %1267 = vmatprep.subr.mxu0 0.0
        %1268 = vmatpush1.msra.mxu0 0.0
        %1269 = vmatprep.subr.mxu0 0.0
        %1270 = vmatpush1.msra.mxu0 0.0
        %1271 = vmatprep.subr.mxu0 0.0
        %1272 = vmatpush1.msra.mxu0 0.0
        %1273 = vmatprep.subr.mxu0 0.0
        %1274 = vmatpush1.msra.mxu0 0.0
        %1275 = vmatprep.subr.mxu0 0.0
        %1276 = vmatpush1.msra.mxu0 0.0
        %1277 = vmatprep.subr.mxu0 0.0
        %1278 = vmatpush1.msra.mxu0 0.0
        %1279 = vmatprep.subr.mxu0 0.0
        %1280 = vmatpush1.msra.mxu0 0.0
        %1281 = vmatprep.subr.mxu0 0.0
        %1282 = vmatpush1.msra.mxu0 0.0
        %1283 = vmatprep.subr.mxu0 0.0
        %1284 = vmatpush1.msra.mxu0 0.0
        %1285 = vmatprep.subr.mxu0 0.0
        %1286 = vmatpush1.msra.mxu0 0.0
        %1287 = vmatprep.subr.mxu0 0.0
        %1288 = vmatpush1.msra.mxu0 0.0
        %1289 = vmatprep.subr.mxu0 0.0
        %1290 = vmatpush1.msra.mxu0 0.0
        %1291 = vmatprep.mubr.f32.mxu0 0.0
        %1292 = vmatmul.mubr.f32.gmra.mrb[0].mxu0 %v1222
        %v1293 = vpop.f32.mrb[0].mxu0
        %v1294 = vadd.f32 0.0, %v1293
        %v1295 = vpop.f32.mrb[0].mxu0
        %v1296 = vadd.f32 0.0, %v1295
        %1297 = vmatprep.mubr.f32.mxu0 0.0
        %1298 = vmatmul.mubr.f32.gmra.mrb[0].mxu0 %v1225
        %v1299 = vpop.f32.mrb[0].mxu0
        %v1300 = vadd.f32 0.0, %v1299
        %v1301 = vpop.f32.mrb[0].mxu0
        %v1302 = vadd.f32 0.0, %v1301
        %1303 = vdwg.mxu0
        %v1304 = vmax.f32 %v1208, %v1294
        %v1305 = vmax.f32 %v1210, %v1296
        %v1306 = vmax.f32 %v1214, %v1300
        %v1307 = vmax.f32 %v1216, %v1302
        %v1308 = vmax.f32 %v1304, 0.0
        %v1309 = vmax.f32 %v1305, 0.0
        %v1310 = vmax.f32 %v1306, 0.0
        %v1311 = vmax.f32 %v1307, 0.0
        %v1312 = vld [vmem:[%s5] sm:$0x3]
        %v1313 = vld [vmem:[%s4] sm:$0xff]
        %v1314 = vld [vmem:[%s4 + $0x8] sm:$0xff]
        %v1315 = vld [vmem:[%s4 + $0x10] sm:$0xff]
        %v1316 = vld [vmem:[%s4 + $0x18] sm:$0xff]
        %v1317 = vld [vmem:[%s4 + $0x20] sm:$0xff]
        %v1318 = vld [vmem:[%s4 + $0x28] sm:$0xff]
        %v1319 = vld [vmem:[%s4 + $0x30] sm:$0xff]
        %v1320 = vld [vmem:[%s4 + $0x38] sm:$0xff]
        %v1321 = vld [vmem:[%s4 + $0x40] sm:$0xff]
        %v1322 = vld [vmem:[%s4 + $0x48] sm:$0xff]
        %v1323 = vld [vmem:[%s4 + $0x50] sm:$0xff]
        %v1324 = vld [vmem:[%s4 + $0x58] sm:$0xff]
        %v1325 = vld [vmem:[%s4 + $0x60] sm:$0xff]
        %v1326 = vld [vmem:[%s4 + $0x68] sm:$0xff]
        %v1327 = vld [vmem:[%s4 + $0x70] sm:$0xff]
        %v1328 = vld [vmem:[%s4 + $0x78] sm:$0xff]
        %v1329 = vld [vmem:[%s4 + $0x80] sm:$0xff]
        %v1330 = vld [vmem:[%s4 + $0x88] sm:$0xff]
        %v1331 = vld [vmem:[%s4 + $0x90] sm:$0xff]
        %v1332 = vld [vmem:[%s4 + $0x98] sm:$0xff]
        %v1333 = vld [vmem:[%s4 + $0xa0] sm:$0xff]
        %v1334 = vld [vmem:[%s4 + $0xa8] sm:$0xff]
        %v1335 = vld [vmem:[%s4 + $0xb0] sm:$0xff]
        %v1336 = vld [vmem:[%s4 + $0xb8] sm:$0xff]
        %v1337 = vld [vmem:[%s4 + $0xc0] sm:$0xff]
        %v1338 = vld [vmem:[%s4 + $0xc8] sm:$0xff]
        %v1339 = vld [vmem:[%s4 + $0xd0] sm:$0xff]
        %v1340 = vld [vmem:[%s4 + $0xd8] sm:$0xff]
        %v1341 = vld [vmem:[%s4 + $0xe0] sm:$0xff]
        %v1342 = vld [vmem:[%s4 + $0xe8] sm:$0xff]
        %v1343 = vld [vmem:[%s4 + $0xf0] sm:$0xff]
        %v1344 = vld [vmem:[%s4 + $0xf8] sm:$0xff]
        %v1345 = vld [vmem:[%s4 + $0x100] sm:$0xff]
        %v1346 = vld [vmem:[%s4 + $0x108] sm:$0xff]
        %v1347 = vld [vmem:[%s4 + $0x110] sm:$0xff]
        %v1348 = vld [vmem:[%s4 + $0x118] sm:$0xff]
        %v1349 = vld [vmem:[%s4 + $0x120] sm:$0xff]
        %v1350 = vld [vmem:[%s4 + $0x128] sm:$0xff]
        %v1351 = vld [vmem:[%s4 + $0x130] sm:$0xff]
        %v1352 = vld [vmem:[%s4 + $0x138] sm:$0xff]
        %v1353 = vld [vmem:[%s4 + $0x140] sm:$0xff]
        %v1354 = vld [vmem:[%s4 + $0x148] sm:$0xff]
        %v1355 = vld [vmem:[%s4 + $0x150] sm:$0xff]
        %v1356 = vld [vmem:[%s4 + $0x158] sm:$0xff]
        %v1357 = vld [vmem:[%s4 + $0x160] sm:$0xff]
        %v1358 = vld [vmem:[%s4 + $0x168] sm:$0xff]
        %v1359 = vld [vmem:[%s4 + $0x170] sm:$0xff]
        %v1360 = vld [vmem:[%s4 + $0x178] sm:$0xff]
        %v1361 = vld [vmem:[%s4 + $0x180] sm:$0xff]
        %v1362 = vld [vmem:[%s4 + $0x188] sm:$0xff]
        %v1363 = vld [vmem:[%s4 + $0x190] sm:$0xff]
        %v1364 = vld [vmem:[%s4 + $0x198] sm:$0xff]
        %vm1365 = vcmask 654336
        %v1367 = vsel %vm1365, %v1309, 0
        %v1370 = vsel %vm1365, %v1311, 0
        %1372 = vmatprep.subr.mxu0 %v1314
        %1373 = vmatpush1.msra.mxu0 %v1313
        %1374 = vmatprep.subr.mxu0 %v1316
        %1375 = vmatpush1.msra.mxu0 %v1315
        %1376 = vmatprep.subr.mxu0 %v1318
        %1377 = vmatpush1.msra.mxu0 %v1317
        %1378 = vmatprep.subr.mxu0 %v1320
        %1379 = vmatpush1.msra.mxu0 %v1319
        %1380 = vmatprep.subr.mxu0 %v1322
        %1381 = vmatpush1.msra.mxu0 %v1321
        %1382 = vmatprep.subr.mxu0 %v1324
        %1383 = vmatpush1.msra.mxu0 %v1323
        %1384 = vmatprep.subr.mxu0 %v1326
        %1385 = vmatpush1.msra.mxu0 %v1325
        %1386 = vmatprep.subr.mxu0 %v1328
        %1387 = vmatpush1.msra.mxu0 %v1327
        %1388 = vmatprep.subr.mxu0 %v1330
        %1389 = vmatpush1.msra.mxu0 %v1329
        %1390 = vmatprep.subr.mxu0 %v1332
        %1391 = vmatpush1.msra.mxu0 %v1331
        %1392 = vmatprep.subr.mxu0 %v1334
        %1393 = vmatpush1.msra.mxu0 %v1333
        %1394 = vmatprep.subr.mxu0 %v1336
        %1395 = vmatpush1.msra.mxu0 %v1335
        %1396 = vmatprep.subr.mxu0 %v1338
        %1397 = vmatpush1.msra.mxu0 %v1337
        %1398 = vmatprep.subr.mxu0 %v1340
        %1399 = vmatpush1.msra.mxu0 %v1339
        %1400 = vmatprep.subr.mxu0 %v1342
        %1401 = vmatpush1.msra.mxu0 %v1341
        %1402 = vmatprep.subr.mxu0 %v1344
        %1403 = vmatpush1.msra.mxu0 %v1343
        %1404 = vmatprep.subr.mxu0 %v1346
        %1405 = vmatpush1.msra.mxu0 %v1345
        %1406 = vmatprep.subr.mxu0 %v1348
        %1407 = vmatpush1.msra.mxu0 %v1347
        %1408 = vmatprep.subr.mxu0 %v1350
        %1409 = vmatpush1.msra.mxu0 %v1349
        %1410 = vmatprep.subr.mxu0 %v1352
        %1411 = vmatpush1.msra.mxu0 %v1351
        %1412 = vmatprep.subr.mxu0 %v1354
        %1413 = vmatpush1.msra.mxu0 %v1353
        %1414 = vmatprep.subr.mxu0 %v1356
        %1415 = vmatpush1.msra.mxu0 %v1355
        %1416 = vmatprep.subr.mxu0 %v1358
        %1417 = vmatpush1.msra.mxu0 %v1357
        %1418 = vmatprep.subr.mxu0 %v1360
        %1419 = vmatpush1.msra.mxu0 %v1359
        %1420 = vmatprep.subr.mxu0 %v1362
        %1421 = vmatpush1.msra.mxu0 %v1361
        %1422 = vmatprep.subr.mxu0 %v1364
        %1423 = vmatpush1.msra.mxu0 %v1363
        %1424 = vmatprep.subr.mxu0 0.0
        %1425 = vmatpush1.msra.mxu0 0.0
        %1426 = vmatprep.subr.mxu0 0.0
        %1427 = vmatpush1.msra.mxu0 0.0
        %1428 = vmatprep.subr.mxu0 0.0
        %1429 = vmatpush1.msra.mxu0 0.0
        %1430 = vmatprep.subr.mxu0 0.0
        %1431 = vmatpush1.msra.mxu0 0.0
        %1432 = vmatprep.subr.mxu0 0.0
        %1433 = vmatpush1.msra.mxu0 0.0
        %1434 = vmatprep.subr.mxu0 0.0
        %1435 = vmatpush1.msra.mxu0 0.0
        %1436 = vmatprep.mubr.f32.mxu0 %v1367
        %1437 = vmatmul.mubr.f32.gmra.mrb[0].mxu0 %v1308
        %v1438 = vpop.f32.mrb[0].mxu0
        %v1439 = vadd.f32 0.0, %v1438
        %v1440 = vpop.f32.mrb[0].mxu0
        %v1441 = vadd.f32 0.0, %v1440
        %1442 = vmatprep.mubr.f32.mxu0 %v1370
        %1443 = vmatmul.mubr.f32.gmra.mrb[0].mxu0 %v1310
        %v1444 = vpop.f32.mrb[0].mxu0
        %v1445 = vadd.f32 0.0, %v1444
        %v1446 = vpop.f32.mrb[0].mxu0
        %v1447 = vadd.f32 0.0, %v1446
        %1448 = vdwg.mxu0
        %v1450 = vlaneseq
        %v1451 = vshrl.u32 %v1450, 7
        %v1452 = vsub.s32 0, %v1451
        %v1453 = vrot.slane %v1312, %v1452
        %v1454 = vlaneseq
        %v1455 = vshrl.u32 %v1454, 7
        %v1456 = vsub.s32 1, %v1455
        %v1457 = vrot.slane %v1312, %v1456
        %v1460 = vadd.f32 %v1453, %v1439
        %v1461 = vadd.f32 %v1457, %v1441
        %v1462 = vadd.f32 %v1453, %v1445
        %v1463 = vadd.f32 %v1457, %v1447
        %s1464 = scalar_lea.vmem %s4, 416
        %v1465 = vld [vmem:[%s1464] sm:$0xff]
        %v1466 = vld [vmem:[%s1464 + $0x8] sm:$0xff]
        %v1467 = vld [vmem:[%s1464 + $0x10] sm:$0xff]
        %v1468 = vld [vmem:[%s1464 + $0x18] sm:$0xff]
        %v1469 = vld [vmem:[%s1464 + $0x20] sm:$0xff]
        %v1470 = vld [vmem:[%s1464 + $0x28] sm:$0xff]
        %v1471 = vld [vmem:[%s1464 + $0x30] sm:$0xff]
        %v1472 = vld [vmem:[%s1464 + $0x38] sm:$0xff]
        %v1473 = vld [vmem:[%s1464 + $0x40] sm:$0xff]
        %v1474 = vld [vmem:[%s1464 + $0x48] sm:$0xff]
        %v1475 = vld [vmem:[%s1464 + $0x50] sm:$0xff]
        %v1476 = vld [vmem:[%s1464 + $0x58] sm:$0xff]
        %v1477 = vld [vmem:[%s1464 + $0x60] sm:$0xff]
        %v1478 = vld [vmem:[%s1464 + $0x68] sm:$0xff]
        %v1479 = vld [vmem:[%s1464 + $0x70] sm:$0xff]
        %v1480 = vld [vmem:[%s1464 + $0x78] sm:$0xff]
        %v1481 = vld [vmem:[%s1464 + $0x80] sm:$0xff]
        %v1482 = vld [vmem:[%s1464 + $0x88] sm:$0xff]
        %v1483 = vld [vmem:[%s1464 + $0x90] sm:$0xff]
        %v1484 = vld [vmem:[%s1464 + $0x98] sm:$0xff]
        %v1485 = vld [vmem:[%s1464 + $0xa0] sm:$0xff]
        %v1486 = vld [vmem:[%s1464 + $0xa8] sm:$0xff]
        %v1487 = vld [vmem:[%s1464 + $0xb0] sm:$0xff]
        %v1488 = vld [vmem:[%s1464 + $0xb8] sm:$0xff]
        %v1489 = vld [vmem:[%s1464 + $0xc0] sm:$0xff]
        %v1490 = vld [vmem:[%s1464 + $0xc8] sm:$0xff]
        %v1491 = vld [vmem:[%s1464 + $0xd0] sm:$0xff]
        %v1492 = vld [vmem:[%s1464 + $0xd8] sm:$0xff]
        %v1493 = vld [vmem:[%s1464 + $0xe0] sm:$0xff]
        %v1494 = vld [vmem:[%s1464 + $0xe8] sm:$0xff]
        %v1495 = vld [vmem:[%s1464 + $0xf0] sm:$0xff]
        %v1496 = vld [vmem:[%s1464 + $0xf8] sm:$0xff]
        %v1497 = vld [vmem:[%s1464 + $0x100] sm:$0xff]
        %v1498 = vld [vmem:[%s1464 + $0x108] sm:$0xff]
        %v1499 = vld [vmem:[%s1464 + $0x110] sm:$0xff]
        %v1500 = vld [vmem:[%s1464 + $0x118] sm:$0xff]
        %v1501 = vld [vmem:[%s1464 + $0x120] sm:$0xff]
        %v1502 = vld [vmem:[%s1464 + $0x128] sm:$0xff]
        %v1503 = vld [vmem:[%s1464 + $0x130] sm:$0xff]
        %v1504 = vld [vmem:[%s1464 + $0x138] sm:$0xff]
        %v1505 = vld [vmem:[%s1464 + $0x140] sm:$0xff]
        %v1506 = vld [vmem:[%s1464 + $0x148] sm:$0xff]
        %v1507 = vld [vmem:[%s1464 + $0x150] sm:$0xff]
        %v1508 = vld [vmem:[%s1464 + $0x158] sm:$0xff]
        %v1509 = vld [vmem:[%s1464 + $0x160] sm:$0xff]
        %v1510 = vld [vmem:[%s1464 + $0x168] sm:$0xff]
        %v1511 = vld [vmem:[%s1464 + $0x170] sm:$0xff]
        %v1512 = vld [vmem:[%s1464 + $0x178] sm:$0xff]
        %v1513 = vld [vmem:[%s1464 + $0x180] sm:$0xff]
        %v1514 = vld [vmem:[%s1464 + $0x188] sm:$0xff]
        %v1515 = vld [vmem:[%s1464 + $0x190] sm:$0xff]
        %v1516 = vld [vmem:[%s1464 + $0x198] sm:$0xff]
        %v1519 = vrot.slane %v1308, 1
        %v1520 = vrot.slane %v1310, 1
        %v1521 = vsel %vm534, %v1519, %v1520
        %v1522 = vrot.slane %v1309, 1
        %v1523 = vrot.slane %v1311, 1
        %v1524 = vsel %vm534, %v1522, %v1523
        %v1527 = vsel %vm1365, %v1524, 0
        %v1529 = vsel %vm1365, %v1523, 0
        %1531 = vmatprep.subr.mxu0 %v1466
        %1532 = vmatpush1.msra.mxu0 %v1465
        %1533 = vmatprep.subr.mxu0 %v1468
        %1534 = vmatpush1.msra.mxu0 %v1467
        %1535 = vmatprep.subr.mxu0 %v1470
        %1536 = vmatpush1.msra.mxu0 %v1469
        %1537 = vmatprep.subr.mxu0 %v1472
        %1538 = vmatpush1.msra.mxu0 %v1471
        %1539 = vmatprep.subr.mxu0 %v1474
        %1540 = vmatpush1.msra.mxu0 %v1473
        %1541 = vmatprep.subr.mxu0 %v1476
        %1542 = vmatpush1.msra.mxu0 %v1475
        %1543 = vmatprep.subr.mxu0 %v1478
        %1544 = vmatpush1.msra.mxu0 %v1477
        %1545 = vmatprep.subr.mxu0 %v1480
        %1546 = vmatpush1.msra.mxu0 %v1479
        %1547 = vmatprep.subr.mxu0 %v1482
        %1548 = vmatpush1.msra.mxu0 %v1481
        %1549 = vmatprep.subr.mxu0 %v1484
        %1550 = vmatpush1.msra.mxu0 %v1483
        %1551 = vmatprep.subr.mxu0 %v1486
        %1552 = vmatpush1.msra.mxu0 %v1485
        %1553 = vmatprep.subr.mxu0 %v1488
        %1554 = vmatpush1.msra.mxu0 %v1487
        %1555 = vmatprep.subr.mxu0 %v1490
        %1556 = vmatpush1.msra.mxu0 %v1489
        %1557 = vmatprep.subr.mxu0 %v1492
        %1558 = vmatpush1.msra.mxu0 %v1491
        %1559 = vmatprep.subr.mxu0 %v1494
        %1560 = vmatpush1.msra.mxu0 %v1493
        %1561 = vmatprep.subr.mxu0 %v1496
        %1562 = vmatpush1.msra.mxu0 %v1495
        %1563 = vmatprep.subr.mxu0 %v1498
        %1564 = vmatpush1.msra.mxu0 %v1497
        %1565 = vmatprep.subr.mxu0 %v1500
        %1566 = vmatpush1.msra.mxu0 %v1499
        %1567 = vmatprep.subr.mxu0 %v1502
        %1568 = vmatpush1.msra.mxu0 %v1501
        %1569 = vmatprep.subr.mxu0 %v1504
        %1570 = vmatpush1.msra.mxu0 %v1503
        %1571 = vmatprep.subr.mxu0 %v1506
        %1572 = vmatpush1.msra.mxu0 %v1505
        %1573 = vmatprep.subr.mxu0 %v1508
        %1574 = vmatpush1.msra.mxu0 %v1507
        %1575 = vmatprep.subr.mxu0 %v1510
        %1576 = vmatpush1.msra.mxu0 %v1509
        %1577 = vmatprep.subr.mxu0 %v1512
        %1578 = vmatpush1.msra.mxu0 %v1511
        %1579 = vmatprep.subr.mxu0 %v1514
        %1580 = vmatpush1.msra.mxu0 %v1513
        %1581 = vmatprep.subr.mxu0 %v1516
        %1582 = vmatpush1.msra.mxu0 %v1515
        %1583 = vmatprep.subr.mxu0 0.0
        %1584 = vmatpush1.msra.mxu0 0.0
        %1585 = vmatprep.subr.mxu0 0.0
        %1586 = vmatpush1.msra.mxu0 0.0
        %1587 = vmatprep.subr.mxu0 0.0
        %1588 = vmatpush1.msra.mxu0 0.0
        %1589 = vmatprep.subr.mxu0 0.0
        %1590 = vmatpush1.msra.mxu0 0.0
        %1591 = vmatprep.subr.mxu0 0.0
        %1592 = vmatpush1.msra.mxu0 0.0
        %1593 = vmatprep.subr.mxu0 0.0
        %1594 = vmatpush1.msra.mxu0 0.0
        %1595 = vmatprep.mubr.f32.mxu0 %v1527
        %1596 = vmatmul.mubr.f32.gmra.mrb[0].mxu0 %v1521
        %v1597 = vpop.f32.mrb[0].mxu0
        %v1598 = vadd.f32 0.0, %v1597
        %v1599 = vpop.f32.mrb[0].mxu0
        %v1600 = vadd.f32 0.0, %v1599
        %1601 = vmatprep.mubr.f32.mxu0 %v1529
        %1602 = vmatmul.mubr.f32.gmra.mrb[0].mxu0 %v1520
        %v1603 = vpop.f32.mrb[0].mxu0
        %v1604 = vadd.f32 0.0, %v1603
        %v1605 = vpop.f32.mrb[0].mxu0
        %v1606 = vadd.f32 0.0, %v1605
        %1607 = vdwg.mxu0
        %v1608 = vadd.f32 %v1460, %v1598
        %v1609 = vadd.f32 %v1461, %v1600
        %v1610 = vadd.f32 %v1462, %v1604
        %v1611 = vadd.f32 %v1463, %v1606
        %s1612 = scalar_lea.vmem %s4, 832
        %v1613 = vld [vmem:[%s1612] sm:$0xff]
        %v1614 = vld [vmem:[%s1612 + $0x8] sm:$0xff]
        %v1615 = vld [vmem:[%s1612 + $0x10] sm:$0xff]
        %v1616 = vld [vmem:[%s1612 + $0x18] sm:$0xff]
        %v1617 = vld [vmem:[%s1612 + $0x20] sm:$0xff]
        %v1618 = vld [vmem:[%s1612 + $0x28] sm:$0xff]
        %v1619 = vld [vmem:[%s1612 + $0x30] sm:$0xff]
        %v1620 = vld [vmem:[%s1612 + $0x38] sm:$0xff]
        %v1621 = vld [vmem:[%s1612 + $0x40] sm:$0xff]
        %v1622 = vld [vmem:[%s1612 + $0x48] sm:$0xff]
        %v1623 = vld [vmem:[%s1612 + $0x50] sm:$0xff]
        %v1624 = vld [vmem:[%s1612 + $0x58] sm:$0xff]
        %v1625 = vld [vmem:[%s1612 + $0x60] sm:$0xff]
        %v1626 = vld [vmem:[%s1612 + $0x68] sm:$0xff]
        %v1627 = vld [vmem:[%s1612 + $0x70] sm:$0xff]
        %v1628 = vld [vmem:[%s1612 + $0x78] sm:$0xff]
        %v1629 = vld [vmem:[%s1612 + $0x80] sm:$0xff]
        %v1630 = vld [vmem:[%s1612 + $0x88] sm:$0xff]
        %v1631 = vld [vmem:[%s1612 + $0x90] sm:$0xff]
        %v1632 = vld [vmem:[%s1612 + $0x98] sm:$0xff]
        %v1633 = vld [vmem:[%s1612 + $0xa0] sm:$0xff]
        %v1634 = vld [vmem:[%s1612 + $0xa8] sm:$0xff]
        %v1635 = vld [vmem:[%s1612 + $0xb0] sm:$0xff]
        %v1636 = vld [vmem:[%s1612 + $0xb8] sm:$0xff]
        %v1637 = vld [vmem:[%s1612 + $0xc0] sm:$0xff]
        %v1638 = vld [vmem:[%s1612 + $0xc8] sm:$0xff]
        %v1639 = vld [vmem:[%s1612 + $0xd0] sm:$0xff]
        %v1640 = vld [vmem:[%s1612 + $0xd8] sm:$0xff]
        %v1641 = vld [vmem:[%s1612 + $0xe0] sm:$0xff]
        %v1642 = vld [vmem:[%s1612 + $0xe8] sm:$0xff]
        %v1643 = vld [vmem:[%s1612 + $0xf0] sm:$0xff]
        %v1644 = vld [vmem:[%s1612 + $0xf8] sm:$0xff]
        %v1645 = vld [vmem:[%s1612 + $0x100] sm:$0xff]
        %v1646 = vld [vmem:[%s1612 + $0x108] sm:$0xff]
        %v1647 = vld [vmem:[%s1612 + $0x110] sm:$0xff]
        %v1648 = vld [vmem:[%s1612 + $0x118] sm:$0xff]
        %v1649 = vld [vmem:[%s1612 + $0x120] sm:$0xff]
        %v1650 = vld [vmem:[%s1612 + $0x128] sm:$0xff]
        %v1651 = vld [vmem:[%s1612 + $0x130] sm:$0xff]
        %v1652 = vld [vmem:[%s1612 + $0x138] sm:$0xff]
        %v1653 = vld [vmem:[%s1612 + $0x140] sm:$0xff]
        %v1654 = vld [vmem:[%s1612 + $0x148] sm:$0xff]
        %v1655 = vld [vmem:[%s1612 + $0x150] sm:$0xff]
        %v1656 = vld [vmem:[%s1612 + $0x158] sm:$0xff]
        %v1657 = vld [vmem:[%s1612 + $0x160] sm:$0xff]
        %v1658 = vld [vmem:[%s1612 + $0x168] sm:$0xff]
        %v1659 = vld [vmem:[%s1612 + $0x170] sm:$0xff]
        %v1660 = vld [vmem:[%s1612 + $0x178] sm:$0xff]
        %v1661 = vld [vmem:[%s1612 + $0x180] sm:$0xff]
        %v1662 = vld [vmem:[%s1612 + $0x188] sm:$0xff]
        %v1663 = vld [vmem:[%s1612 + $0x190] sm:$0xff]
        %v1664 = vld [vmem:[%s1612 + $0x198] sm:$0xff]
        %v1665 = vrot.slane %v1308, 2
        %v1666 = vrot.slane %v1310, 2
        %v1667 = vsel %vm662, %v1665, %v1666
        %v1668 = vrot.slane %v1309, 2
        %v1669 = vrot.slane %v1311, 2
        %v1670 = vsel %vm662, %v1668, %v1669
        %v1673 = vsel %vm1365, %v1670, 0
        %v1675 = vsel %vm1365, %v1669, 0
        %1677 = vmatprep.subr.mxu0 %v1614
        %1678 = vmatpush1.msra.mxu0 %v1613
        %1679 = vmatprep.subr.mxu0 %v1616
        %1680 = vmatpush1.msra.mxu0 %v1615
        %1681 = vmatprep.subr.mxu0 %v1618
        %1682 = vmatpush1.msra.mxu0 %v1617
        %1683 = vmatprep.subr.mxu0 %v1620
        %1684 = vmatpush1.msra.mxu0 %v1619
        %1685 = vmatprep.subr.mxu0 %v1622
        %1686 = vmatpush1.msra.mxu0 %v1621
        %1687 = vmatprep.subr.mxu0 %v1624
        %1688 = vmatpush1.msra.mxu0 %v1623
        %1689 = vmatprep.subr.mxu0 %v1626
        %1690 = vmatpush1.msra.mxu0 %v1625
        %1691 = vmatprep.subr.mxu0 %v1628
        %1692 = vmatpush1.msra.mxu0 %v1627
        %1693 = vmatprep.subr.mxu0 %v1630
        %1694 = vmatpush1.msra.mxu0 %v1629
        %1695 = vmatprep.subr.mxu0 %v1632
        %1696 = vmatpush1.msra.mxu0 %v1631
        %1697 = vmatprep.subr.mxu0 %v1634
        %1698 = vmatpush1.msra.mxu0 %v1633
        %1699 = vmatprep.subr.mxu0 %v1636
        %1700 = vmatpush1.msra.mxu0 %v1635
        %1701 = vmatprep.subr.mxu0 %v1638
        %1702 = vmatpush1.msra.mxu0 %v1637
        %1703 = vmatprep.subr.mxu0 %v1640
        %1704 = vmatpush1.msra.mxu0 %v1639
        %1705 = vmatprep.subr.mxu0 %v1642
        %1706 = vmatpush1.msra.mxu0 %v1641
        %1707 = vmatprep.subr.mxu0 %v1644
        %1708 = vmatpush1.msra.mxu0 %v1643
        %1709 = vmatprep.subr.mxu0 %v1646
        %1710 = vmatpush1.msra.mxu0 %v1645
        %1711 = vmatprep.subr.mxu0 %v1648
        %1712 = vmatpush1.msra.mxu0 %v1647
        %1713 = vmatprep.subr.mxu0 %v1650
        %1714 = vmatpush1.msra.mxu0 %v1649
        %1715 = vmatprep.subr.mxu0 %v1652
        %1716 = vmatpush1.msra.mxu0 %v1651
        %1717 = vmatprep.subr.mxu0 %v1654
        %1718 = vmatpush1.msra.mxu0 %v1653
        %1719 = vmatprep.subr.mxu0 %v1656
        %1720 = vmatpush1.msra.mxu0 %v1655
        %1721 = vmatprep.subr.mxu0 %v1658
        %1722 = vmatpush1.msra.mxu0 %v1657
        %1723 = vmatprep.subr.mxu0 %v1660
        %1724 = vmatpush1.msra.mxu0 %v1659
        %1725 = vmatprep.subr.mxu0 %v1662
        %1726 = vmatpush1.msra.mxu0 %v1661
        %1727 = vmatprep.subr.mxu0 %v1664
        %1728 = vmatpush1.msra.mxu0 %v1663
        %1729 = vmatprep.subr.mxu0 0.0
        %1730 = vmatpush1.msra.mxu0 0.0
        %1731 = vmatprep.subr.mxu0 0.0
        %1732 = vmatpush1.msra.mxu0 0.0
        %1733 = vmatprep.subr.mxu0 0.0
        %1734 = vmatpush1.msra.mxu0 0.0
        %1735 = vmatprep.subr.mxu0 0.0
        %1736 = vmatpush1.msra.mxu0 0.0
        %1737 = vmatprep.subr.mxu0 0.0
        %1738 = vmatpush1.msra.mxu0 0.0
        %1739 = vmatprep.subr.mxu0 0.0
        %1740 = vmatpush1.msra.mxu0 0.0
        %1741 = vmatprep.mubr.f32.mxu0 %v1673
        %1742 = vmatmul.mubr.f32.gmra.mrb[0].mxu0 %v1667
        %v1743 = vpop.f32.mrb[0].mxu0
        %v1744 = vadd.f32 0.0, %v1743
        %v1745 = vpop.f32.mrb[0].mxu0
        %v1746 = vadd.f32 0.0, %v1745
        %1747 = vmatprep.mubr.f32.mxu0 %v1675
        %1748 = vmatmul.mubr.f32.gmra.mrb[0].mxu0 %v1666
        %v1749 = vpop.f32.mrb[0].mxu0
        %v1750 = vadd.f32 0.0, %v1749
        %v1751 = vpop.f32.mrb[0].mxu0
        %v1752 = vadd.f32 0.0, %v1751
        %1753 = vdwg.mxu0
        %v1754 = vadd.f32 %v1608, %v1744
        %v1755 = vadd.f32 %v1609, %v1746
        %v1756 = vadd.f32 %v1610, %v1750
        %v1757 = vadd.f32 %v1611, %v1752
        %s1758 = scalar_lea.vmem %s4, 1248
        %v1759 = vld [vmem:[%s1758] sm:$0xff]
        %v1760 = vld [vmem:[%s1758 + $0x8] sm:$0xff]
        %v1761 = vld [vmem:[%s1758 + $0x10] sm:$0xff]
        %v1762 = vld [vmem:[%s1758 + $0x18] sm:$0xff]
        %v1763 = vld [vmem:[%s1758 + $0x20] sm:$0xff]
        %v1764 = vld [vmem:[%s1758 + $0x28] sm:$0xff]
        %v1765 = vld [vmem:[%s1758 + $0x30] sm:$0xff]
        %v1766 = vld [vmem:[%s1758 + $0x38] sm:$0xff]
        %v1767 = vld [vmem:[%s1758 + $0x40] sm:$0xff]
        %v1768 = vld [vmem:[%s1758 + $0x48] sm:$0xff]
        %v1769 = vld [vmem:[%s1758 + $0x50] sm:$0xff]
        %v1770 = vld [vmem:[%s1758 + $0x58] sm:$0xff]
        %v1771 = vld [vmem:[%s1758 + $0x60] sm:$0xff]
        %v1772 = vld [vmem:[%s1758 + $0x68] sm:$0xff]
        %v1773 = vld [vmem:[%s1758 + $0x70] sm:$0xff]
        %v1774 = vld [vmem:[%s1758 + $0x78] sm:$0xff]
        %v1775 = vld [vmem:[%s1758 + $0x80] sm:$0xff]
        %v1776 = vld [vmem:[%s1758 + $0x88] sm:$0xff]
        %v1777 = vld [vmem:[%s1758 + $0x90] sm:$0xff]
        %v1778 = vld [vmem:[%s1758 + $0x98] sm:$0xff]
        %v1779 = vld [vmem:[%s1758 + $0xa0] sm:$0xff]
        %v1780 = vld [vmem:[%s1758 + $0xa8] sm:$0xff]
        %v1781 = vld [vmem:[%s1758 + $0xb0] sm:$0xff]
        %v1782 = vld [vmem:[%s1758 + $0xb8] sm:$0xff]
        %v1783 = vld [vmem:[%s1758 + $0xc0] sm:$0xff]
        %v1784 = vld [vmem:[%s1758 + $0xc8] sm:$0xff]
        %v1785 = vld [vmem:[%s1758 + $0xd0] sm:$0xff]
        %v1786 = vld [vmem:[%s1758 + $0xd8] sm:$0xff]
        %v1787 = vld [vmem:[%s1758 + $0xe0] sm:$0xff]
        %v1788 = vld [vmem:[%s1758 + $0xe8] sm:$0xff]
        %v1789 = vld [vmem:[%s1758 + $0xf0] sm:$0xff]
        %v1790 = vld [vmem:[%s1758 + $0xf8] sm:$0xff]
        %v1791 = vld [vmem:[%s1758 + $0x100] sm:$0xff]
        %v1792 = vld [vmem:[%s1758 + $0x108] sm:$0xff]
        %v1793 = vld [vmem:[%s1758 + $0x110] sm:$0xff]
        %v1794 = vld [vmem:[%s1758 + $0x118] sm:$0xff]
        %v1795 = vld [vmem:[%s1758 + $0x120] sm:$0xff]
        %v1796 = vld [vmem:[%s1758 + $0x128] sm:$0xff]
        %v1797 = vld [vmem:[%s1758 + $0x130] sm:$0xff]
        %v1798 = vld [vmem:[%s1758 + $0x138] sm:$0xff]
        %v1799 = vld [vmem:[%s1758 + $0x140] sm:$0xff]
        %v1800 = vld [vmem:[%s1758 + $0x148] sm:$0xff]
        %v1801 = vld [vmem:[%s1758 + $0x150] sm:$0xff]
        %v1802 = vld [vmem:[%s1758 + $0x158] sm:$0xff]
        %v1803 = vld [vmem:[%s1758 + $0x160] sm:$0xff]
        %v1804 = vld [vmem:[%s1758 + $0x168] sm:$0xff]
        %v1805 = vld [vmem:[%s1758 + $0x170] sm:$0xff]
        %v1806 = vld [vmem:[%s1758 + $0x178] sm:$0xff]
        %v1807 = vld [vmem:[%s1758 + $0x180] sm:$0xff]
        %v1808 = vld [vmem:[%s1758 + $0x188] sm:$0xff]
        %v1809 = vld [vmem:[%s1758 + $0x190] sm:$0xff]
        %v1810 = vld [vmem:[%s1758 + $0x198] sm:$0xff]
        %1811 = vmatprep.subr.mxu0 %v1760
        %1812 = vmatpush1.msra.mxu0 %v1759
        %1813 = vmatprep.subr.mxu0 %v1762
        %1814 = vmatpush1.msra.mxu0 %v1761
        %1815 = vmatprep.subr.mxu0 %v1764
        %1816 = vmatpush1.msra.mxu0 %v1763
        %1817 = vmatprep.subr.mxu0 %v1766
        %1818 = vmatpush1.msra.mxu0 %v1765
        %1819 = vmatprep.subr.mxu0 %v1768
        %1820 = vmatpush1.msra.mxu0 %v1767
        %1821 = vmatprep.subr.mxu0 %v1770
        %1822 = vmatpush1.msra.mxu0 %v1769
        %1823 = vmatprep.subr.mxu0 %v1772
        %1824 = vmatpush1.msra.mxu0 %v1771
        %1825 = vmatprep.subr.mxu0 %v1774
        %1826 = vmatpush1.msra.mxu0 %v1773
        %1827 = vmatprep.subr.mxu0 %v1776
        %1828 = vmatpush1.msra.mxu0 %v1775
        %1829 = vmatprep.subr.mxu0 %v1778
        %1830 = vmatpush1.msra.mxu0 %v1777
        %1831 = vmatprep.subr.mxu0 %v1780
        %1832 = vmatpush1.msra.mxu0 %v1779
        %1833 = vmatprep.subr.mxu0 %v1782
        %1834 = vmatpush1.msra.mxu0 %v1781
        %1835 = vmatprep.subr.mxu0 %v1784
        %1836 = vmatpush1.msra.mxu0 %v1783
        %1837 = vmatprep.subr.mxu0 %v1786
        %1838 = vmatpush1.msra.mxu0 %v1785
        %1839 = vmatprep.subr.mxu0 %v1788
        %1840 = vmatpush1.msra.mxu0 %v1787
        %1841 = vmatprep.subr.mxu0 %v1790
        %1842 = vmatpush1.msra.mxu0 %v1789
        %1843 = vmatprep.subr.mxu0 %v1792
        %1844 = vmatpush1.msra.mxu0 %v1791
        %1845 = vmatprep.subr.mxu0 %v1794
        %1846 = vmatpush1.msra.mxu0 %v1793
        %1847 = vmatprep.subr.mxu0 %v1796
        %1848 = vmatpush1.msra.mxu0 %v1795
        %1849 = vmatprep.subr.mxu0 %v1798
        %1850 = vmatpush1.msra.mxu0 %v1797
        %1851 = vmatprep.subr.mxu0 %v1800
        %1852 = vmatpush1.msra.mxu0 %v1799
        %1853 = vmatprep.subr.mxu0 %v1802
        %1854 = vmatpush1.msra.mxu0 %v1801
        %1855 = vmatprep.subr.mxu0 %v1804
        %1856 = vmatpush1.msra.mxu0 %v1803
        %1857 = vmatprep.subr.mxu0 %v1806
        %1858 = vmatpush1.msra.mxu0 %v1805
        %1859 = vmatprep.subr.mxu0 %v1808
        %1860 = vmatpush1.msra.mxu0 %v1807
        %1861 = vmatprep.subr.mxu0 %v1810
        %1862 = vmatpush1.msra.mxu0 %v1809
        %1863 = vmatprep.subr.mxu0 0.0
        %1864 = vmatpush1.msra.mxu0 0.0
        %1865 = vmatprep.subr.mxu0 0.0
        %1866 = vmatpush1.msra.mxu0 0.0
        %1867 = vmatprep.subr.mxu0 0.0
        %1868 = vmatpush1.msra.mxu0 0.0
        %1869 = vmatprep.subr.mxu0 0.0
        %1870 = vmatpush1.msra.mxu0 0.0
        %1871 = vmatprep.subr.mxu0 0.0
        %1872 = vmatpush1.msra.mxu0 0.0
        %1873 = vmatprep.subr.mxu0 0.0
        %1874 = vmatpush1.msra.mxu0 0.0
        %1875 = vmatprep.mubr.f32.mxu0 %v1367
        %1876 = vmatmul.mubr.f32.gmra.mrb[0].mxu0 %v1308
        %v1877 = vpop.f32.mrb[0].mxu0
        %v1878 = vadd.f32 0.0, %v1877
        %v1879 = vpop.f32.mrb[0].mxu0
        %v1880 = vadd.f32 0.0, %v1879
        %1881 = vmatprep.mubr.f32.mxu0 %v1370
        %1882 = vmatmul.mubr.f32.gmra.mrb[0].mxu0 %v1310
        %v1883 = vpop.f32.mrb[0].mxu0
        %v1884 = vadd.f32 0.0, %v1883
        %v1885 = vpop.f32.mrb[0].mxu0
        %v1886 = vadd.f32 0.0, %v1885
        %1887 = vdwg.mxu0
        %v1888 = vadd.f32 %v1453, %v1878
        %v1889 = vadd.f32 %v1457, %v1880
        %v1890 = vadd.f32 %v1453, %v1884
        %v1891 = vadd.f32 %v1457, %v1886
        %s1892 = scalar_lea.vmem %s4, 1664
        %v1893 = vld [vmem:[%s1892] sm:$0xff]
        %v1894 = vld [vmem:[%s1892 + $0x8] sm:$0xff]
        %v1895 = vld [vmem:[%s1892 + $0x10] sm:$0xff]
        %v1896 = vld [vmem:[%s1892 + $0x18] sm:$0xff]
        %v1897 = vld [vmem:[%s1892 + $0x20] sm:$0xff]
        %v1898 = vld [vmem:[%s1892 + $0x28] sm:$0xff]
        %v1899 = vld [vmem:[%s1892 + $0x30] sm:$0xff]
        %v1900 = vld [vmem:[%s1892 + $0x38] sm:$0xff]
        %v1901 = vld [vmem:[%s1892 + $0x40] sm:$0xff]
        %v1902 = vld [vmem:[%s1892 + $0x48] sm:$0xff]
        %v1903 = vld [vmem:[%s1892 + $0x50] sm:$0xff]
        %v1904 = vld [vmem:[%s1892 + $0x58] sm:$0xff]
        %v1905 = vld [vmem:[%s1892 + $0x60] sm:$0xff]
        %v1906 = vld [vmem:[%s1892 + $0x68] sm:$0xff]
        %v1907 = vld [vmem:[%s1892 + $0x70] sm:$0xff]
        %v1908 = vld [vmem:[%s1892 + $0x78] sm:$0xff]
        %v1909 = vld [vmem:[%s1892 + $0x80] sm:$0xff]
        %v1910 = vld [vmem:[%s1892 + $0x88] sm:$0xff]
        %v1911 = vld [vmem:[%s1892 + $0x90] sm:$0xff]
        %v1912 = vld [vmem:[%s1892 + $0x98] sm:$0xff]
        %v1913 = vld [vmem:[%s1892 + $0xa0] sm:$0xff]
        %v1914 = vld [vmem:[%s1892 + $0xa8] sm:$0xff]
        %v1915 = vld [vmem:[%s1892 + $0xb0] sm:$0xff]
        %v1916 = vld [vmem:[%s1892 + $0xb8] sm:$0xff]
        %v1917 = vld [vmem:[%s1892 + $0xc0] sm:$0xff]
        %v1918 = vld [vmem:[%s1892 + $0xc8] sm:$0xff]
        %v1919 = vld [vmem:[%s1892 + $0xd0] sm:$0xff]
        %v1920 = vld [vmem:[%s1892 + $0xd8] sm:$0xff]
        %v1921 = vld [vmem:[%s1892 + $0xe0] sm:$0xff]
        %v1922 = vld [vmem:[%s1892 + $0xe8] sm:$0xff]
        %v1923 = vld [vmem:[%s1892 + $0xf0] sm:$0xff]
        %v1924 = vld [vmem:[%s1892 + $0xf8] sm:$0xff]
        %v1925 = vld [vmem:[%s1892 + $0x100] sm:$0xff]
        %v1926 = vld [vmem:[%s1892 + $0x108] sm:$0xff]
        %v1927 = vld [vmem:[%s1892 + $0x110] sm:$0xff]
        %v1928 = vld [vmem:[%s1892 + $0x118] sm:$0xff]
        %v1929 = vld [vmem:[%s1892 + $0x120] sm:$0xff]
        %v1930 = vld [vmem:[%s1892 + $0x128] sm:$0xff]
        %v1931 = vld [vmem:[%s1892 + $0x130] sm:$0xff]
        %v1932 = vld [vmem:[%s1892 + $0x138] sm:$0xff]
        %v1933 = vld [vmem:[%s1892 + $0x140] sm:$0xff]
        %v1934 = vld [vmem:[%s1892 + $0x148] sm:$0xff]
        %v1935 = vld [vmem:[%s1892 + $0x150] sm:$0xff]
        %v1936 = vld [vmem:[%s1892 + $0x158] sm:$0xff]
        %v1937 = vld [vmem:[%s1892 + $0x160] sm:$0xff]
        %v1938 = vld [vmem:[%s1892 + $0x168] sm:$0xff]
        %v1939 = vld [vmem:[%s1892 + $0x170] sm:$0xff]
        %v1940 = vld [vmem:[%s1892 + $0x178] sm:$0xff]
        %v1941 = vld [vmem:[%s1892 + $0x180] sm:$0xff]
        %v1942 = vld [vmem:[%s1892 + $0x188] sm:$0xff]
        %v1943 = vld [vmem:[%s1892 + $0x190] sm:$0xff]
        %v1944 = vld [vmem:[%s1892 + $0x198] sm:$0xff]
        %1945 = vmatprep.subr.mxu0 %v1894
        %1946 = vmatpush1.msra.mxu0 %v1893
        %1947 = vmatprep.subr.mxu0 %v1896
        %1948 = vmatpush1.msra.mxu0 %v1895
        %1949 = vmatprep.subr.mxu0 %v1898
        %1950 = vmatpush1.msra.mxu0 %v1897
        %1951 = vmatprep.subr.mxu0 %v1900
        %1952 = vmatpush1.msra.mxu0 %v1899
        %1953 = vmatprep.subr.mxu0 %v1902
        %1954 = vmatpush1.msra.mxu0 %v1901
        %1955 = vmatprep.subr.mxu0 %v1904
        %1956 = vmatpush1.msra.mxu0 %v1903
        %1957 = vmatprep.subr.mxu0 %v1906
        %1958 = vmatpush1.msra.mxu0 %v1905
        %1959 = vmatprep.subr.mxu0 %v1908
        %1960 = vmatpush1.msra.mxu0 %v1907
        %1961 = vmatprep.subr.mxu0 %v1910
        %1962 = vmatpush1.msra.mxu0 %v1909
        %1963 = vmatprep.subr.mxu0 %v1912
        %1964 = vmatpush1.msra.mxu0 %v1911
        %1965 = vmatprep.subr.mxu0 %v1914
        %1966 = vmatpush1.msra.mxu0 %v1913
        %1967 = vmatprep.subr.mxu0 %v1916
        %1968 = vmatpush1.msra.mxu0 %v1915
        %1969 = vmatprep.subr.mxu0 %v1918
        %1970 = vmatpush1.msra.mxu0 %v1917
        %1971 = vmatprep.subr.mxu0 %v1920
        %1972 = vmatpush1.msra.mxu0 %v1919
        %1973 = vmatprep.subr.mxu0 %v1922
        %1974 = vmatpush1.msra.mxu0 %v1921
        %1975 = vmatprep.subr.mxu0 %v1924
        %1976 = vmatpush1.msra.mxu0 %v1923
        %1977 = vmatprep.subr.mxu0 %v1926
        %1978 = vmatpush1.msra.mxu0 %v1925
        %1979 = vmatprep.subr.mxu0 %v1928
        %1980 = vmatpush1.msra.mxu0 %v1927
        %1981 = vmatprep.subr.mxu0 %v1930
        %1982 = vmatpush1.msra.mxu0 %v1929
        %1983 = vmatprep.subr.mxu0 %v1932
        %1984 = vmatpush1.msra.mxu0 %v1931
        %1985 = vmatprep.subr.mxu0 %v1934
        %1986 = vmatpush1.msra.mxu0 %v1933
        %1987 = vmatprep.subr.mxu0 %v1936
        %1988 = vmatpush1.msra.mxu0 %v1935
        %1989 = vmatprep.subr.mxu0 %v1938
        %1990 = vmatpush1.msra.mxu0 %v1937
        %1991 = vmatprep.subr.mxu0 %v1940
        %1992 = vmatpush1.msra.mxu0 %v1939
        %1993 = vmatprep.subr.mxu0 %v1942
        %1994 = vmatpush1.msra.mxu0 %v1941
        %1995 = vmatprep.subr.mxu0 %v1944
        %1996 = vmatpush1.msra.mxu0 %v1943
        %1997 = vmatprep.subr.mxu0 0.0
        %1998 = vmatpush1.msra.mxu0 0.0
        %1999 = vmatprep.subr.mxu0 0.0
        %2000 = vmatpush1.msra.mxu0 0.0
        %2001 = vmatprep.subr.mxu0 0.0
        %2002 = vmatpush1.msra.mxu0 0.0
        %2003 = vmatprep.subr.mxu0 0.0
        %2004 = vmatpush1.msra.mxu0 0.0
        %2005 = vmatprep.subr.mxu0 0.0
        %2006 = vmatpush1.msra.mxu0 0.0
        %2007 = vmatprep.subr.mxu0 0.0
        %2008 = vmatpush1.msra.mxu0 0.0
        %2009 = vmatprep.mubr.f32.mxu0 %v1527
        %2010 = vmatmul.mubr.f32.gmra.mrb[0].mxu0 %v1521
        %v2011 = vpop.f32.mrb[0].mxu0
        %v2012 = vadd.f32 0.0, %v2011
        %v2013 = vpop.f32.mrb[0].mxu0
        %v2014 = vadd.f32 0.0, %v2013
        %2015 = vmatprep.mubr.f32.mxu0 %v1529
        %2016 = vmatmul.mubr.f32.gmra.mrb[0].mxu0 %v1520
        %v2017 = vpop.f32.mrb[0].mxu0
        %v2018 = vadd.f32 0.0, %v2017
        %v2019 = vpop.f32.mrb[0].mxu0
        %v2020 = vadd.f32 0.0, %v2019
        %2021 = vdwg.mxu0
        %v2022 = vadd.f32 %v1888, %v2012
        %v2023 = vadd.f32 %v1889, %v2014
        %v2024 = vadd.f32 %v1890, %v2018
        %v2025 = vadd.f32 %v1891, %v2020
        %s2026 = scalar_lea.vmem %s4, 2080
        %v2027 = vld [vmem:[%s2026] sm:$0xff]
        %v2028 = vld [vmem:[%s2026 + $0x8] sm:$0xff]
        %v2029 = vld [vmem:[%s2026 + $0x10] sm:$0xff]
        %v2030 = vld [vmem:[%s2026 + $0x18] sm:$0xff]
        %v2031 = vld [vmem:[%s2026 + $0x20] sm:$0xff]
        %v2032 = vld [vmem:[%s2026 + $0x28] sm:$0xff]
        %v2033 = vld [vmem:[%s2026 + $0x30] sm:$0xff]
        %v2034 = vld [vmem:[%s2026 + $0x38] sm:$0xff]
        %v2035 = vld [vmem:[%s2026 + $0x40] sm:$0xff]
        %v2036 = vld [vmem:[%s2026 + $0x48] sm:$0xff]
        %v2037 = vld [vmem:[%s2026 + $0x50] sm:$0xff]
        %v2038 = vld [vmem:[%s2026 + $0x58] sm:$0xff]
        %v2039 = vld [vmem:[%s2026 + $0x60] sm:$0xff]
        %v2040 = vld [vmem:[%s2026 + $0x68] sm:$0xff]
        %v2041 = vld [vmem:[%s2026 + $0x70] sm:$0xff]
        %v2042 = vld [vmem:[%s2026 + $0x78] sm:$0xff]
        %v2043 = vld [vmem:[%s2026 + $0x80] sm:$0xff]
        %v2044 = vld [vmem:[%s2026 + $0x88] sm:$0xff]
        %v2045 = vld [vmem:[%s2026 + $0x90] sm:$0xff]
        %v2046 = vld [vmem:[%s2026 + $0x98] sm:$0xff]
        %v2047 = vld [vmem:[%s2026 + $0xa0] sm:$0xff]
        %v2048 = vld [vmem:[%s2026 + $0xa8] sm:$0xff]
        %v2049 = vld [vmem:[%s2026 + $0xb0] sm:$0xff]
        %v2050 = vld [vmem:[%s2026 + $0xb8] sm:$0xff]
        %v2051 = vld [vmem:[%s2026 + $0xc0] sm:$0xff]
        %v2052 = vld [vmem:[%s2026 + $0xc8] sm:$0xff]
        %v2053 = vld [vmem:[%s2026 + $0xd0] sm:$0xff]
        %v2054 = vld [vmem:[%s2026 + $0xd8] sm:$0xff]
        %v2055 = vld [vmem:[%s2026 + $0xe0] sm:$0xff]
        %v2056 = vld [vmem:[%s2026 + $0xe8] sm:$0xff]
        %v2057 = vld [vmem:[%s2026 + $0xf0] sm:$0xff]
        %v2058 = vld [vmem:[%s2026 + $0xf8] sm:$0xff]
        %v2059 = vld [vmem:[%s2026 + $0x100] sm:$0xff]
        %v2060 = vld [vmem:[%s2026 + $0x108] sm:$0xff]
        %v2061 = vld [vmem:[%s2026 + $0x110] sm:$0xff]
        %v2062 = vld [vmem:[%s2026 + $0x118] sm:$0xff]
        %v2063 = vld [vmem:[%s2026 + $0x120] sm:$0xff]
        %v2064 = vld [vmem:[%s2026 + $0x128] sm:$0xff]
        %v2065 = vld [vmem:[%s2026 + $0x130] sm:$0xff]
        %v2066 = vld [vmem:[%s2026 + $0x138] sm:$0xff]
        %v2067 = vld [vmem:[%s2026 + $0x140] sm:$0xff]
        %v2068 = vld [vmem:[%s2026 + $0x148] sm:$0xff]
        %v2069 = vld [vmem:[%s2026 + $0x150] sm:$0xff]
        %v2070 = vld [vmem:[%s2026 + $0x158] sm:$0xff]
        %v2071 = vld [vmem:[%s2026 + $0x160] sm:$0xff]
        %v2072 = vld [vmem:[%s2026 + $0x168] sm:$0xff]
        %v2073 = vld [vmem:[%s2026 + $0x170] sm:$0xff]
        %v2074 = vld [vmem:[%s2026 + $0x178] sm:$0xff]
        %v2075 = vld [vmem:[%s2026 + $0x180] sm:$0xff]
        %v2076 = vld [vmem:[%s2026 + $0x188] sm:$0xff]
        %v2077 = vld [vmem:[%s2026 + $0x190] sm:$0xff]
        %v2078 = vld [vmem:[%s2026 + $0x198] sm:$0xff]
        %2079 = vmatprep.subr.mxu0 %v2028
        %2080 = vmatpush1.msra.mxu0 %v2027
        %2081 = vmatprep.subr.mxu0 %v2030
        %2082 = vmatpush1.msra.mxu0 %v2029
        %2083 = vmatprep.subr.mxu0 %v2032
        %2084 = vmatpush1.msra.mxu0 %v2031
        %2085 = vmatprep.subr.mxu0 %v2034
        %2086 = vmatpush1.msra.mxu0 %v2033
        %2087 = vmatprep.subr.mxu0 %v2036
        %2088 = vmatpush1.msra.mxu0 %v2035
        %2089 = vmatprep.subr.mxu0 %v2038
        %2090 = vmatpush1.msra.mxu0 %v2037
        %2091 = vmatprep.subr.mxu0 %v2040
        %2092 = vmatpush1.msra.mxu0 %v2039
        %2093 = vmatprep.subr.mxu0 %v2042
        %2094 = vmatpush1.msra.mxu0 %v2041
        %2095 = vmatprep.subr.mxu0 %v2044
        %2096 = vmatpush1.msra.mxu0 %v2043
        %2097 = vmatprep.subr.mxu0 %v2046
        %2098 = vmatpush1.msra.mxu0 %v2045
        %2099 = vmatprep.subr.mxu0 %v2048
        %2100 = vmatpush1.msra.mxu0 %v2047
        %2101 = vmatprep.subr.mxu0 %v2050
        %2102 = vmatpush1.msra.mxu0 %v2049
        %2103 = vmatprep.subr.mxu0 %v2052
        %2104 = vmatpush1.msra.mxu0 %v2051
        %2105 = vmatprep.subr.mxu0 %v2054
        %2106 = vmatpush1.msra.mxu0 %v2053
        %2107 = vmatprep.subr.mxu0 %v2056
        %2108 = vmatpush1.msra.mxu0 %v2055
        %2109 = vmatprep.subr.mxu0 %v2058
        %2110 = vmatpush1.msra.mxu0 %v2057
        %2111 = vmatprep.subr.mxu0 %v2060
        %2112 = vmatpush1.msra.mxu0 %v2059
        %2113 = vmatprep.subr.mxu0 %v2062
        %2114 = vmatpush1.msra.mxu0 %v2061
        %2115 = vmatprep.subr.mxu0 %v2064
        %2116 = vmatpush1.msra.mxu0 %v2063
        %2117 = vmatprep.subr.mxu0 %v2066
        %2118 = vmatpush1.msra.mxu0 %v2065
        %2119 = vmatprep.subr.mxu0 %v2068
        %2120 = vmatpush1.msra.mxu0 %v2067
        %2121 = vmatprep.subr.mxu0 %v2070
        %2122 = vmatpush1.msra.mxu0 %v2069
        %2123 = vmatprep.subr.mxu0 %v2072
        %2124 = vmatpush1.msra.mxu0 %v2071
        %2125 = vmatprep.subr.mxu0 %v2074
        %2126 = vmatpush1.msra.mxu0 %v2073
        %2127 = vmatprep.subr.mxu0 %v2076
        %2128 = vmatpush1.msra.mxu0 %v2075
        %2129 = vmatprep.subr.mxu0 %v2078
        %2130 = vmatpush1.msra.mxu0 %v2077
        %2131 = vmatprep.subr.mxu0 0.0
        %2132 = vmatpush1.msra.mxu0 0.0
        %2133 = vmatprep.subr.mxu0 0.0
        %2134 = vmatpush1.msra.mxu0 0.0
        %2135 = vmatprep.subr.mxu0 0.0
        %2136 = vmatpush1.msra.mxu0 0.0
        %2137 = vmatprep.subr.mxu0 0.0
        %2138 = vmatpush1.msra.mxu0 0.0
        %2139 = vmatprep.subr.mxu0 0.0
        %2140 = vmatpush1.msra.mxu0 0.0
        %2141 = vmatprep.subr.mxu0 0.0
        %2142 = vmatpush1.msra.mxu0 0.0
        %2143 = vmatprep.mubr.f32.mxu0 %v1673
        %2144 = vmatmul.mubr.f32.gmra.mrb[0].mxu0 %v1667
        %v2145 = vpop.f32.mrb[0].mxu0
        %v2146 = vadd.f32 0.0, %v2145
        %v2147 = vpop.f32.mrb[0].mxu0
        %v2148 = vadd.f32 0.0, %v2147
        %2149 = vmatprep.mubr.f32.mxu0 %v1675
        %2150 = vmatmul.mubr.f32.gmra.mrb[0].mxu0 %v1666
        %v2151 = vpop.f32.mrb[0].mxu0
        %v2152 = vadd.f32 0.0, %v2151
        %v2153 = vpop.f32.mrb[0].mxu0
        %v2154 = vadd.f32 0.0, %v2153
        %2155 = vdwg.mxu0
        %v2156 = vadd.f32 %v2022, %v2146
        %v2157 = vadd.f32 %v2023, %v2148
        %v2158 = vadd.f32 %v2024, %v2152
        %v2159 = vadd.f32 %v2025, %v2154
        %v2160 = vmax.f32 %v1754, %v2156
        %v2161 = vmax.f32 %v1755, %v2157
        %v2162 = vmax.f32 %v1756, %v2158
        %v2163 = vmax.f32 %v1757, %v2159
        %v2164 = vld [vmem:[%s6] sm:$0x1f]
        %vm2165 = vcmask 89088
        %v2167 = vsel %vm2165, %v2164, 0
        %vm2169 = vcmask 1042432
        %v2171 = vsel %vm2169, %v2162, 0
        %v2174 = vsel %vm2169, %v2163, 0
        %2176 = vmatprep.subr.mxu0 %v2161
        %2177 = vmatpush1.msra.mxu0 %v2160
        %2178 = vmatprep.subr.mxu0 %v2174
        %2179 = vmatpush1.msra.mxu0 %v2171
        %2180 = vmatprep.subr.mxu0 0.0
        %2181 = vmatpush1.msra.mxu0 0.0
        %2182 = vmatprep.subr.mxu0 0.0
        %2183 = vmatpush1.msra.mxu0 0.0
        %2184 = vmatprep.subr.mxu0 0.0
        %2185 = vmatpush1.msra.mxu0 0.0
        %2186 = vmatprep.subr.mxu0 0.0
        %2187 = vmatpush1.msra.mxu0 0.0
        %2188 = vmatprep.subr.mxu0 0.0
        %2189 = vmatpush1.msra.mxu0 0.0
        %2190 = vmatprep.subr.mxu0 0.0
        %2191 = vmatpush1.msra.mxu0 0.0
        %2192 = vmatprep.subr.mxu0 0.0
        %2193 = vmatpush1.msra.mxu0 0.0
        %2194 = vmatprep.subr.mxu0 0.0
        %2195 = vmatpush1.msra.mxu0 0.0
        %2196 = vmatprep.subr.mxu0 0.0
        %2197 = vmatpush1.msra.mxu0 0.0
        %2198 = vmatprep.subr.mxu0 0.0
        %2199 = vmatpush1.msra.mxu0 0.0
        %2200 = vmatprep.subr.mxu0 0.0
        %2201 = vmatpush1.msra.mxu0 0.0
        %2202 = vmatprep.subr.mxu0 0.0
        %2203 = vmatpush1.msra.mxu0 0.0
        %2204 = vmatprep.subr.mxu0 0.0
        %2205 = vmatpush1.msra.mxu0 0.0
        %2206 = vmatprep.subr.mxu0 0.0
        %2207 = vmatpush1.msra.mxu0 0.0
        %2208 = vmatprep.subr.mxu0 0.0
        %2209 = vmatpush1.msra.mxu0 0.0
        %2210 = vmatprep.subr.mxu0 0.0
        %2211 = vmatpush1.msra.mxu0 0.0
        %2212 = vmatprep.subr.mxu0 0.0
        %2213 = vmatpush1.msra.mxu0 0.0
        %2214 = vmatprep.subr.mxu0 0.0
        %2215 = vmatpush1.msra.mxu0 0.0
        %2216 = vmatprep.subr.mxu0 0.0
        %2217 = vmatpush1.msra.mxu0 0.0
        %2218 = vmatprep.subr.mxu0 0.0
        %2219 = vmatpush1.msra.mxu0 0.0
        %2220 = vmatprep.subr.mxu0 0.0
        %2221 = vmatpush1.msra.mxu0 0.0
        %2222 = vmatprep.subr.mxu0 0.0
        %2223 = vmatpush1.msra.mxu0 0.0
        %2224 = vmatprep.subr.mxu0 0.0
        %2225 = vmatpush1.msra.mxu0 0.0
        %2226 = vmatprep.subr.mxu0 0.0
        %2227 = vmatpush1.msra.mxu0 0.0
        %2228 = vmatprep.subr.mxu0 0.0
        %2229 = vmatpush1.msra.mxu0 0.0
        %2230 = vmatprep.subr.mxu0 0.0
        %2231 = vmatpush1.msra.mxu0 0.0
        %2232 = vmatprep.subr.mxu0 0.0
        %2233 = vmatpush1.msra.mxu0 0.0
        %2234 = vmatprep.subr.mxu0 0.0
        %2235 = vmatpush1.msra.mxu0 0.0
        %2236 = vmatprep.subr.mxu0 0.0
        %2237 = vmatpush1.msra.mxu0 0.0
        %2238 = vmatprep.subr.mxu0 0.0
        %2239 = vmatpush1.msra.mxu0 0.0
        %2240 = vmatprep.mubr.f32.mxu0 0.0
        %2241 = vmatmul.mubr.f32.gmra.mrb[0].mxu0 %v2167
        %v2242 = vpop.f32.mrb[0].mxu0
        %v2243 = vadd.f32 0.0, %v2242
        %v2244 = vpop.f32.mrb[0].mxu0
        %v2245 = vadd.f32 0.0, %v2244
        %2246 = vdwg.mxu0
        %s2247 = scalar_lea.vmem %s6, 8
        %v2248 = vld [vmem:[%s2247] sm:$0x1f]
        %v2250 = vsel %vm2165, %v2248, 0
        %2252 = vmatprep.subr.mxu0 %v2161
        %2253 = vmatpush1.msra.mxu0 %v2160
        %2254 = vmatprep.subr.mxu0 %v2174
        %2255 = vmatpush1.msra.mxu0 %v2171
        %2256 = vmatprep.subr.mxu0 0.0
        %2257 = vmatpush1.msra.mxu0 0.0
        %2258 = vmatprep.subr.mxu0 0.0
        %2259 = vmatpush1.msra.mxu0 0.0
        %2260 = vmatprep.subr.mxu0 0.0
        %2261 = vmatpush1.msra.mxu0 0.0
        %2262 = vmatprep.subr.mxu0 0.0
        %2263 = vmatpush1.msra.mxu0 0.0
        %2264 = vmatprep.subr.mxu0 0.0
        %2265 = vmatpush1.msra.mxu0 0.0
        %2266 = vmatprep.subr.mxu0 0.0
        %2267 = vmatpush1.msra.mxu0 0.0
        %2268 = vmatprep.subr.mxu0 0.0
        %2269 = vmatpush1.msra.mxu0 0.0
        %2270 = vmatprep.subr.mxu0 0.0
        %2271 = vmatpush1.msra.mxu0 0.0
        %2272 = vmatprep.subr.mxu0 0.0
        %2273 = vmatpush1.msra.mxu0 0.0
        %2274 = vmatprep.subr.mxu0 0.0
        %2275 = vmatpush1.msra.mxu0 0.0
        %2276 = vmatprep.subr.mxu0 0.0
        %2277 = vmatpush1.msra.mxu0 0.0
        %2278 = vmatprep.subr.mxu0 0.0
        %2279 = vmatpush1.msra.mxu0 0.0
        %2280 = vmatprep.subr.mxu0 0.0
        %2281 = vmatpush1.msra.mxu0 0.0
        %2282 = vmatprep.subr.mxu0 0.0
        %2283 = vmatpush1.msra.mxu0 0.0
        %2284 = vmatprep.subr.mxu0 0.0
        %2285 = vmatpush1.msra.mxu0 0.0
        %2286 = vmatprep.subr.mxu0 0.0
        %2287 = vmatpush1.msra.mxu0 0.0
        %2288 = vmatprep.subr.mxu0 0.0
        %2289 = vmatpush1.msra.mxu0 0.0
        %2290 = vmatprep.subr.mxu0 0.0
        %2291 = vmatpush1.msra.mxu0 0.0
        %2292 = vmatprep.subr.mxu0 0.0
        %2293 = vmatpush1.msra.mxu0 0.0
        %2294 = vmatprep.subr.mxu0 0.0
        %2295 = vmatpush1.msra.mxu0 0.0
        %2296 = vmatprep.subr.mxu0 0.0
        %2297 = vmatpush1.msra.mxu0 0.0
        %2298 = vmatprep.subr.mxu0 0.0
        %2299 = vmatpush1.msra.mxu0 0.0
        %2300 = vmatprep.subr.mxu0 0.0
        %2301 = vmatpush1.msra.mxu0 0.0
        %2302 = vmatprep.subr.mxu0 0.0
        %2303 = vmatpush1.msra.mxu0 0.0
        %2304 = vmatprep.subr.mxu0 0.0
        %2305 = vmatpush1.msra.mxu0 0.0
        %2306 = vmatprep.subr.mxu0 0.0
        %2307 = vmatpush1.msra.mxu0 0.0
        %2308 = vmatprep.subr.mxu0 0.0
        %2309 = vmatpush1.msra.mxu0 0.0
        %2310 = vmatprep.subr.mxu0 0.0
        %2311 = vmatpush1.msra.mxu0 0.0
        %2312 = vmatprep.subr.mxu0 0.0
        %2313 = vmatpush1.msra.mxu0 0.0
        %2314 = vmatprep.subr.mxu0 0.0
        %2315 = vmatpush1.msra.mxu0 0.0
        %2316 = vmatprep.mubr.f32.mxu0 0.0
        %2317 = vmatmul.mubr.f32.gmra.mrb[0].mxu0 %v2250
        %v2318 = vpop.f32.mrb[0].mxu0
        %v2319 = vadd.f32 0.0, %v2318
        %v2320 = vpop.f32.mrb[0].mxu0
        %v2321 = vadd.f32 0.0, %v2320
        %2322 = vdwg.mxu0
        %v2323 = vmax.f32 %v2243, %v2319
        %v2324 = vmax.f32 %v2245, %v2321
        %v2325 = vmax.f32 %v2323, 0.0
        %v2326 = vmax.f32 %v2324, 0.0
        %v2327 = vld [vmem:[%s8] sm:$0x3]
        %v2328 = vld [vmem:[%s7] sm:$0xff]
        %v2329 = vld [vmem:[%s7 + $0x8] sm:$0xff]
        %v2330 = vld [vmem:[%s7 + $0x10] sm:$0xff]
        %v2331 = vld [vmem:[%s7 + $0x18] sm:$0xff]
        %v2332 = vld [vmem:[%s7 + $0x20] sm:$0xff]
        %v2333 = vld [vmem:[%s7 + $0x28] sm:$0xff]
        %v2334 = vld [vmem:[%s7 + $0x30] sm:$0xff]
        %v2335 = vld [vmem:[%s7 + $0x38] sm:$0xff]
        %v2336 = vld [vmem:[%s7 + $0x40] sm:$0xff]
        %v2337 = vld [vmem:[%s7 + $0x48] sm:$0xff]
        %v2338 = vld [vmem:[%s7 + $0x50] sm:$0xff]
        %v2339 = vld [vmem:[%s7 + $0x58] sm:$0xff]
        %v2340 = vld [vmem:[%s7 + $0x60] sm:$0xff]
        %v2341 = vld [vmem:[%s7 + $0x68] sm:$0xff]
        %v2342 = vld [vmem:[%s7 + $0x70] sm:$0xff]
        %v2343 = vld [vmem:[%s7 + $0x78] sm:$0xff]
        %v2344 = vld [vmem:[%s7 + $0x80] sm:$0xff]
        %v2345 = vld [vmem:[%s7 + $0x88] sm:$0xff]
        %v2346 = vld [vmem:[%s7 + $0x90] sm:$0xff]
        %v2347 = vld [vmem:[%s7 + $0x98] sm:$0xff]
        %v2348 = vld [vmem:[%s7 + $0xa0] sm:$0xff]
        %v2349 = vld [vmem:[%s7 + $0xa8] sm:$0xff]
        %v2350 = vld [vmem:[%s7 + $0xb0] sm:$0xff]
        %v2351 = vld [vmem:[%s7 + $0xb8] sm:$0xff]
        %v2352 = vld [vmem:[%s7 + $0xc0] sm:$0xff]
        %v2353 = vld [vmem:[%s7 + $0xc8] sm:$0xff]
        %v2354 = vld [vmem:[%s7 + $0xd0] sm:$0xff]
        %v2355 = vld [vmem:[%s7 + $0xd8] sm:$0xff]
        %v2356 = vld [vmem:[%s7 + $0xe0] sm:$0xff]
        %v2357 = vld [vmem:[%s7 + $0xe8] sm:$0xff]
        %v2358 = vld [vmem:[%s7 + $0xf0] sm:$0xff]
        %v2359 = vld [vmem:[%s7 + $0xf8] sm:$0xff]
        %v2360 = vld [vmem:[%s7 + $0x100] sm:$0xff]
        %v2361 = vld [vmem:[%s7 + $0x108] sm:$0xff]
        %v2362 = vld [vmem:[%s7 + $0x110] sm:$0xff]
        %v2363 = vld [vmem:[%s7 + $0x118] sm:$0xff]
        %v2364 = vld [vmem:[%s7 + $0x120] sm:$0xff]
        %v2365 = vld [vmem:[%s7 + $0x128] sm:$0xff]
        %v2366 = vld [vmem:[%s7 + $0x130] sm:$0xff]
        %v2367 = vld [vmem:[%s7 + $0x138] sm:$0xff]
        %vm2368 = vcmask 261120
        %v2370 = vsel %vm2368, %v2326, 0
        %2372 = vmatprep.subr.mxu0 %v2329
        %2373 = vmatpush1.msra.mxu0 %v2328
        %2374 = vmatprep.subr.mxu0 %v2331
        %2375 = vmatpush1.msra.mxu0 %v2330
        %2376 = vmatprep.subr.mxu0 %v2333
        %2377 = vmatpush1.msra.mxu0 %v2332
        %2378 = vmatprep.subr.mxu0 %v2335
        %2379 = vmatpush1.msra.mxu0 %v2334
        %2380 = vmatprep.subr.mxu0 %v2337
        %2381 = vmatpush1.msra.mxu0 %v2336
        %2382 = vmatprep.subr.mxu0 %v2339
        %2383 = vmatpush1.msra.mxu0 %v2338
        %2384 = vmatprep.subr.mxu0 %v2341
        %2385 = vmatpush1.msra.mxu0 %v2340
        %2386 = vmatprep.subr.mxu0 %v2343
        %2387 = vmatpush1.msra.mxu0 %v2342
        %2388 = vmatprep.subr.mxu0 %v2345
        %2389 = vmatpush1.msra.mxu0 %v2344
        %2390 = vmatprep.subr.mxu0 %v2347
        %2391 = vmatpush1.msra.mxu0 %v2346
        %2392 = vmatprep.subr.mxu0 %v2349
        %2393 = vmatpush1.msra.mxu0 %v2348
        %2394 = vmatprep.subr.mxu0 %v2351
        %2395 = vmatpush1.msra.mxu0 %v2350
        %2396 = vmatprep.subr.mxu0 %v2353
        %2397 = vmatpush1.msra.mxu0 %v2352
        %2398 = vmatprep.subr.mxu0 %v2355
        %2399 = vmatpush1.msra.mxu0 %v2354
        %2400 = vmatprep.subr.mxu0 %v2357
        %2401 = vmatpush1.msra.mxu0 %v2356
        %2402 = vmatprep.subr.mxu0 %v2359
        %2403 = vmatpush1.msra.mxu0 %v2358
        %2404 = vmatprep.subr.mxu0 %v2361
        %2405 = vmatpush1.msra.mxu0 %v2360
        %2406 = vmatprep.subr.mxu0 %v2363
        %2407 = vmatpush1.msra.mxu0 %v2362
        %2408 = vmatprep.subr.mxu0 %v2365
        %2409 = vmatpush1.msra.mxu0 %v2364
        %2410 = vmatprep.subr.mxu0 %v2367
        %2411 = vmatpush1.msra.mxu0 %v2366
        %2412 = vmatprep.subr.mxu0 0.0
        %2413 = vmatpush1.msra.mxu0 0.0
        %2414 = vmatprep.subr.mxu0 0.0
        %2415 = vmatpush1.msra.mxu0 0.0
        %2416 = vmatprep.subr.mxu0 0.0
        %2417 = vmatpush1.msra.mxu0 0.0
        %2418 = vmatprep.subr.mxu0 0.0
        %2419 = vmatpush1.msra.mxu0 0.0
        %2420 = vmatprep.subr.mxu0 0.0
        %2421 = vmatpush1.msra.mxu0 0.0
        %2422 = vmatprep.subr.mxu0 0.0
        %2423 = vmatpush1.msra.mxu0 0.0
        %2424 = vmatprep.subr.mxu0 0.0
        %2425 = vmatpush1.msra.mxu0 0.0
        %2426 = vmatprep.subr.mxu0 0.0
        %2427 = vmatpush1.msra.mxu0 0.0
        %2428 = vmatprep.subr.mxu0 0.0
        %2429 = vmatpush1.msra.mxu0 0.0
        %2430 = vmatprep.subr.mxu0 0.0
        %2431 = vmatpush1.msra.mxu0 0.0
        %2432 = vmatprep.subr.mxu0 0.0
        %2433 = vmatpush1.msra.mxu0 0.0
        %2434 = vmatprep.subr.mxu0 0.0
        %2435 = vmatpush1.msra.mxu0 0.0
        %2436 = vmatprep.mubr.f32.mxu0 %v2370
        %2437 = vmatmul.mubr.f32.gmra.mrb[0].mxu0 %v2325
        %v2438 = vpop.f32.mrb[0].mxu0
        %v2439 = vadd.f32 0.0, %v2438
        %v2440 = vpop.f32.mrb[0].mxu0
        %v2441 = vadd.f32 0.0, %v2440
        %2442 = vdwg.mxu0
        %v2445 = vcombine.low %v2439, %v2441
        %v2447 = vunpack.c.l.s4 1966171168
        %v2448 = vunpack.c.0.s8 %v2447
        %v2449 = vlaneseq
        %v2450 = vshrl.u32 %v2449, 7
        %v2451 = vsub.s32 %v2448, %v2450
        %v2452 = vrot.slane %v2445, %v2451
        %v2454 = vunpack.c.l.s4 1966171168
        %v2455 = vunpack.c.0.s8 %v2454
        %v2456 = vlaneseq
        %v2457 = vshrl.u32 %v2456, 7
        %v2458 = vsub.s32 %v2455, %v2457
        %v2459 = vrot.slane %v2452, %v2458
        %v2461 = vadd.f32 %v2327, %v2459
        %s2462 = scalar_lea.vmem %s7, 320
        %v2463 = vld [vmem:[%s2462] sm:$0xff]
        %v2464 = vld [vmem:[%s2462 + $0x8] sm:$0xff]
        %v2465 = vld [vmem:[%s2462 + $0x10] sm:$0xff]
        %v2466 = vld [vmem:[%s2462 + $0x18] sm:$0xff]
        %v2467 = vld [vmem:[%s2462 + $0x20] sm:$0xff]
        %v2468 = vld [vmem:[%s2462 + $0x28] sm:$0xff]
        %v2469 = vld [vmem:[%s2462 + $0x30] sm:$0xff]
        %v2470 = vld [vmem:[%s2462 + $0x38] sm:$0xff]
        %v2471 = vld [vmem:[%s2462 + $0x40] sm:$0xff]
        %v2472 = vld [vmem:[%s2462 + $0x48] sm:$0xff]
        %v2473 = vld [vmem:[%s2462 + $0x50] sm:$0xff]
        %v2474 = vld [vmem:[%s2462 + $0x58] sm:$0xff]
        %v2475 = vld [vmem:[%s2462 + $0x60] sm:$0xff]
        %v2476 = vld [vmem:[%s2462 + $0x68] sm:$0xff]
        %v2477 = vld [vmem:[%s2462 + $0x70] sm:$0xff]
        %v2478 = vld [vmem:[%s2462 + $0x78] sm:$0xff]
        %v2479 = vld [vmem:[%s2462 + $0x80] sm:$0xff]
        %v2480 = vld [vmem:[%s2462 + $0x88] sm:$0xff]
        %v2481 = vld [vmem:[%s2462 + $0x90] sm:$0xff]
        %v2482 = vld [vmem:[%s2462 + $0x98] sm:$0xff]
        %v2483 = vld [vmem:[%s2462 + $0xa0] sm:$0xff]
        %v2484 = vld [vmem:[%s2462 + $0xa8] sm:$0xff]
        %v2485 = vld [vmem:[%s2462 + $0xb0] sm:$0xff]
        %v2486 = vld [vmem:[%s2462 + $0xb8] sm:$0xff]
        %v2487 = vld [vmem:[%s2462 + $0xc0] sm:$0xff]
        %v2488 = vld [vmem:[%s2462 + $0xc8] sm:$0xff]
        %v2489 = vld [vmem:[%s2462 + $0xd0] sm:$0xff]
        %v2490 = vld [vmem:[%s2462 + $0xd8] sm:$0xff]
        %v2491 = vld [vmem:[%s2462 + $0xe0] sm:$0xff]
        %v2492 = vld [vmem:[%s2462 + $0xe8] sm:$0xff]
        %v2493 = vld [vmem:[%s2462 + $0xf0] sm:$0xff]
        %v2494 = vld [vmem:[%s2462 + $0xf8] sm:$0xff]
        %v2495 = vld [vmem:[%s2462 + $0x100] sm:$0xff]
        %v2496 = vld [vmem:[%s2462 + $0x108] sm:$0xff]
        %v2497 = vld [vmem:[%s2462 + $0x110] sm:$0xff]
        %v2498 = vld [vmem:[%s2462 + $0x118] sm:$0xff]
        %v2499 = vld [vmem:[%s2462 + $0x120] sm:$0xff]
        %v2500 = vld [vmem:[%s2462 + $0x128] sm:$0xff]
        %v2501 = vld [vmem:[%s2462 + $0x130] sm:$0xff]
        %v2502 = vld [vmem:[%s2462 + $0x138] sm:$0xff]
        %v2504 = vrot.slane %v2325, 1
        %v2505 = vrot.slane %v2326, 1
        %v2507 = vsel %vm2368, %v2505, 0
        %2509 = vmatprep.subr.mxu0 %v2464
        %2510 = vmatpush1.msra.mxu0 %v2463
        %2511 = vmatprep.subr.mxu0 %v2466
        %2512 = vmatpush1.msra.mxu0 %v2465
        %2513 = vmatprep.subr.mxu0 %v2468
        %2514 = vmatpush1.msra.mxu0 %v2467
        %2515 = vmatprep.subr.mxu0 %v2470
        %2516 = vmatpush1.msra.mxu0 %v2469
        %2517 = vmatprep.subr.mxu0 %v2472
        %2518 = vmatpush1.msra.mxu0 %v2471
        %2519 = vmatprep.subr.mxu0 %v2474
        %2520 = vmatpush1.msra.mxu0 %v2473
        %2521 = vmatprep.subr.mxu0 %v2476
        %2522 = vmatpush1.msra.mxu0 %v2475
        %2523 = vmatprep.subr.mxu0 %v2478
        %2524 = vmatpush1.msra.mxu0 %v2477
        %2525 = vmatprep.subr.mxu0 %v2480
        %2526 = vmatpush1.msra.mxu0 %v2479
        %2527 = vmatprep.subr.mxu0 %v2482
        %2528 = vmatpush1.msra.mxu0 %v2481
        %2529 = vmatprep.subr.mxu0 %v2484
        %2530 = vmatpush1.msra.mxu0 %v2483
        %2531 = vmatprep.subr.mxu0 %v2486
        %2532 = vmatpush1.msra.mxu0 %v2485
        %2533 = vmatprep.subr.mxu0 %v2488
        %2534 = vmatpush1.msra.mxu0 %v2487
        %2535 = vmatprep.subr.mxu0 %v2490
        %2536 = vmatpush1.msra.mxu0 %v2489
        %2537 = vmatprep.subr.mxu0 %v2492
        %2538 = vmatpush1.msra.mxu0 %v2491
        %2539 = vmatprep.subr.mxu0 %v2494
        %2540 = vmatpush1.msra.mxu0 %v2493
        %2541 = vmatprep.subr.mxu0 %v2496
        %2542 = vmatpush1.msra.mxu0 %v2495
        %2543 = vmatprep.subr.mxu0 %v2498
        %2544 = vmatpush1.msra.mxu0 %v2497
        %2545 = vmatprep.subr.mxu0 %v2500
        %2546 = vmatpush1.msra.mxu0 %v2499
        %2547 = vmatprep.subr.mxu0 %v2502
        %2548 = vmatpush1.msra.mxu0 %v2501
        %2549 = vmatprep.subr.mxu0 0.0
        %2550 = vmatpush1.msra.mxu0 0.0
        %2551 = vmatprep.subr.mxu0 0.0
        %2552 = vmatpush1.msra.mxu0 0.0
        %2553 = vmatprep.subr.mxu0 0.0
        %2554 = vmatpush1.msra.mxu0 0.0
        %2555 = vmatprep.subr.mxu0 0.0
        %2556 = vmatpush1.msra.mxu0 0.0
        %2557 = vmatprep.subr.mxu0 0.0
        %2558 = vmatpush1.msra.mxu0 0.0
        %2559 = vmatprep.subr.mxu0 0.0
        %2560 = vmatpush1.msra.mxu0 0.0
        %2561 = vmatprep.subr.mxu0 0.0
        %2562 = vmatpush1.msra.mxu0 0.0
        %2563 = vmatprep.subr.mxu0 0.0
        %2564 = vmatpush1.msra.mxu0 0.0
        %2565 = vmatprep.subr.mxu0 0.0
        %2566 = vmatpush1.msra.mxu0 0.0
        %2567 = vmatprep.subr.mxu0 0.0
        %2568 = vmatpush1.msra.mxu0 0.0
        %2569 = vmatprep.subr.mxu0 0.0
        %2570 = vmatpush1.msra.mxu0 0.0
        %2571 = vmatprep.subr.mxu0 0.0
        %2572 = vmatpush1.msra.mxu0 0.0
        %2573 = vmatprep.mubr.f32.mxu0 %v2507
        %2574 = vmatmul.mubr.f32.gmra.mrb[0].mxu0 %v2504
        %v2575 = vpop.f32.mrb[0].mxu0
        %v2576 = vadd.f32 0.0, %v2575
        %v2577 = vpop.f32.mrb[0].mxu0
        %v2578 = vadd.f32 0.0, %v2577
        %2579 = vdwg.mxu0
        %v2582 = vcombine.low %v2576, %v2578
        %v2584 = vunpack.c.l.s4 1966171168
        %v2585 = vunpack.c.0.s8 %v2584
        %v2586 = vlaneseq
        %v2587 = vshrl.u32 %v2586, 7
        %v2588 = vsub.s32 %v2585, %v2587
        %v2589 = vrot.slane %v2582, %v2588
        %v2591 = vunpack.c.l.s4 1966171168
        %v2592 = vunpack.c.0.s8 %v2591
        %v2593 = vlaneseq
        %v2594 = vshrl.u32 %v2593, 7
        %v2595 = vsub.s32 %v2592, %v2594
        %v2596 = vrot.slane %v2589, %v2595
        %v2598 = vadd.f32 %v2461, %v2596
        %s2599 = scalar_lea.vmem %s7, 640
        %v2600 = vld [vmem:[%s2599] sm:$0xff]
        %v2601 = vld [vmem:[%s2599 + $0x8] sm:$0xff]
        %v2602 = vld [vmem:[%s2599 + $0x10] sm:$0xff]
        %v2603 = vld [vmem:[%s2599 + $0x18] sm:$0xff]
        %v2604 = vld [vmem:[%s2599 + $0x20] sm:$0xff]
        %v2605 = vld [vmem:[%s2599 + $0x28] sm:$0xff]
        %v2606 = vld [vmem:[%s2599 + $0x30] sm:$0xff]
        %v2607 = vld [vmem:[%s2599 + $0x38] sm:$0xff]
        %v2608 = vld [vmem:[%s2599 + $0x40] sm:$0xff]
        %v2609 = vld [vmem:[%s2599 + $0x48] sm:$0xff]
        %v2610 = vld [vmem:[%s2599 + $0x50] sm:$0xff]
        %v2611 = vld [vmem:[%s2599 + $0x58] sm:$0xff]
        %v2612 = vld [vmem:[%s2599 + $0x60] sm:$0xff]
        %v2613 = vld [vmem:[%s2599 + $0x68] sm:$0xff]
        %v2614 = vld [vmem:[%s2599 + $0x70] sm:$0xff]
        %v2615 = vld [vmem:[%s2599 + $0x78] sm:$0xff]
        %v2616 = vld [vmem:[%s2599 + $0x80] sm:$0xff]
        %v2617 = vld [vmem:[%s2599 + $0x88] sm:$0xff]
        %v2618 = vld [vmem:[%s2599 + $0x90] sm:$0xff]
        %v2619 = vld [vmem:[%s2599 + $0x98] sm:$0xff]
        %v2620 = vld [vmem:[%s2599 + $0xa0] sm:$0xff]
        %v2621 = vld [vmem:[%s2599 + $0xa8] sm:$0xff]
        %v2622 = vld [vmem:[%s2599 + $0xb0] sm:$0xff]
        %v2623 = vld [vmem:[%s2599 + $0xb8] sm:$0xff]
        %v2624 = vld [vmem:[%s2599 + $0xc0] sm:$0xff]
        %v2625 = vld [vmem:[%s2599 + $0xc8] sm:$0xff]
        %v2626 = vld [vmem:[%s2599 + $0xd0] sm:$0xff]
        %v2627 = vld [vmem:[%s2599 + $0xd8] sm:$0xff]
        %v2628 = vld [vmem:[%s2599 + $0xe0] sm:$0xff]
        %v2629 = vld [vmem:[%s2599 + $0xe8] sm:$0xff]
        %v2630 = vld [vmem:[%s2599 + $0xf0] sm:$0xff]
        %v2631 = vld [vmem:[%s2599 + $0xf8] sm:$0xff]
        %v2632 = vld [vmem:[%s2599 + $0x100] sm:$0xff]
        %v2633 = vld [vmem:[%s2599 + $0x108] sm:$0xff]
        %v2634 = vld [vmem:[%s2599 + $0x110] sm:$0xff]
        %v2635 = vld [vmem:[%s2599 + $0x118] sm:$0xff]
        %v2636 = vld [vmem:[%s2599 + $0x120] sm:$0xff]
        %v2637 = vld [vmem:[%s2599 + $0x128] sm:$0xff]
        %v2638 = vld [vmem:[%s2599 + $0x130] sm:$0xff]
        %v2639 = vld [vmem:[%s2599 + $0x138] sm:$0xff]
        %v2640 = vrot.slane %v2325, 2
        %v2641 = vrot.slane %v2326, 2
        %v2643 = vsel %vm2368, %v2641, 0
        %2645 = vmatprep.subr.mxu0 %v2601
        %2646 = vmatpush1.msra.mxu0 %v2600
        %2647 = vmatprep.subr.mxu0 %v2603
        %2648 = vmatpush1.msra.mxu0 %v2602
        %2649 = vmatprep.subr.mxu0 %v2605
        %2650 = vmatpush1.msra.mxu0 %v2604
        %2651 = vmatprep.subr.mxu0 %v2607
        %2652 = vmatpush1.msra.mxu0 %v2606
        %2653 = vmatprep.subr.mxu0 %v2609
        %2654 = vmatpush1.msra.mxu0 %v2608
        %2655 = vmatprep.subr.mxu0 %v2611
        %2656 = vmatpush1.msra.mxu0 %v2610
        %2657 = vmatprep.subr.mxu0 %v2613
        %2658 = vmatpush1.msra.mxu0 %v2612
        %2659 = vmatprep.subr.mxu0 %v2615
        %2660 = vmatpush1.msra.mxu0 %v2614
        %2661 = vmatprep.subr.mxu0 %v2617
        %2662 = vmatpush1.msra.mxu0 %v2616
        %2663 = vmatprep.subr.mxu0 %v2619
        %2664 = vmatpush1.msra.mxu0 %v2618
        %2665 = vmatprep.subr.mxu0 %v2621
        %2666 = vmatpush1.msra.mxu0 %v2620
        %2667 = vmatprep.subr.mxu0 %v2623
        %2668 = vmatpush1.msra.mxu0 %v2622
        %2669 = vmatprep.subr.mxu0 %v2625
        %2670 = vmatpush1.msra.mxu0 %v2624
        %2671 = vmatprep.subr.mxu0 %v2627
        %2672 = vmatpush1.msra.mxu0 %v2626
        %2673 = vmatprep.subr.mxu0 %v2629
        %2674 = vmatpush1.msra.mxu0 %v2628
        %2675 = vmatprep.subr.mxu0 %v2631
        %2676 = vmatpush1.msra.mxu0 %v2630
        %2677 = vmatprep.subr.mxu0 %v2633
        %2678 = vmatpush1.msra.mxu0 %v2632
        %2679 = vmatprep.subr.mxu0 %v2635
        %2680 = vmatpush1.msra.mxu0 %v2634
        %2681 = vmatprep.subr.mxu0 %v2637
        %2682 = vmatpush1.msra.mxu0 %v2636
        %2683 = vmatprep.subr.mxu0 %v2639
        %2684 = vmatpush1.msra.mxu0 %v2638
        %2685 = vmatprep.subr.mxu0 0.0
        %2686 = vmatpush1.msra.mxu0 0.0
        %2687 = vmatprep.subr.mxu0 0.0
        %2688 = vmatpush1.msra.mxu0 0.0
        %2689 = vmatprep.subr.mxu0 0.0
        %2690 = vmatpush1.msra.mxu0 0.0
        %2691 = vmatprep.subr.mxu0 0.0
        %2692 = vmatpush1.msra.mxu0 0.0
        %2693 = vmatprep.subr.mxu0 0.0
        %2694 = vmatpush1.msra.mxu0 0.0
        %2695 = vmatprep.subr.mxu0 0.0
        %2696 = vmatpush1.msra.mxu0 0.0
        %2697 = vmatprep.subr.mxu0 0.0
        %2698 = vmatpush1.msra.mxu0 0.0
        %2699 = vmatprep.subr.mxu0 0.0
        %2700 = vmatpush1.msra.mxu0 0.0
        %2701 = vmatprep.subr.mxu0 0.0
        %2702 = vmatpush1.msra.mxu0 0.0
        %2703 = vmatprep.subr.mxu0 0.0
        %2704 = vmatpush1.msra.mxu0 0.0
        %2705 = vmatprep.subr.mxu0 0.0
        %2706 = vmatpush1.msra.mxu0 0.0
        %2707 = vmatprep.subr.mxu0 0.0
        %2708 = vmatpush1.msra.mxu0 0.0
        %2709 = vmatprep.mubr.f32.mxu0 %v2643
        %2710 = vmatmul.mubr.f32.gmra.mrb[0].mxu0 %v2640
        %v2711 = vpop.f32.mrb[0].mxu0
        %v2712 = vadd.f32 0.0, %v2711
        %v2713 = vpop.f32.mrb[0].mxu0
        %v2714 = vadd.f32 0.0, %v2713
        %2715 = vdwg.mxu0
        %v2718 = vcombine.low %v2712, %v2714
        %v2720 = vunpack.c.l.s4 1966171168
        %v2721 = vunpack.c.0.s8 %v2720
        %v2722 = vlaneseq
        %v2723 = vshrl.u32 %v2722, 7
        %v2724 = vsub.s32 %v2721, %v2723
        %v2725 = vrot.slane %v2718, %v2724
        %v2727 = vunpack.c.l.s4 1966171168
        %v2728 = vunpack.c.0.s8 %v2727
        %v2729 = vlaneseq
        %v2730 = vshrl.u32 %v2729, 7
        %v2731 = vsub.s32 %v2728, %v2730
        %v2732 = vrot.slane %v2725, %v2731
        %v2734 = vadd.f32 %v2598, %v2732
        %s2735 = scalar_lea.vmem %s7, 960
        %v2736 = vld [vmem:[%s2735] sm:$0xff]
        %v2737 = vld [vmem:[%s2735 + $0x8] sm:$0xff]
        %v2738 = vld [vmem:[%s2735 + $0x10] sm:$0xff]
        %v2739 = vld [vmem:[%s2735 + $0x18] sm:$0xff]
        %v2740 = vld [vmem:[%s2735 + $0x20] sm:$0xff]
        %v2741 = vld [vmem:[%s2735 + $0x28] sm:$0xff]
        %v2742 = vld [vmem:[%s2735 + $0x30] sm:$0xff]
        %v2743 = vld [vmem:[%s2735 + $0x38] sm:$0xff]
        %v2744 = vld [vmem:[%s2735 + $0x40] sm:$0xff]
        %v2745 = vld [vmem:[%s2735 + $0x48] sm:$0xff]
        %v2746 = vld [vmem:[%s2735 + $0x50] sm:$0xff]
        %v2747 = vld [vmem:[%s2735 + $0x58] sm:$0xff]
        %v2748 = vld [vmem:[%s2735 + $0x60] sm:$0xff]
        %v2749 = vld [vmem:[%s2735 + $0x68] sm:$0xff]
        %v2750 = vld [vmem:[%s2735 + $0x70] sm:$0xff]
        %v2751 = vld [vmem:[%s2735 + $0x78] sm:$0xff]
        %v2752 = vld [vmem:[%s2735 + $0x80] sm:$0xff]
        %v2753 = vld [vmem:[%s2735 + $0x88] sm:$0xff]
        %v2754 = vld [vmem:[%s2735 + $0x90] sm:$0xff]
        %v2755 = vld [vmem:[%s2735 + $0x98] sm:$0xff]
        %v2756 = vld [vmem:[%s2735 + $0xa0] sm:$0xff]
        %v2757 = vld [vmem:[%s2735 + $0xa8] sm:$0xff]
        %v2758 = vld [vmem:[%s2735 + $0xb0] sm:$0xff]
        %v2759 = vld [vmem:[%s2735 + $0xb8] sm:$0xff]
        %v2760 = vld [vmem:[%s2735 + $0xc0] sm:$0xff]
        %v2761 = vld [vmem:[%s2735 + $0xc8] sm:$0xff]
        %v2762 = vld [vmem:[%s2735 + $0xd0] sm:$0xff]
        %v2763 = vld [vmem:[%s2735 + $0xd8] sm:$0xff]
        %v2764 = vld [vmem:[%s2735 + $0xe0] sm:$0xff]
        %v2765 = vld [vmem:[%s2735 + $0xe8] sm:$0xff]
        %v2766 = vld [vmem:[%s2735 + $0xf0] sm:$0xff]
        %v2767 = vld [vmem:[%s2735 + $0xf8] sm:$0xff]
        %v2768 = vld [vmem:[%s2735 + $0x100] sm:$0xff]
        %v2769 = vld [vmem:[%s2735 + $0x108] sm:$0xff]
        %v2770 = vld [vmem:[%s2735 + $0x110] sm:$0xff]
        %v2771 = vld [vmem:[%s2735 + $0x118] sm:$0xff]
        %v2772 = vld [vmem:[%s2735 + $0x120] sm:$0xff]
        %v2773 = vld [vmem:[%s2735 + $0x128] sm:$0xff]
        %v2774 = vld [vmem:[%s2735 + $0x130] sm:$0xff]
        %v2775 = vld [vmem:[%s2735 + $0x138] sm:$0xff]
        %v2776 = vrot.slane %v2325, 3
        %v2777 = vrot.slane %v2326, 3
        %v2779 = vsel %vm2368, %v2777, 0
        %2781 = vmatprep.subr.mxu0 %v2737
        %2782 = vmatpush1.msra.mxu0 %v2736
        %2783 = vmatprep.subr.mxu0 %v2739
        %2784 = vmatpush1.msra.mxu0 %v2738
        %2785 = vmatprep.subr.mxu0 %v2741
        %2786 = vmatpush1.msra.mxu0 %v2740
        %2787 = vmatprep.subr.mxu0 %v2743
        %2788 = vmatpush1.msra.mxu0 %v2742
        %2789 = vmatprep.subr.mxu0 %v2745
        %2790 = vmatpush1.msra.mxu0 %v2744
        %2791 = vmatprep.subr.mxu0 %v2747
        %2792 = vmatpush1.msra.mxu0 %v2746
        %2793 = vmatprep.subr.mxu0 %v2749
        %2794 = vmatpush1.msra.mxu0 %v2748
        %2795 = vmatprep.subr.mxu0 %v2751
        %2796 = vmatpush1.msra.mxu0 %v2750
        %2797 = vmatprep.subr.mxu0 %v2753
        %2798 = vmatpush1.msra.mxu0 %v2752
        %2799 = vmatprep.subr.mxu0 %v2755
        %2800 = vmatpush1.msra.mxu0 %v2754
        %2801 = vmatprep.subr.mxu0 %v2757
        %2802 = vmatpush1.msra.mxu0 %v2756
        %2803 = vmatprep.subr.mxu0 %v2759
        %2804 = vmatpush1.msra.mxu0 %v2758
        %2805 = vmatprep.subr.mxu0 %v2761
        %2806 = vmatpush1.msra.mxu0 %v2760
        %2807 = vmatprep.subr.mxu0 %v2763
        %2808 = vmatpush1.msra.mxu0 %v2762
        %2809 = vmatprep.subr.mxu0 %v2765
        %2810 = vmatpush1.msra.mxu0 %v2764
        %2811 = vmatprep.subr.mxu0 %v2767
        %2812 = vmatpush1.msra.mxu0 %v2766
        %2813 = vmatprep.subr.mxu0 %v2769
        %2814 = vmatpush1.msra.mxu0 %v2768
        %2815 = vmatprep.subr.mxu0 %v2771
        %2816 = vmatpush1.msra.mxu0 %v2770
        %2817 = vmatprep.subr.mxu0 %v2773
        %2818 = vmatpush1.msra.mxu0 %v2772
        %2819 = vmatprep.subr.mxu0 %v2775
        %2820 = vmatpush1.msra.mxu0 %v2774
        %2821 = vmatprep.subr.mxu0 0.0
        %2822 = vmatpush1.msra.mxu0 0.0
        %2823 = vmatprep.subr.mxu0 0.0
        %2824 = vmatpush1.msra.mxu0 0.0
        %2825 = vmatprep.subr.mxu0 0.0
        %2826 = vmatpush1.msra.mxu0 0.0
        %2827 = vmatprep.subr.mxu0 0.0
        %2828 = vmatpush1.msra.mxu0 0.0
        %2829 = vmatprep.subr.mxu0 0.0
        %2830 = vmatpush1.msra.mxu0 0.0
        %2831 = vmatprep.subr.mxu0 0.0
        %2832 = vmatpush1.msra.mxu0 0.0
        %2833 = vmatprep.subr.mxu0 0.0
        %2834 = vmatpush1.msra.mxu0 0.0
        %2835 = vmatprep.subr.mxu0 0.0
        %2836 = vmatpush1.msra.mxu0 0.0
        %2837 = vmatprep.subr.mxu0 0.0
        %2838 = vmatpush1.msra.mxu0 0.0
        %2839 = vmatprep.subr.mxu0 0.0
        %2840 = vmatpush1.msra.mxu0 0.0
        %2841 = vmatprep.subr.mxu0 0.0
        %2842 = vmatpush1.msra.mxu0 0.0
        %2843 = vmatprep.subr.mxu0 0.0
        %2844 = vmatpush1.msra.mxu0 0.0
        %2845 = vmatprep.mubr.f32.mxu0 %v2779
        %2846 = vmatmul.mubr.f32.gmra.mrb[0].mxu0 %v2776
        %v2847 = vpop.f32.mrb[0].mxu0
        %v2848 = vadd.f32 0.0, %v2847
        %v2849 = vpop.f32.mrb[0].mxu0
        %v2850 = vadd.f32 0.0, %v2849
        %2851 = vdwg.mxu0
        %v2854 = vcombine.low %v2848, %v2850
        %v2856 = vunpack.c.l.s4 1966171168
        %v2857 = vunpack.c.0.s8 %v2856
        %v2858 = vlaneseq
        %v2859 = vshrl.u32 %v2858, 7
        %v2860 = vsub.s32 %v2857, %v2859
        %v2861 = vrot.slane %v2854, %v2860
        %v2863 = vunpack.c.l.s4 1966171168
        %v2864 = vunpack.c.0.s8 %v2863
        %v2865 = vlaneseq
        %v2866 = vshrl.u32 %v2865, 7
        %v2867 = vsub.s32 %v2864, %v2866
        %v2868 = vrot.slane %v2861, %v2867
        %v2870 = vadd.f32 %v2734, %v2868
        %s2871 = scalar_lea.vmem %s7, 1280
        %v2872 = vld [vmem:[%s2871] sm:$0xff]
        %v2873 = vld [vmem:[%s2871 + $0x8] sm:$0xff]
        %v2874 = vld [vmem:[%s2871 + $0x10] sm:$0xff]
        %v2875 = vld [vmem:[%s2871 + $0x18] sm:$0xff]
        %v2876 = vld [vmem:[%s2871 + $0x20] sm:$0xff]
        %v2877 = vld [vmem:[%s2871 + $0x28] sm:$0xff]
        %v2878 = vld [vmem:[%s2871 + $0x30] sm:$0xff]
        %v2879 = vld [vmem:[%s2871 + $0x38] sm:$0xff]
        %v2880 = vld [vmem:[%s2871 + $0x40] sm:$0xff]
        %v2881 = vld [vmem:[%s2871 + $0x48] sm:$0xff]
        %v2882 = vld [vmem:[%s2871 + $0x50] sm:$0xff]
        %v2883 = vld [vmem:[%s2871 + $0x58] sm:$0xff]
        %v2884 = vld [vmem:[%s2871 + $0x60] sm:$0xff]
        %v2885 = vld [vmem:[%s2871 + $0x68] sm:$0xff]
        %v2886 = vld [vmem:[%s2871 + $0x70] sm:$0xff]
        %v2887 = vld [vmem:[%s2871 + $0x78] sm:$0xff]
        %v2888 = vld [vmem:[%s2871 + $0x80] sm:$0xff]
        %v2889 = vld [vmem:[%s2871 + $0x88] sm:$0xff]
        %v2890 = vld [vmem:[%s2871 + $0x90] sm:$0xff]
        %v2891 = vld [vmem:[%s2871 + $0x98] sm:$0xff]
        %v2892 = vld [vmem:[%s2871 + $0xa0] sm:$0xff]
        %v2893 = vld [vmem:[%s2871 + $0xa8] sm:$0xff]
        %v2894 = vld [vmem:[%s2871 + $0xb0] sm:$0xff]
        %v2895 = vld [vmem:[%s2871 + $0xb8] sm:$0xff]
        %v2896 = vld [vmem:[%s2871 + $0xc0] sm:$0xff]
        %v2897 = vld [vmem:[%s2871 + $0xc8] sm:$0xff]
        %v2898 = vld [vmem:[%s2871 + $0xd0] sm:$0xff]
        %v2899 = vld [vmem:[%s2871 + $0xd8] sm:$0xff]
        %v2900 = vld [vmem:[%s2871 + $0xe0] sm:$0xff]
        %v2901 = vld [vmem:[%s2871 + $0xe8] sm:$0xff]
        %v2902 = vld [vmem:[%s2871 + $0xf0] sm:$0xff]
        %v2903 = vld [vmem:[%s2871 + $0xf8] sm:$0xff]
        %v2904 = vld [vmem:[%s2871 + $0x100] sm:$0xff]
        %v2905 = vld [vmem:[%s2871 + $0x108] sm:$0xff]
        %v2906 = vld [vmem:[%s2871 + $0x110] sm:$0xff]
        %v2907 = vld [vmem:[%s2871 + $0x118] sm:$0xff]
        %v2908 = vld [vmem:[%s2871 + $0x120] sm:$0xff]
        %v2909 = vld [vmem:[%s2871 + $0x128] sm:$0xff]
        %v2910 = vld [vmem:[%s2871 + $0x130] sm:$0xff]
        %v2911 = vld [vmem:[%s2871 + $0x138] sm:$0xff]
        %v2912 = vrot.slane %v2325, 4
        %v2913 = vrot.slane %v2326, 4
        %v2915 = vsel %vm2368, %v2913, 0
        %2917 = vmatprep.subr.mxu0 %v2873
        %2918 = vmatpush1.msra.mxu0 %v2872
        %2919 = vmatprep.subr.mxu0 %v2875
        %2920 = vmatpush1.msra.mxu0 %v2874
        %2921 = vmatprep.subr.mxu0 %v2877
        %2922 = vmatpush1.msra.mxu0 %v2876
        %2923 = vmatprep.subr.mxu0 %v2879
        %2924 = vmatpush1.msra.mxu0 %v2878
        %2925 = vmatprep.subr.mxu0 %v2881
        %2926 = vmatpush1.msra.mxu0 %v2880
        %2927 = vmatprep.subr.mxu0 %v2883
        %2928 = vmatpush1.msra.mxu0 %v2882
        %2929 = vmatprep.subr.mxu0 %v2885
        %2930 = vmatpush1.msra.mxu0 %v2884
        %2931 = vmatprep.subr.mxu0 %v2887
        %2932 = vmatpush1.msra.mxu0 %v2886
        %2933 = vmatprep.subr.mxu0 %v2889
        %2934 = vmatpush1.msra.mxu0 %v2888
        %2935 = vmatprep.subr.mxu0 %v2891
        %2936 = vmatpush1.msra.mxu0 %v2890
        %2937 = vmatprep.subr.mxu0 %v2893
        %2938 = vmatpush1.msra.mxu0 %v2892
        %2939 = vmatprep.subr.mxu0 %v2895
        %2940 = vmatpush1.msra.mxu0 %v2894
        %2941 = vmatprep.subr.mxu0 %v2897
        %2942 = vmatpush1.msra.mxu0 %v2896
        %2943 = vmatprep.subr.mxu0 %v2899
        %2944 = vmatpush1.msra.mxu0 %v2898
        %2945 = vmatprep.subr.mxu0 %v2901
        %2946 = vmatpush1.msra.mxu0 %v2900
        %2947 = vmatprep.subr.mxu0 %v2903
        %2948 = vmatpush1.msra.mxu0 %v2902
        %2949 = vmatprep.subr.mxu0 %v2905
        %2950 = vmatpush1.msra.mxu0 %v2904
        %2951 = vmatprep.subr.mxu0 %v2907
        %2952 = vmatpush1.msra.mxu0 %v2906
        %2953 = vmatprep.subr.mxu0 %v2909
        %2954 = vmatpush1.msra.mxu0 %v2908
        %2955 = vmatprep.subr.mxu0 %v2911
        %2956 = vmatpush1.msra.mxu0 %v2910
        %2957 = vmatprep.subr.mxu0 0.0
        %2958 = vmatpush1.msra.mxu0 0.0
        %2959 = vmatprep.subr.mxu0 0.0
        %2960 = vmatpush1.msra.mxu0 0.0
        %2961 = vmatprep.subr.mxu0 0.0
        %2962 = vmatpush1.msra.mxu0 0.0
        %2963 = vmatprep.subr.mxu0 0.0
        %2964 = vmatpush1.msra.mxu0 0.0
        %2965 = vmatprep.subr.mxu0 0.0
        %2966 = vmatpush1.msra.mxu0 0.0
        %2967 = vmatprep.subr.mxu0 0.0
        %2968 = vmatpush1.msra.mxu0 0.0
        %2969 = vmatprep.subr.mxu0 0.0
        %2970 = vmatpush1.msra.mxu0 0.0
        %2971 = vmatprep.subr.mxu0 0.0
        %2972 = vmatpush1.msra.mxu0 0.0
        %2973 = vmatprep.subr.mxu0 0.0
        %2974 = vmatpush1.msra.mxu0 0.0
        %2975 = vmatprep.subr.mxu0 0.0
        %2976 = vmatpush1.msra.mxu0 0.0
        %2977 = vmatprep.subr.mxu0 0.0
        %2978 = vmatpush1.msra.mxu0 0.0
        %2979 = vmatprep.subr.mxu0 0.0
        %2980 = vmatpush1.msra.mxu0 0.0
        %2981 = vmatprep.mubr.f32.mxu0 %v2915
        %2982 = vmatmul.mubr.f32.gmra.mrb[0].mxu0 %v2912
        %v2983 = vpop.f32.mrb[0].mxu0
        %v2984 = vadd.f32 0.0, %v2983
        %v2985 = vpop.f32.mrb[0].mxu0
        %v2986 = vadd.f32 0.0, %v2985
        %2987 = vdwg.mxu0
        %v2990 = vcombine.low %v2984, %v2986
        %v2992 = vunpack.c.l.s4 1966171168
        %v2993 = vunpack.c.0.s8 %v2992
        %v2994 = vlaneseq
        %v2995 = vshrl.u32 %v2994, 7
        %v2996 = vsub.s32 %v2993, %v2995
        %v2997 = vrot.slane %v2990, %v2996
        %v2999 = vunpack.c.l.s4 1966171168
        %v3000 = vunpack.c.0.s8 %v2999
        %v3001 = vlaneseq
        %v3002 = vshrl.u32 %v3001, 7
        %v3003 = vsub.s32 %v3000, %v3002
        %v3004 = vrot.slane %v2997, %v3003
        %v3006 = vadd.f32 %v2870, %v3004
        %v3007 = vmax.f32 %v3006, 0.0
        %v3008 = vld [vmem:[%s9] sm:$0xff]
        %v3009 = vld [vmem:[%s9 + $0x8] sm:$0xff]
        %v3010 = vld [vmem:[%s9 + $0x10] sm:$0xff]
        %v3011 = vld [vmem:[%s9 + $0x18] sm:$0xff]
        %v3012 = vld [vmem:[%s9 + $0x20] sm:$0xff]
        %v3013 = vld [vmem:[%s9 + $0x28] sm:$0xff]
        %v3014 = vld [vmem:[%s9 + $0x30] sm:$0xff]
        %v3015 = vld [vmem:[%s9 + $0x38] sm:$0xff]
        %v3016 = vld [vmem:[%s9 + $0x40] sm:$0xff]
        %v3017 = vld [vmem:[%s9 + $0x48] sm:$0xff]
        %v3018 = vld [vmem:[%s9 + $0x50] sm:$0xff]
        %v3019 = vld [vmem:[%s9 + $0x58] sm:$0xff]
        %v3020 = vld [vmem:[%s9 + $0x60] sm:$0xff]
        %v3021 = vld [vmem:[%s9 + $0x68] sm:$0xff]
        %v3022 = vld [vmem:[%s9 + $0x70] sm:$0xff]
        %v3023 = vld [vmem:[%s9 + $0x78] sm:$0xff]
        %v3024 = vld [vmem:[%s9 + $0x80] sm:$0xff]
        %v3025 = vld [vmem:[%s9 + $0x88] sm:$0xff]
        %v3026 = vld [vmem:[%s9 + $0x90] sm:$0xff]
        %v3027 = vld [vmem:[%s9 + $0x98] sm:$0xff]
        %v3028 = vld [vmem:[%s9 + $0xa0] sm:$0xff]
        %v3029 = vld [vmem:[%s9 + $0xa8] sm:$0xff]
        %v3030 = vld [vmem:[%s9 + $0xb0] sm:$0xff]
        %v3031 = vld [vmem:[%s9 + $0xb8] sm:$0xff]
        %v3032 = vld [vmem:[%s9 + $0xc0] sm:$0xff]
        %v3033 = vld [vmem:[%s10] sm:$0x1]
        %v3035 = vlaneseq
        %v3036 = vshrl.u32 %v3035, 7
        %v3037 = vsub.s32 0, %v3036
        %v3038 = vrot.slane %v3007, %v3037
        %v3039 = vlaneseq
        %v3040 = vshrl.u32 %v3039, 7
        %v3041 = vsub.s32 1, %v3040
        %v3042 = vrot.slane %v3007, %v3041
        %vm3044 = vcmask 588800
        %v3045 = vsel %vm3044, %v3042, 0
        %3047 = vmatprep.subr.mxu0 0.0
        %3048 = vmatpush1.msra.mxu0 %v3008
        %3049 = vmatprep.subr.mxu0 0.0
        %3050 = vmatpush1.msra.mxu0 %v3009
        %3051 = vmatprep.subr.mxu0 0.0
        %3052 = vmatpush1.msra.mxu0 %v3010
        %3053 = vmatprep.subr.mxu0 0.0
        %3054 = vmatpush1.msra.mxu0 %v3011
        %3055 = vmatprep.subr.mxu0 0.0
        %3056 = vmatpush1.msra.mxu0 %v3012
        %3057 = vmatprep.subr.mxu0 0.0
        %3058 = vmatpush1.msra.mxu0 %v3013
        %3059 = vmatprep.subr.mxu0 0.0
        %3060 = vmatpush1.msra.mxu0 %v3014
        %3061 = vmatprep.subr.mxu0 0.0
        %3062 = vmatpush1.msra.mxu0 %v3015
        %3063 = vmatprep.subr.mxu0 0.0
        %3064 = vmatpush1.msra.mxu0 %v3016
        %3065 = vmatprep.subr.mxu0 0.0
        %3066 = vmatpush1.msra.mxu0 %v3017
        %3067 = vmatprep.subr.mxu0 0.0
        %3068 = vmatpush1.msra.mxu0 %v3018
        %3069 = vmatprep.subr.mxu0 0.0
        %3070 = vmatpush1.msra.mxu0 %v3019
        %3071 = vmatprep.subr.mxu0 0.0
        %3072 = vmatpush1.msra.mxu0 %v3020
        %3073 = vmatprep.subr.mxu0 0.0
        %3074 = vmatpush1.msra.mxu0 %v3021
        %3075 = vmatprep.subr.mxu0 0.0
        %3076 = vmatpush1.msra.mxu0 %v3022
        %3077 = vmatprep.subr.mxu0 0.0
        %3078 = vmatpush1.msra.mxu0 %v3023
        %3079 = vmatprep.subr.mxu0 0.0
        %3080 = vmatpush1.msra.mxu0 %v3024
        %3081 = vmatprep.subr.mxu0 0.0
        %3082 = vmatpush1.msra.mxu0 %v3025
        %3083 = vmatprep.subr.mxu0 0.0
        %3084 = vmatpush1.msra.mxu0 %v3026
        %3085 = vmatprep.subr.mxu0 0.0
        %3086 = vmatpush1.msra.mxu0 %v3027
        %3087 = vmatprep.subr.mxu0 0.0
        %3088 = vmatpush1.msra.mxu0 %v3028
        %3089 = vmatprep.subr.mxu0 0.0
        %3090 = vmatpush1.msra.mxu0 %v3029
        %3091 = vmatprep.subr.mxu0 0.0
        %3092 = vmatpush1.msra.mxu0 %v3030
        %3093 = vmatprep.subr.mxu0 0.0
        %3094 = vmatpush1.msra.mxu0 %v3031
        %3095 = vmatprep.subr.mxu0 0.0
        %3096 = vmatpush1.msra.mxu0 %v3032
        %3097 = vmatprep.subr.mxu0 0.0
        %3098 = vmatpush1.msra.mxu0 0.0
        %3099 = vmatprep.subr.mxu0 0.0
        %3100 = vmatpush1.msra.mxu0 0.0
        %3101 = vmatprep.subr.mxu0 0.0
        %3102 = vmatpush1.msra.mxu0 0.0
        %3103 = vmatprep.subr.mxu0 0.0
        %3104 = vmatpush1.msra.mxu0 0.0
        %3105 = vmatprep.subr.mxu0 0.0
        %3106 = vmatpush1.msra.mxu0 0.0
        %3107 = vmatprep.subr.mxu0 0.0
        %3108 = vmatpush1.msra.mxu0 0.0
        %3109 = vmatprep.subr.mxu0 0.0
        %3110 = vmatpush1.msra.mxu0 0.0
        %3111 = vmatprep.mubr.f32.mxu0 %v3045
        %3112 = vmatmul.mubr.f32.gmra.mrb[0].mxu0 %v3038
        %v3113 = vpop.f32.mrb[0].mxu0
        %v3114 = vadd.f32 %v3033, %v3113
        %v3115 = vpop.f32.mrb[0].mxu0
        %3116 = vdwg.mxu0
        %vm3117 = vcmask 73728
        %v3118 = vsel %vm3117, %v3114, -inf
        %3119 = vmax.xlane.f32.xlu0 %v3118
        %v3120 = vpop.xlane.xlu0 %3119
        %v3121 = vsub.f32 %v3114, %v3120
        %v3122 = vmul.f32 %v3121, 1.442695
        %v3123 = vpow.pop %v3122
        %v3124 = vsel %vm3117, %v3123, 0.0
        %3125 = vadd.xlane.f32.xlu0 %v3124
        %v3126 = vpop.xlane.xlu0 %3125
        %v3127 = vlog2.pop %v3126
        %v3128 = vmul.f32 %v3127, 0.6931472
        %v3129 = vadd.f32 %v3120, %v3128
        %v3130 = vsub.f32 %v3114, %v3129
        %3131 = vst.msk [vmem:[%s378] sm:$0x1] %vm3117, %v3130
        %s3132 = sand.u32 %s269, 1
        %s3133 = scalar_lea.sflag [#allocation3], %s3132
        %s3134 = sand.u32 %s269, 1
        %s3135 = scalar_lea.vmem [#allocation2], %s3134
        // Predicated region
        $region65: #{net_forward.1} parent=63 // pred_check
          %p3136 = pneg %p279
        $region66: #{net_forward.1} parent=63 // pred_check_branch
          %3138 = sbr.rel (%p3136) target = $region68
        $region67: #{net_forward.1} parent=63 // pred_region
          %s3140 = ssub.s32 16, 16
          %3141 = vsyncadd %s3133, %s3140
          %s3142 = smul.addr %s25, 16
          %s3143 = scalar_lea.hbm %s11, %s3142
          %s3145 = sshll.u32 %s3135, 4
          %s3146 = int_to_ptr.vmem [resolvable:$true] %s3145
          %3148 = dma.vmem_to_hbm [thread:$0]  %s3146, 16, %s3143, %s3133
        $region68: #{net_forward.1} parent=63 // pred_fallthru
          _
      $region64: #{net_forward.1} parent=5 // pred_fallthru
        _
      %p3149 = scmp.le.s32.totalorder 2, %s20
      // Predicated region
      $region69: #{net_forward.1} parent=5 // pred_check
        %p3150 = pneg %p3149
      $region70: #{net_forward.1} parent=5 // pred_check_branch
        %3152 = sbr.rel (%p3150) target = $region72
      $region71: #{net_forward.1} parent=5 // pred_region
        %s3153 = ssub.s32 %s20, 2
        // Predicated region
        $region73: #{net_forward.1} parent=71 // pred_check
          %p3154 = pneg %p285
        $region74: #{net_forward.1} parent=71 // pred_check_branch
          %3156 = sbr.rel (%p3154) target = $region76
        $region75: #{net_forward.1} parent=71 // pred_region
          %s3157 = sand.u32 %s270, 1
          %s3158 = scalar_lea.sflag [#allocation3], %s3157
          %s3159 = sand.u32 %s270, 1
          %s3160 = scalar_lea.vmem [#allocation2], %s3159
          %3161 = dma.done %s3158, 16
        $region76: #{net_forward.1} parent=71 // pred_fallthru
          _
      $region72: #{net_forward.1} parent=5 // pred_fallthru
        _
    $region6: #{net_forward.1} parent=1 // loop_footer
      %s24 = sadd.s32 1, %s20
    $region7: #{net_forward.1} parent=1 // loop_footer_branch
      %19 = sbr.rel target = $region3
    $region8: #{net_forward.1} parent=1 // loop_exit
      _
    %3162 = vsyncpa [#allocation3], 1
    %s3163 = scalar_lea.sflag [#allocation3], 1
    %3164 = vsyncpa %s3163, 1

</llo_original>
